<compile_context>
chip_gen: v5e
topology: v5e:2x2
jax: 0.10.0
libtpu: 0.0.40
codegen_flags: <defaults>
</compile_context>

<pallas_src>
import functools

import jax
import jax.numpy as jnp
from jax.experimental import pallas as pl
from jax.experimental.pallas import tpu as pltpu

BN_EPS = 1e-5


def _round_up(x, m):
    return ((x + m - 1) // m) * m


# ------------------------------ Pallas kernel ---------------------------------

def _make_block_kernel(stride1, n, h_out, w_out, c_in, c_pad):
    """Fused conv1+BN1+ReLU+conv2+BN2+residual+ReLU kernel (single invocation)."""
    m = n * h_out * w_out
    inv_m = 1.0 / m

    def kernel(*refs):
        if stride1 == 1:
            (xp_ref, w1_ref, g1_ref, b1_ref, w2_ref, g2_ref, b2_ref,
             wr_ref, br_ref, o_ref, y1p_ref) = refs

            def conv1_tap(kh, kw):
                return xp_ref[:, kh:kh + h_out, kw:kw + w_out, :]

            # identity shortcut source = the unpadded input itself
            res_src = xp_ref[:, 1:1 + h_out, 1:1 + w_out, :]
        else:
            (p00_ref, p01_ref, p10_ref, p11_ref, w1_ref, g1_ref, b1_ref,
             w2_ref, g2_ref, b2_ref, wr_ref, br_ref, o_ref, y1p_ref) = refs
            phase = ((p00_ref, p01_ref), (p10_ref, p11_ref))

            def conv1_tap(kh, kw):
                pr = phase[kh % 2][kw % 2]
                return pr[:, kh // 2:kh // 2 + h_out, kw // 2:kw // 2 + w_out, :]

            # x[:, ::2, ::2, :] for the 1x1 stride-2 projection == phase (1,1)
            res_src = p11_ref[:, 0:h_out, 0:w_out, :]

        # ---------------- conv1: 9 shifted-tap matmuls, f32 accumulate --------
        acc1 = jnp.zeros((m, c_pad), jnp.float32)
        for k in range(9):
            kh, kw = divmod(k, 3)
            tap = conv1_tap(kh, kw).reshape(m, c_in)
            acc1 = acc1 + jnp.dot(tap, w1_ref[k],
                                  preferred_element_type=jnp.float32)

        # ---------------- BN1 (one-pass batch stats) + ReLU -------------------
        mean1 = jnp.sum(acc1, axis=0, keepdims=True) * inv_m
        var1 = jnp.sum(acc1 * acc1, axis=0, keepdims=True) * inv_m - mean1 * mean1
        y1 = jnp.maximum(
            (acc1 - mean1) * jax.lax.rsqrt(var1 + BN_EPS) * g1_ref[...] + b1_ref[...],
            0.0)

        # ---- stage y1 into a zero-padded VMEM scratch (halo for conv2 taps) --
        y1p_ref[...] = jnp.zeros_like(y1p_ref)
        y1p_ref[:, 1:1 + h_out, 1:1 + w_out, :] = y1.reshape(n, h_out, w_out, c_pad)

        # ---------------- conv2: stride-1 3x3, 9 taps from scratch ------------
        acc2 = jnp.zeros((m, c_pad), jnp.float32)
        for k in range(9):
            kh, kw = divmod(k, 3)
            tap = y1p_ref[:, kh:kh + h_out, kw:kw + w_out, :].reshape(m, c_pad)
            acc2 = acc2 + jnp.dot(tap, w2_ref[k],
                                  preferred_element_type=jnp.float32)

        # ---------------- BN2 (one-pass batch stats) --------------------------
        mean2 = jnp.sum(acc2, axis=0, keepdims=True) * inv_m
        var2 = jnp.sum(acc2 * acc2, axis=0, keepdims=True) * inv_m - mean2 * mean2
        y2 = (acc2 - mean2) * jax.lax.rsqrt(var2 + BN_EPS) * g2_ref[...] + b2_ref[...]

        # ---------------- residual (identity or 1x1/stride-2 projection) ------
        res = jnp.dot(res_src.reshape(m, c_in), wr_ref[...],
                      preferred_element_type=jnp.float32) + br_ref[...]

        out = jnp.maximum(y2 + res, 0.0)
        o_ref[...] = out.reshape(n, h_out, w_out, c_pad).astype(o_ref.dtype)

    return kernel


# --------------------- one-time parameter re-layout ---------------------------

def prepare_params(params, c_in, c_out):
    """Re-layout PyTorch-style params into the kernel's lane-dense layout (once)."""
    c_pad = _round_up(c_out, 128)
    pc = c_pad - c_out

    def conv3_to_taps(w_oihw, ci, ci_pad):
        # OIHW (co, ci, 3, 3) -> (9, ci_pad, c_pad), tap index k = kh*3 + kw
        w = jnp.transpose(w_oihw, (2, 3, 1, 0)).reshape(9, ci, c_out)
        return jnp.pad(w, ((0, 0), (0, ci_pad - ci), (0, pc))).astype(jnp.float32)

    def vec(v):
        return jnp.pad(v, (0, pc)).reshape(1, c_pad).astype(jnp.float32)

    prep = dict(
        w1=conv3_to_taps(params["w1"], c_in, c_in),     # conv1 input is unpadded x
        g1=vec(params["g1"]), b1=vec(params["b1"]),
        w2=conv3_to_taps(params["w2"], c_out, c_pad),   # conv2 input is lane-padded y1
        g2=vec(params["g2"]), b2=vec(params["b2"]),
    )
    if c_in != c_out:
        wr = jnp.transpose(params["wpw"].reshape(c_out, c_in), (1, 0))
        prep["wr"] = jnp.pad(wr, ((0, 0), (0, pc))).astype(jnp.float32)
        prep["br"] = vec(params["bpw"])
    else:
        # identity shortcut routed through a padded identity matmul (lane-dense)
        prep["wr"] = jnp.eye(c_in, c_pad, dtype=jnp.float32)
        prep["br"] = jnp.zeros((1, c_pad), jnp.float32)
    return prep


# ------------------------------- forward --------------------------------------

@functools.partial(jax.jit, static_argnums=(2, 3, 4))
def base_block_forward(x_nchw, prep, c_in, c_out, spatial_downsample):
    c_pad = _round_up(c_out, 128)
    x = jnp.transpose(x_nchw, (0, 2, 3, 1)).astype(jnp.float32)    # NCHW -> NHWC
    n, h, w, _ = x.shape
    xp = jnp.pad(x, ((0, 0), (1, 1), (1, 1), (0, 0)))              # spatial pad=1

    if spatial_downsample:
        stride1 = 2
        h_out = (h - 1) // 2 + 1
        w_out = (w - 1) // 2 + 1
        # Split padded input into its 4 stride-2 phases (same total bytes as x);
        # every stride-2 tap and the projection input become plain slices in-kernel.
        hp = xp.shape[1] + (xp.shape[1] % 2)
        wp = xp.shape[2] + (xp.shape[2] % 2)
        xp = jnp.pad(xp, ((0, 0), (0, hp - xp.shape[1]), (0, wp - xp.shape[2]), (0, 0)))
        data_in = [xp[:, a::2, b::2, :] for a in (0, 1) for b in (0, 1)]
    else:
        stride1 = 1
        h_out, w_out = h, w
        data_in = [xp]

    kernel = _make_block_kernel(stride1, n, h_out, w_out, c_in, c_pad)
    n_in = len(data_in) + 8

    out = pl.pallas_call(
        kernel,
        out_shape=jax.ShapeDtypeStruct((n, h_out, w_out, c_pad), jnp.float32),
        in_specs=[pl.BlockSpec(memory_space=pltpu.MemorySpace.VMEM)] * n_in,
        out_specs=pl.BlockSpec(memory_space=pltpu.MemorySpace.VMEM),
        scratch_shapes=[pltpu.VMEM((n, h_out + 2, w_out + 2, c_pad), jnp.float32)],
        # raise scoped VMEM above the v5e 16 MiB default; safe on v6e/v7x too
        compiler_params=pltpu.CompilerParams(vmem_limit_bytes=32 * 1024 * 1024),
    )(*data_in, prep["w1"], prep["g1"], prep["b1"],
      prep["w2"], prep["g2"], prep["b2"], prep["wr"], prep["br"])

    out = out[..., :c_out]                       # drop lane padding
    return jnp.transpose(out, (0, 3, 1, 2))      # NHWC -> NCHW


# ----------------------- pure-JAX reference (for check) -----------------------

def torch_like_reference(x, params, c_in, c_out, spatial_downsample):
    P = jax.lax.Precision.HIGHEST

    def conv(x, w, stride, pad):
        return jax.lax.conv_general_dilated(
            x, w, (stride, stride), [(pad, pad), (pad, pad)],
            dimension_numbers=("NCHW", "OIHW", "NCHW"), precision=P)

    def bn(x, g, b):
        mean = jnp.mean(x, axis=(0, 2, 3), keepdims=True)
        var = jnp.mean((x - mean) ** 2, axis=(0, 2, 3), keepdims=True)
        return (x - mean) * jax.lax.rsqrt(var + BN_EPS) * g.reshape(1, -1, 1, 1) \
            + b.reshape(1, -1, 1, 1)

    s1 = 2 if spatial_downsample else 1
    y = jax.nn.relu(bn(conv(x, params["w1"], s1, 1), params["g1"], params["b1"]))
    y = bn(conv(y, params["w2"], 1, 1), params["g2"], params["b2"])
    if c_in == c_out:
        idn = x
    else:
        idn = conv(x, params["wpw"], 2, 0) + params["bpw"].reshape(1, -1, 1, 1)
    return jax.nn.relu(y + idn)


# ----------------------------------- main --------------------------------------

def make_params(key, c_in, c_out):
    ks = jax.random.split(key, 8)
    p = dict(
        w1=0.1 * jax.random.normal(ks[0], (c_out, c_in, 3, 3), jnp.float32),
        g1=1.0 + 0.1 * jax.random.normal(ks[1], (c_out,), jnp.float32),
        b1=0.1 * jax.random.normal(ks[2], (c_out,), jnp.float32),
        w2=0.1 * jax.random.normal(ks[3], (c_out, c_out, 3, 3), jnp.float32),
        g2=1.0 + 0.1 * jax.random.normal(ks[4], (c_out,), jnp.float32),
        b2=0.1 * jax.random.normal(ks[5], (c_out,), jnp.float32),
    )
    if c_in != c_out:
        p["wpw"] = 0.1 * jax.random.normal(ks[6], (c_out, c_in, 1, 1), jnp.float32)
        p["bpw"] = 0.1 * jax.random.normal(ks[7], (c_out,), jnp.float32)
    return p


if __name__ == "__main__":
    key = jax.random.PRNGKey(0)
    k1, k2, k3, k4 = jax.random.split(key, 4)

    # Case 1: channel expansion + spatial downsample (projection shortcut path)
    x1 = jax.random.normal(k1, (2, 4, 16, 16), jnp.float32)
    p1 = make_params(k2, 4, 8)
    prep1 = prepare_params(p1, 4, 8)
    out1 = jax.block_until_ready(base_block_forward(x1, prep1, 4, 8, True))
    ref1 = torch_like_reference(x1, p1, 4, 8, True)
    assert out1.shape == (2, 8, 8, 8)
    assert jnp.allclose(out1, ref1, atol=2e-3, rtol=2e-3)

    # Case 2: identity shortcut (c_in == c_out, no downsample)
    x2 = jax.random.normal(k3, (2, 4, 16, 16), jnp.float32)
    p2 = make_params(k4, 4, 4)
    prep2 = prepare_params(p2, 4, 4)
    out2 = jax.block_until_ready(base_block_forward(x2, prep2, 4, 4, False))
    ref2 = torch_like_reference(x2, p2, 4, 4, False)
    assert out2.shape == (2, 4, 16, 16)
    assert jnp.allclose(out2, ref2, atol=2e-3, rtol=2e-3)

    print("KERNEL_OK")
</pallas_src>

<mosaic_0001>
module attributes {stable_mosaic.version = 11 : i64} {
  func.func @kernel(%arg0: memref<2x9x9x4xf32, #tpu.memory_space<vmem>>, %arg1: memref<2x9x9x4xf32, #tpu.memory_space<vmem>>, %arg2: memref<2x9x9x4xf32, #tpu.memory_space<vmem>>, %arg3: memref<2x9x9x4xf32, #tpu.memory_space<vmem>>, %arg4: memref<9x4x128xf32, #tpu.memory_space<vmem>>, %arg5: memref<1x128xf32, #tpu.memory_space<vmem>>, %arg6: memref<1x128xf32, #tpu.memory_space<vmem>>, %arg7: memref<9x128x128xf32, #tpu.memory_space<vmem>>, %arg8: memref<1x128xf32, #tpu.memory_space<vmem>>, %arg9: memref<1x128xf32, #tpu.memory_space<vmem>>, %arg10: memref<4x128xf32, #tpu.memory_space<vmem>>, %arg11: memref<1x128xf32, #tpu.memory_space<vmem>>, %arg12: memref<2x8x8x128xf32, #tpu.memory_space<vmem>>, %arg13: memref<2x10x10x128xf32, #tpu.memory_space<vmem>>) attributes {dimension_semantics = [], scalar_prefetch = 0 : i64, scratch_operands = 1 : i64, tpu.core_type = #tpu.core_type<tc>} {
    %c0 = arith.constant 0 : index
    %c0_0 = arith.constant 0 : index
    %c0_1 = arith.constant 0 : index
    %c0_2 = arith.constant 0 : index
    %0 = vector.load %arg3[%c0, %c0_0, %c0_1, %c0_2] : memref<2x9x9x4xf32, #tpu.memory_space<vmem>>, vector<2x8x8x4xf32>
    %cst = arith.constant 0.000000e+00 : f32
    %1 = vector.broadcast %cst : f32 to vector<128x128xf32>
    %c0_3 = arith.constant 0 : index
    %c0_4 = arith.constant 0 : index
    %c0_5 = arith.constant 0 : index
    %c0_6 = arith.constant 0 : index
    %2 = vector.load %arg0[%c0_3, %c0_4, %c0_5, %c0_6] : memref<2x9x9x4xf32, #tpu.memory_space<vmem>>, vector<2x8x8x4xf32>
    %3 = vector.shape_cast %2 : vector<2x8x8x4xf32> to vector<128x4xf32>
    %c0_7 = arith.constant 0 : index
    %c0_8 = arith.constant 0 : index
    %c0_9 = arith.constant 0 : index
    %4 = vector.load %arg4[%c0_7, %c0_8, %c0_9] : memref<9x4x128xf32, #tpu.memory_space<vmem>>, vector<1x4x128xf32>
    %5 = vector.shape_cast %4 : vector<1x4x128xf32> to vector<4x128xf32>
    %cst_10 = arith.constant dense<0.000000e+00> : vector<128x128xf32>
    %6 = tpu.matmul %3, %5, %cst_10 {dimension_numbers = #tpu.dot_dimension_numbers<[1], [0], [0], [1], [0, 0, 1, 1], [], []>} : vector<128x4xf32>, vector<4x128xf32>, vector<128x128xf32> -> vector<128x128xf32>
    %7 = arith.addf %1, %6 : vector<128x128xf32>
    %c0_11 = arith.constant 0 : index
    %c0_12 = arith.constant 0 : index
    %c0_13 = arith.constant 0 : index
    %c0_14 = arith.constant 0 : index
    %8 = vector.load %arg1[%c0_11, %c0_12, %c0_13, %c0_14] : memref<2x9x9x4xf32, #tpu.memory_space<vmem>>, vector<2x8x8x4xf32>
    %9 = vector.shape_cast %8 : vector<2x8x8x4xf32> to vector<128x4xf32>
    %c1 = arith.constant 1 : index
    %c0_15 = arith.constant 0 : index
    %c0_16 = arith.constant 0 : index
    %10 = vector.load %arg4[%c1, %c0_15, %c0_16] : memref<9x4x128xf32, #tpu.memory_space<vmem>>, vector<1x4x128xf32>
    %11 = vector.shape_cast %10 : vector<1x4x128xf32> to vector<4x128xf32>
    %cst_17 = arith.constant dense<0.000000e+00> : vector<128x128xf32>
    %12 = tpu.matmul %9, %11, %cst_17 {dimension_numbers = #tpu.dot_dimension_numbers<[1], [0], [0], [1], [0, 0, 1, 1], [], []>} : vector<128x4xf32>, vector<4x128xf32>, vector<128x128xf32> -> vector<128x128xf32>
    %13 = arith.addf %7, %12 : vector<128x128xf32>
    %c0_18 = arith.constant 0 : index
    %c0_19 = arith.constant 0 : index
    %c1_20 = arith.constant 1 : index
    %c0_21 = arith.constant 0 : index
    %14 = vector.load %arg0[%c0_18, %c0_19, %c1_20, %c0_21] : memref<2x9x9x4xf32, #tpu.memory_space<vmem>>, vector<2x8x8x4xf32>
    %15 = vector.shape_cast %14 : vector<2x8x8x4xf32> to vector<128x4xf32>
    %c2 = arith.constant 2 : index
    %c0_22 = arith.constant 0 : index
    %c0_23 = arith.constant 0 : index
    %16 = vector.load %arg4[%c2, %c0_22, %c0_23] : memref<9x4x128xf32, #tpu.memory_space<vmem>>, vector<1x4x128xf32>
    %17 = vector.shape_cast %16 : vector<1x4x128xf32> to vector<4x128xf32>
    %cst_24 = arith.constant dense<0.000000e+00> : vector<128x128xf32>
    %18 = tpu.matmul %15, %17, %cst_24 {dimension_numbers = #tpu.dot_dimension_numbers<[1], [0], [0], [1], [0, 0, 1, 1], [], []>} : vector<128x4xf32>, vector<4x128xf32>, vector<128x128xf32> -> vector<128x128xf32>
    %19 = arith.addf %13, %18 : vector<128x128xf32>
    %c0_25 = arith.constant 0 : index
    %c0_26 = arith.constant 0 : index
    %c0_27 = arith.constant 0 : index
    %c0_28 = arith.constant 0 : index
    %20 = vector.load %arg2[%c0_25, %c0_26, %c0_27, %c0_28] : memref<2x9x9x4xf32, #tpu.memory_space<vmem>>, vector<2x8x8x4xf32>
    %21 = vector.shape_cast %20 : vector<2x8x8x4xf32> to vector<128x4xf32>
    %c3 = arith.constant 3 : index
    %c0_29 = arith.constant 0 : index
    %c0_30 = arith.constant 0 : index
    %22 = vector.load %arg4[%c3, %c0_29, %c0_30] : memref<9x4x128xf32, #tpu.memory_space<vmem>>, vector<1x4x128xf32>
    %23 = vector.shape_cast %22 : vector<1x4x128xf32> to vector<4x128xf32>
    %cst_31 = arith.constant dense<0.000000e+00> : vector<128x128xf32>
    %24 = tpu.matmul %21, %23, %cst_31 {dimension_numbers = #tpu.dot_dimension_numbers<[1], [0], [0], [1], [0, 0, 1, 1], [], []>} : vector<128x4xf32>, vector<4x128xf32>, vector<128x128xf32> -> vector<128x128xf32>
    %25 = arith.addf %19, %24 : vector<128x128xf32>
    %c0_32 = arith.constant 0 : index
    %c0_33 = arith.constant 0 : index
    %c0_34 = arith.constant 0 : index
    %c0_35 = arith.constant 0 : index
    %26 = vector.load %arg3[%c0_32, %c0_33, %c0_34, %c0_35] : memref<2x9x9x4xf32, #tpu.memory_space<vmem>>, vector<2x8x8x4xf32>
    %27 = vector.shape_cast %26 : vector<2x8x8x4xf32> to vector<128x4xf32>
    %c4 = arith.constant 4 : index
    %c0_36 = arith.constant 0 : index
    %c0_37 = arith.constant 0 : index
    %28 = vector.load %arg4[%c4, %c0_36, %c0_37] : memref<9x4x128xf32, #tpu.memory_space<vmem>>, vector<1x4x128xf32>
    %29 = vector.shape_cast %28 : vector<1x4x128xf32> to vector<4x128xf32>
    %cst_38 = arith.constant dense<0.000000e+00> : vector<128x128xf32>
    %30 = tpu.matmul %27, %29, %cst_38 {dimension_numbers = #tpu.dot_dimension_numbers<[1], [0], [0], [1], [0, 0, 1, 1], [], []>} : vector<128x4xf32>, vector<4x128xf32>, vector<128x128xf32> -> vector<128x128xf32>
    %31 = arith.addf %25, %30 : vector<128x128xf32>
    %c0_39 = arith.constant 0 : index
    %c0_40 = arith.constant 0 : index
    %c1_41 = arith.constant 1 : index
    %c0_42 = arith.constant 0 : index
    %32 = vector.load %arg2[%c0_39, %c0_40, %c1_41, %c0_42] : memref<2x9x9x4xf32, #tpu.memory_space<vmem>>, vector<2x8x8x4xf32>
    %33 = vector.shape_cast %32 : vector<2x8x8x4xf32> to vector<128x4xf32>
    %c5 = arith.constant 5 : index
    %c0_43 = arith.constant 0 : index
    %c0_44 = arith.constant 0 : index
    %34 = vector.load %arg4[%c5, %c0_43, %c0_44] : memref<9x4x128xf32, #tpu.memory_space<vmem>>, vector<1x4x128xf32>
    %35 = vector.shape_cast %34 : vector<1x4x128xf32> to vector<4x128xf32>
    %cst_45 = arith.constant dense<0.000000e+00> : vector<128x128xf32>
    %36 = tpu.matmul %33, %35, %cst_45 {dimension_numbers = #tpu.dot_dimension_numbers<[1], [0], [0], [1], [0, 0, 1, 1], [], []>} : vector<128x4xf32>, vector<4x128xf32>, vector<128x128xf32> -> vector<128x128xf32>
    %37 = arith.addf %31, %36 : vector<128x128xf32>
    %c0_46 = arith.constant 0 : index
    %c1_47 = arith.constant 1 : index
    %c0_48 = arith.constant 0 : index
    %c0_49 = arith.constant 0 : index
    %38 = vector.load %arg0[%c0_46, %c1_47, %c0_48, %c0_49] : memref<2x9x9x4xf32, #tpu.memory_space<vmem>>, vector<2x8x8x4xf32>
    %39 = vector.shape_cast %38 : vector<2x8x8x4xf32> to vector<128x4xf32>
    %c6 = arith.constant 6 : index
    %c0_50 = arith.constant 0 : index
    %c0_51 = arith.constant 0 : index
    %40 = vector.load %arg4[%c6, %c0_50, %c0_51] : memref<9x4x128xf32, #tpu.memory_space<vmem>>, vector<1x4x128xf32>
    %41 = vector.shape_cast %40 : vector<1x4x128xf32> to vector<4x128xf32>
    %cst_52 = arith.constant dense<0.000000e+00> : vector<128x128xf32>
    %42 = tpu.matmul %39, %41, %cst_52 {dimension_numbers = #tpu.dot_dimension_numbers<[1], [0], [0], [1], [0, 0, 1, 1], [], []>} : vector<128x4xf32>, vector<4x128xf32>, vector<128x128xf32> -> vector<128x128xf32>
    %43 = arith.addf %37, %42 : vector<128x128xf32>
    %c0_53 = arith.constant 0 : index
    %c1_54 = arith.constant 1 : index
    %c0_55 = arith.constant 0 : index
    %c0_56 = arith.constant 0 : index
    %44 = vector.load %arg1[%c0_53, %c1_54, %c0_55, %c0_56] : memref<2x9x9x4xf32, #tpu.memory_space<vmem>>, vector<2x8x8x4xf32>
    %45 = vector.shape_cast %44 : vector<2x8x8x4xf32> to vector<128x4xf32>
    %c7 = arith.constant 7 : index
    %c0_57 = arith.constant 0 : index
    %c0_58 = arith.constant 0 : index
    %46 = vector.load %arg4[%c7, %c0_57, %c0_58] : memref<9x4x128xf32, #tpu.memory_space<vmem>>, vector<1x4x128xf32>
    %47 = vector.shape_cast %46 : vector<1x4x128xf32> to vector<4x128xf32>
    %cst_59 = arith.constant dense<0.000000e+00> : vector<128x128xf32>
    %48 = tpu.matmul %45, %47, %cst_59 {dimension_numbers = #tpu.dot_dimension_numbers<[1], [0], [0], [1], [0, 0, 1, 1], [], []>} : vector<128x4xf32>, vector<4x128xf32>, vector<128x128xf32> -> vector<128x128xf32>
    %49 = arith.addf %43, %48 : vector<128x128xf32>
    %c0_60 = arith.constant 0 : index
    %c1_61 = arith.constant 1 : index
    %c1_62 = arith.constant 1 : index
    %c0_63 = arith.constant 0 : index
    %50 = vector.load %arg0[%c0_60, %c1_61, %c1_62, %c0_63] : memref<2x9x9x4xf32, #tpu.memory_space<vmem>>, vector<2x8x8x4xf32>
    %51 = vector.shape_cast %50 : vector<2x8x8x4xf32> to vector<128x4xf32>
    %c8 = arith.constant 8 : index
    %c0_64 = arith.constant 0 : index
    %c0_65 = arith.constant 0 : index
    %52 = vector.load %arg4[%c8, %c0_64, %c0_65] : memref<9x4x128xf32, #tpu.memory_space<vmem>>, vector<1x4x128xf32>
    %53 = vector.shape_cast %52 : vector<1x4x128xf32> to vector<4x128xf32>
    %cst_66 = arith.constant dense<0.000000e+00> : vector<128x128xf32>
    %54 = tpu.matmul %51, %53, %cst_66 {dimension_numbers = #tpu.dot_dimension_numbers<[1], [0], [0], [1], [0, 0, 1, 1], [], []>} : vector<128x4xf32>, vector<4x128xf32>, vector<128x128xf32> -> vector<128x128xf32>
    %55 = arith.addf %49, %54 : vector<128x128xf32>
    %cst_67 = arith.constant dense<0.000000e+00> : vector<128xf32>
    %56 = vector.multi_reduction <add>, %55, %cst_67 [0] : vector<128x128xf32> to vector<128xf32>
    %57 = vector.shape_cast %56 : vector<128xf32> to vector<1x128xf32>
    %cst_68 = arith.constant 7.812500e-03 : f32
    %58 = vector.broadcast %cst_68 : f32 to vector<1x128xf32>
    %59 = arith.mulf %57, %58 : vector<1x128xf32>
    %60 = arith.mulf %55, %55 : vector<128x128xf32>
    %cst_69 = arith.constant dense<0.000000e+00> : vector<128xf32>
    %61 = vector.multi_reduction <add>, %60, %cst_69 [0] : vector<128x128xf32> to vector<128xf32>
    %62 = vector.shape_cast %61 : vector<128xf32> to vector<1x128xf32>
    %cst_70 = arith.constant 7.812500e-03 : f32
    %63 = vector.broadcast %cst_70 : f32 to vector<1x128xf32>
    %64 = arith.mulf %62, %63 : vector<1x128xf32>
    %65 = arith.mulf %59, %59 : vector<1x128xf32>
    %66 = arith.subf %64, %65 : vector<1x128xf32>
    %67 = vector.broadcast %59 : vector<1x128xf32> to vector<128x128xf32>
    %68 = arith.subf %55, %67 : vector<128x128xf32>
    %cst_71 = arith.constant 9.99999974E-6 : f32
    %69 = vector.broadcast %cst_71 : f32 to vector<1x128xf32>
    %70 = arith.addf %66, %69 : vector<1x128xf32>
    %71 = math.rsqrt %70 : vector<1x128xf32>
    %72 = vector.broadcast %71 : vector<1x128xf32> to vector<128x128xf32>
    %73 = arith.mulf %68, %72 : vector<128x128xf32>
    %c0_72 = arith.constant 0 : index
    %c0_73 = arith.constant 0 : index
    %74 = vector.load %arg5[%c0_72, %c0_73] : memref<1x128xf32, #tpu.memory_space<vmem>>, vector<1x128xf32>
    %75 = vector.broadcast %74 : vector<1x128xf32> to vector<128x128xf32>
    %76 = arith.mulf %73, %75 : vector<128x128xf32>
    %c0_74 = arith.constant 0 : index
    %c0_75 = arith.constant 0 : index
    %77 = vector.load %arg6[%c0_74, %c0_75] : memref<1x128xf32, #tpu.memory_space<vmem>>, vector<1x128xf32>
    %78 = vector.broadcast %77 : vector<1x128xf32> to vector<128x128xf32>
    %79 = arith.addf %76, %78 : vector<128x128xf32>
    %cst_76 = arith.constant 0.000000e+00 : f32
    %80 = vector.broadcast %cst_76 : f32 to vector<128x128xf32>
    %81 = arith.maximumf %79, %80 : vector<128x128xf32>
    %cst_77 = arith.constant 0.000000e+00 : f32
    %82 = vector.broadcast %cst_77 : f32 to vector<2x10x10x128xf32>
    %c0_78 = arith.constant 0 : index
    %c0_79 = arith.constant 0 : index
    %c0_80 = arith.constant 0 : index
    %c0_81 = arith.constant 0 : index
    %83 = vector.load %arg13[%c0_78, %c0_79, %c0_80, %c0_81] : memref<2x10x10x128xf32, #tpu.memory_space<vmem>>, vector<2x10x10x128xf32>
    tpu.vector_store %arg13[%c0_78, %c0_79, %c0_80, %c0_81], %82 {strides = array<i32>} : memref<2x10x10x128xf32, #tpu.memory_space<vmem>>, vector<2x10x10x128xf32>,
    %84 = vector.shape_cast %81 : vector<128x128xf32> to vector<2x8x8x128xf32>
    %c0_82 = arith.constant 0 : index
    %c1_83 = arith.constant 1 : index
    %c1_84 = arith.constant 1 : index
    %c0_85 = arith.constant 0 : index
    %85 = vector.load %arg13[%c0_82, %c1_83, %c1_84, %c0_85] : memref<2x10x10x128xf32, #tpu.memory_space<vmem>>, vector<2x8x8x128xf32>
    tpu.vector_store %arg13[%c0_82, %c1_83, %c1_84, %c0_85], %84 {strides = array<i32>} : memref<2x10x10x128xf32, #tpu.memory_space<vmem>>, vector<2x8x8x128xf32>,
    %cst_86 = arith.constant 0.000000e+00 : f32
    %86 = vector.broadcast %cst_86 : f32 to vector<128x128xf32>
    %c0_87 = arith.constant 0 : index
    %c0_88 = arith.constant 0 : index
    %c0_89 = arith.constant 0 : index
    %c0_90 = arith.constant 0 : index
    %87 = vector.load %arg13[%c0_87, %c0_88, %c0_89, %c0_90] : memref<2x10x10x128xf32, #tpu.memory_space<vmem>>, vector<2x8x8x128xf32>
    %88 = vector.shape_cast %87 : vector<2x8x8x128xf32> to vector<128x128xf32>
    %c0_91 = arith.constant 0 : index
    %c0_92 = arith.constant 0 : index
    %c0_93 = arith.constant 0 : index
    %89 = vector.load %arg7[%c0_91, %c0_92, %c0_93] : memref<9x128x128xf32, #tpu.memory_space<vmem>>, vector<1x128x128xf32>
    %90 = vector.shape_cast %89 : vector<1x128x128xf32> to vector<128x128xf32>
    %cst_94 = arith.constant dense<0.000000e+00> : vector<128x128xf32>
    %91 = tpu.matmul %88, %90, %cst_94 {dimension_numbers = #tpu.dot_dimension_numbers<[1], [0], [0], [1], [0, 0, 1, 1], [], []>} : vector<128x128xf32>, vector<128x128xf32>, vector<128x128xf32> -> vector<128x128xf32>
    %92 = arith.addf %86, %91 : vector<128x128xf32>
    %c0_95 = arith.constant 0 : index
    %c0_96 = arith.constant 0 : index
    %c1_97 = arith.constant 1 : index
    %c0_98 = arith.constant 0 : index
    %93 = vector.load %arg13[%c0_95, %c0_96, %c1_97, %c0_98] : memref<2x10x10x128xf32, #tpu.memory_space<vmem>>, vector<2x8x8x128xf32>
    %94 = vector.shape_cast %93 : vector<2x8x8x128xf32> to vector<128x128xf32>
    %c1_99 = arith.constant 1 : index
    %c0_100 = arith.constant 0 : index
    %c0_101 = arith.constant 0 : index
    %95 = vector.load %arg7[%c1_99, %c0_100, %c0_101] : memref<9x128x128xf32, #tpu.memory_space<vmem>>, vector<1x128x128xf32>
    %96 = vector.shape_cast %95 : vector<1x128x128xf32> to vector<128x128xf32>
    %cst_102 = arith.constant dense<0.000000e+00> : vector<128x128xf32>
    %97 = tpu.matmul %94, %96, %cst_102 {dimension_numbers = #tpu.dot_dimension_numbers<[1], [0], [0], [1], [0, 0, 1, 1], [], []>} : vector<128x128xf32>, vector<128x128xf32>, vector<128x128xf32> -> vector<128x128xf32>
    %98 = arith.addf %92, %97 : vector<128x128xf32>
    %c0_103 = arith.constant 0 : index
    %c0_104 = arith.constant 0 : index
    %c2_105 = arith.constant 2 : index
    %c0_106 = arith.constant 0 : index
    %99 = vector.load %arg13[%c0_103, %c0_104, %c2_105, %c0_106] : memref<2x10x10x128xf32, #tpu.memory_space<vmem>>, vector<2x8x8x128xf32>
    %100 = vector.shape_cast %99 : vector<2x8x8x128xf32> to vector<128x128xf32>
    %c2_107 = arith.constant 2 : index
    %c0_108 = arith.constant 0 : index
    %c0_109 = arith.constant 0 : index
    %101 = vector.load %arg7[%c2_107, %c0_108, %c0_109] : memref<9x128x128xf32, #tpu.memory_space<vmem>>, vector<1x128x128xf32>
    %102 = vector.shape_cast %101 : vector<1x128x128xf32> to vector<128x128xf32>
    %cst_110 = arith.constant dense<0.000000e+00> : vector<128x128xf32>
    %103 = tpu.matmul %100, %102, %cst_110 {dimension_numbers = #tpu.dot_dimension_numbers<[1], [0], [0], [1], [0, 0, 1, 1], [], []>} : vector<128x128xf32>, vector<128x128xf32>, vector<128x128xf32> -> vector<128x128xf32>
    %104 = arith.addf %98, %103 : vector<128x128xf32>
    %c0_111 = arith.constant 0 : index
    %c1_112 = arith.constant 1 : index
    %c0_113 = arith.constant 0 : index
    %c0_114 = arith.constant 0 : index
    %105 = vector.load %arg13[%c0_111, %c1_112, %c0_113, %c0_114] : memref<2x10x10x128xf32, #tpu.memory_space<vmem>>, vector<2x8x8x128xf32>
    %106 = vector.shape_cast %105 : vector<2x8x8x128xf32> to vector<128x128xf32>
    %c3_115 = arith.constant 3 : index
    %c0_116 = arith.constant 0 : index
    %c0_117 = arith.constant 0 : index
    %107 = vector.load %arg7[%c3_115, %c0_116, %c0_117] : memref<9x128x128xf32, #tpu.memory_space<vmem>>, vector<1x128x128xf32>
    %108 = vector.shape_cast %107 : vector<1x128x128xf32> to vector<128x128xf32>
    %cst_118 = arith.constant dense<0.000000e+00> : vector<128x128xf32>
    %109 = tpu.matmul %106, %108, %cst_118 {dimension_numbers = #tpu.dot_dimension_numbers<[1], [0], [0], [1], [0, 0, 1, 1], [], []>} : vector<128x128xf32>, vector<128x128xf32>, vector<128x128xf32> -> vector<128x128xf32>
    %110 = arith.addf %104, %109 : vector<128x128xf32>
    %c0_119 = arith.constant 0 : index
    %c1_120 = arith.constant 1 : index
    %c1_121 = arith.constant 1 : index
    %c0_122 = arith.constant 0 : index
    %111 = vector.load %arg13[%c0_119, %c1_120, %c1_121, %c0_122] : memref<2x10x10x128xf32, #tpu.memory_space<vmem>>, vector<2x8x8x128xf32>
    %112 = vector.shape_cast %111 : vector<2x8x8x128xf32> to vector<128x128xf32>
    %c4_123 = arith.constant 4 : index
    %c0_124 = arith.constant 0 : index
    %c0_125 = arith.constant 0 : index
    %113 = vector.load %arg7[%c4_123, %c0_124, %c0_125] : memref<9x128x128xf32, #tpu.memory_space<vmem>>, vector<1x128x128xf32>
    %114 = vector.shape_cast %113 : vector<1x128x128xf32> to vector<128x128xf32>
    %cst_126 = arith.constant dense<0.000000e+00> : vector<128x128xf32>
    %115 = tpu.matmul %112, %114, %cst_126 {dimension_numbers = #tpu.dot_dimension_numbers<[1], [0], [0], [1], [0, 0, 1, 1], [], []>} : vector<128x128xf32>, vector<128x128xf32>, vector<128x128xf32> -> vector<128x128xf32>
    %116 = arith.addf %110, %115 : vector<128x128xf32>
    %c0_127 = arith.constant 0 : index
    %c1_128 = arith.constant 1 : index
    %c2_129 = arith.constant 2 : index
    %c0_130 = arith.constant 0 : index
    %117 = vector.load %arg13[%c0_127, %c1_128, %c2_129, %c0_130] : memref<2x10x10x128xf32, #tpu.memory_space<vmem>>, vector<2x8x8x128xf32>
    %118 = vector.shape_cast %117 : vector<2x8x8x128xf32> to vector<128x128xf32>
    %c5_131 = arith.constant 5 : index
    %c0_132 = arith.constant 0 : index
    %c0_133 = arith.constant 0 : index
    %119 = vector.load %arg7[%c5_131, %c0_132, %c0_133] : memref<9x128x128xf32, #tpu.memory_space<vmem>>, vector<1x128x128xf32>
    %120 = vector.shape_cast %119 : vector<1x128x128xf32> to vector<128x128xf32>
    %cst_134 = arith.constant dense<0.000000e+00> : vector<128x128xf32>
    %121 = tpu.matmul %118, %120, %cst_134 {dimension_numbers = #tpu.dot_dimension_numbers<[1], [0], [0], [1], [0, 0, 1, 1], [], []>} : vector<128x128xf32>, vector<128x128xf32>, vector<128x128xf32> -> vector<128x128xf32>
    %122 = arith.addf %116, %121 : vector<128x128xf32>
    %c0_135 = arith.constant 0 : index
    %c2_136 = arith.constant 2 : index
    %c0_137 = arith.constant 0 : index
    %c0_138 = arith.constant 0 : index
    %123 = vector.load %arg13[%c0_135, %c2_136, %c0_137, %c0_138] : memref<2x10x10x128xf32, #tpu.memory_space<vmem>>, vector<2x8x8x128xf32>
    %124 = vector.shape_cast %123 : vector<2x8x8x128xf32> to vector<128x128xf32>
    %c6_139 = arith.constant 6 : index
    %c0_140 = arith.constant 0 : index
    %c0_141 = arith.constant 0 : index
    %125 = vector.load %arg7[%c6_139, %c0_140, %c0_141] : memref<9x128x128xf32, #tpu.memory_space<vmem>>, vector<1x128x128xf32>
    %126 = vector.shape_cast %125 : vector<1x128x128xf32> to vector<128x128xf32>
    %cst_142 = arith.constant dense<0.000000e+00> : vector<128x128xf32>
    %127 = tpu.matmul %124, %126, %cst_142 {dimension_numbers = #tpu.dot_dimension_numbers<[1], [0], [0], [1], [0, 0, 1, 1], [], []>} : vector<128x128xf32>, vector<128x128xf32>, vector<128x128xf32> -> vector<128x128xf32>
    %128 = arith.addf %122, %127 : vector<128x128xf32>
    %c0_143 = arith.constant 0 : index
    %c2_144 = arith.constant 2 : index
    %c1_145 = arith.constant 1 : index
    %c0_146 = arith.constant 0 : index
    %129 = vector.load %arg13[%c0_143, %c2_144, %c1_145, %c0_146] : memref<2x10x10x128xf32, #tpu.memory_space<vmem>>, vector<2x8x8x128xf32>
    %130 = vector.shape_cast %129 : vector<2x8x8x128xf32> to vector<128x128xf32>
    %c7_147 = arith.constant 7 : index
    %c0_148 = arith.constant 0 : index
    %c0_149 = arith.constant 0 : index
    %131 = vector.load %arg7[%c7_147, %c0_148, %c0_149] : memref<9x128x128xf32, #tpu.memory_space<vmem>>, vector<1x128x128xf32>
    %132 = vector.shape_cast %131 : vector<1x128x128xf32> to vector<128x128xf32>
    %cst_150 = arith.constant dense<0.000000e+00> : vector<128x128xf32>
    %133 = tpu.matmul %130, %132, %cst_150 {dimension_numbers = #tpu.dot_dimension_numbers<[1], [0], [0], [1], [0, 0, 1, 1], [], []>} : vector<128x128xf32>, vector<128x128xf32>, vector<128x128xf32> -> vector<128x128xf32>
    %134 = arith.addf %128, %133 : vector<128x128xf32>
    %c0_151 = arith.constant 0 : index
    %c2_152 = arith.constant 2 : index
    %c2_153 = arith.constant 2 : index
    %c0_154 = arith.constant 0 : index
    %135 = vector.load %arg13[%c0_151, %c2_152, %c2_153, %c0_154] : memref<2x10x10x128xf32, #tpu.memory_space<vmem>>, vector<2x8x8x128xf32>
    %136 = vector.shape_cast %135 : vector<2x8x8x128xf32> to vector<128x128xf32>
    %c8_155 = arith.constant 8 : index
    %c0_156 = arith.constant 0 : index
    %c0_157 = arith.constant 0 : index
    %137 = vector.load %arg7[%c8_155, %c0_156, %c0_157] : memref<9x128x128xf32, #tpu.memory_space<vmem>>, vector<1x128x128xf32>
    %138 = vector.shape_cast %137 : vector<1x128x128xf32> to vector<128x128xf32>
    %cst_158 = arith.constant dense<0.000000e+00> : vector<128x128xf32>
    %139 = tpu.matmul %136, %138, %cst_158 {dimension_numbers = #tpu.dot_dimension_numbers<[1], [0], [0], [1], [0, 0, 1, 1], [], []>} : vector<128x128xf32>, vector<128x128xf32>, vector<128x128xf32> -> vector<128x128xf32>
    %140 = arith.addf %134, %139 : vector<128x128xf32>
    %cst_159 = arith.constant dense<0.000000e+00> : vector<128xf32>
    %141 = vector.multi_reduction <add>, %140, %cst_159 [0] : vector<128x128xf32> to vector<128xf32>
    %142 = vector.shape_cast %141 : vector<128xf32> to vector<1x128xf32>
    %cst_160 = arith.constant 7.812500e-03 : f32
    %143 = vector.broadcast %cst_160 : f32 to vector<1x128xf32>
    %144 = arith.mulf %142, %143 : vector<1x128xf32>
    %145 = arith.mulf %140, %140 : vector<128x128xf32>
    %cst_161 = arith.constant dense<0.000000e+00> : vector<128xf32>
    %146 = vector.multi_reduction <add>, %145, %cst_161 [0] : vector<128x128xf32> to vector<128xf32>
    %147 = vector.shape_cast %146 : vector<128xf32> to vector<1x128xf32>
    %cst_162 = arith.constant 7.812500e-03 : f32
    %148 = vector.broadcast %cst_162 : f32 to vector<1x128xf32>
    %149 = arith.mulf %147, %148 : vector<1x128xf32>
    %150 = arith.mulf %144, %144 : vector<1x128xf32>
    %151 = arith.subf %149, %150 : vector<1x128xf32>
    %152 = vector.broadcast %144 : vector<1x128xf32> to vector<128x128xf32>
    %153 = arith.subf %140, %152 : vector<128x128xf32>
    %cst_163 = arith.constant 9.99999974E-6 : f32
    %154 = vector.broadcast %cst_163 : f32 to vector<1x128xf32>
    %155 = arith.addf %151, %154 : vector<1x128xf32>
    %156 = math.rsqrt %155 : vector<1x128xf32>
    %157 = vector.broadcast %156 : vector<1x128xf32> to vector<128x128xf32>
    %158 = arith.mulf %153, %157 : vector<128x128xf32>
    %c0_164 = arith.constant 0 : index
    %c0_165 = arith.constant 0 : index
    %159 = vector.load %arg8[%c0_164, %c0_165] : memref<1x128xf32, #tpu.memory_space<vmem>>, vector<1x128xf32>
    %160 = vector.broadcast %159 : vector<1x128xf32> to vector<128x128xf32>
    %161 = arith.mulf %158, %160 : vector<128x128xf32>
    %c0_166 = arith.constant 0 : index
    %c0_167 = arith.constant 0 : index
    %162 = vector.load %arg9[%c0_166, %c0_167] : memref<1x128xf32, #tpu.memory_space<vmem>>, vector<1x128xf32>
    %163 = vector.broadcast %162 : vector<1x128xf32> to vector<128x128xf32>
    %164 = arith.addf %161, %163 : vector<128x128xf32>
    %165 = vector.shape_cast %0 : vector<2x8x8x4xf32> to vector<128x4xf32>
    %c0_168 = arith.constant 0 : index
    %c0_169 = arith.constant 0 : index
    %166 = vector.load %arg10[%c0_168, %c0_169] : memref<4x128xf32, #tpu.memory_space<vmem>>, vector<4x128xf32>
    %cst_170 = arith.constant dense<0.000000e+00> : vector<128x128xf32>
    %167 = tpu.matmul %165, %166, %cst_170 {dimension_numbers = #tpu.dot_dimension_numbers<[1], [0], [0], [1], [0, 0, 1, 1], [], []>} : vector<128x4xf32>, vector<4x128xf32>, vector<128x128xf32> -> vector<128x128xf32>
    %c0_171 = arith.constant 0 : index
    %c0_172 = arith.constant 0 : index
    %168 = vector.load %arg11[%c0_171, %c0_172] : memref<1x128xf32, #tpu.memory_space<vmem>>, vector<1x128xf32>
    %169 = vector.broadcast %168 : vector<1x128xf32> to vector<128x128xf32>
    %170 = arith.addf %167, %169 : vector<128x128xf32>
    %171 = arith.addf %164, %170 : vector<128x128xf32>
    %cst_173 = arith.constant 0.000000e+00 : f32
    %172 = vector.broadcast %cst_173 : f32 to vector<128x128xf32>
    %173 = arith.maximumf %171, %172 : vector<128x128xf32>
    %174 = vector.shape_cast %173 : vector<128x128xf32> to vector<2x8x8x128xf32>
    %c0_174 = arith.constant 0 : index
    %c0_175 = arith.constant 0 : index
    %c0_176 = arith.constant 0 : index
    %c0_177 = arith.constant 0 : index
    %175 = vector.load %arg12[%c0_174, %c0_175, %c0_176, %c0_177] : memref<2x8x8x128xf32, #tpu.memory_space<vmem>>, vector<2x8x8x128xf32>
    tpu.vector_store %arg12[%c0_174, %c0_175, %c0_176, %c0_177], %174 {strides = array<i32>} : memref<2x8x8x128xf32, #tpu.memory_space<vmem>>, vector<2x8x8x128xf32>,
    return
  }
}

</mosaic_0001>

<llo_original>
// kernel: base_block_forward.1
$region0: #{base_block_forward.1}
  #allocation0 [shape = 'u32[]', space=smem, size = 0x4, offset = 0x4, fixed_abs, tag = 'smem constant byte address 0x4 - core index']
  #allocation1 [shape = 'u32[72,128]{1,0:T(1,128)}', space=vmem, size = 0x9000, scoped, tag = 'internal scratch']
  #allocation2 [shape = 'f32[2,10,10,128]{3,2,1,0:T(8,128)}', space=vmem, size = 0x28000, scoped, tag = 'scratch operand']
  %s0 = inlined_call_operand.vmem [shape: f32[2,9,9,4], index: 0, kind: input, shape index: {}]
  %s1 = inlined_call_operand.vmem [shape: f32[2,9,9,4], index: 1, kind: input, shape index: {}]
  %s2 = inlined_call_operand.vmem [shape: f32[2,9,9,4], index: 2, kind: input, shape index: {}]
  %s3 = inlined_call_operand.vmem [shape: f32[2,9,9,4], index: 3, kind: input, shape index: {}]
  %s4 = inlined_call_operand.vmem [shape: f32[9,4,128], index: 4, kind: input, shape index: {}]
  %s5 = inlined_call_operand.vmem [shape: f32[1,128], index: 5, kind: input, shape index: {}]
  %s6 = inlined_call_operand.vmem [shape: f32[1,128], index: 6, kind: input, shape index: {}]
  %s7 = inlined_call_operand.vmem [shape: f32[9,128,128], index: 7, kind: input, shape index: {}]
  %s8 = inlined_call_operand.vmem [shape: f32[1,128], index: 8, kind: input, shape index: {}]
  %s9 = inlined_call_operand.vmem [shape: f32[1,128], index: 9, kind: input, shape index: {}]
  %s10 = inlined_call_operand.vmem [shape: f32[4,128], index: 10, kind: input, shape index: {}]
  %s11 = inlined_call_operand.vmem [shape: f32[1,128], index: 11, kind: input, shape index: {}]
  %s12 = inlined_call_operand.vmem [shape: f32[2,8,8,128], index: 12, kind: output, shape index: {}]
  %s13 = sld [smem:[#allocation0]]
  $region58: #{base_block_forward.1} parent=0
    _
  %s15 = ssub.s32 1, %s13
  %s16 = scalar_select 0, %s15, %s13
  // Predicated region
  $region2: #{base_block_forward.1} parent=0 // pred_check
    _
  $region3: #{base_block_forward.1} parent=0 // pred_check_branch
    %18 = sbr.rel (0) target = $region5
  $region4: #{base_block_forward.1} parent=0 // pred_region
    _
  $region5: #{base_block_forward.1} parent=0 // pred_fallthru
    _
  // Predicated region
  $region6: #{base_block_forward.1} parent=0 // pred_check
    _
  $region7: #{base_block_forward.1} parent=0 // pred_check_branch
    %20 = sbr.rel (0) target = $region9
  $region8: #{base_block_forward.1} parent=0 // pred_region
    _
  $region9: #{base_block_forward.1} parent=0 // pred_fallthru
    _
  // Predicated region
  $region10: #{base_block_forward.1} parent=0 // pred_check
    _
  $region11: #{base_block_forward.1} parent=0 // pred_check_branch
    %22 = sbr.rel (0) target = $region13
  $region12: #{base_block_forward.1} parent=0 // pred_region
    _
  $region13: #{base_block_forward.1} parent=0 // pred_fallthru
    _
  // Predicated region
  $region14: #{base_block_forward.1} parent=0 // pred_check
    _
  $region15: #{base_block_forward.1} parent=0 // pred_check_branch
    %24 = sbr.rel (0) target = $region17
  $region16: #{base_block_forward.1} parent=0 // pred_region
    _
  $region17: #{base_block_forward.1} parent=0 // pred_fallthru
    _
  // Predicated region
  $region18: #{base_block_forward.1} parent=0 // pred_check
    _
  $region19: #{base_block_forward.1} parent=0 // pred_check_branch
    %26 = sbr.rel (0) target = $region21
  $region20: #{base_block_forward.1} parent=0 // pred_region
    _
  $region21: #{base_block_forward.1} parent=0 // pred_fallthru
    _
  // Predicated region
  $region22: #{base_block_forward.1} parent=0 // pred_check
    _
  $region23: #{base_block_forward.1} parent=0 // pred_check_branch
    %28 = sbr.rel (0) target = $region25
  $region24: #{base_block_forward.1} parent=0 // pred_region
    _
  $region25: #{base_block_forward.1} parent=0 // pred_fallthru
    _
  // Predicated region
  $region26: #{base_block_forward.1} parent=0 // pred_check
    _
  $region27: #{base_block_forward.1} parent=0 // pred_check_branch
    %30 = sbr.rel (0) target = $region29
  $region28: #{base_block_forward.1} parent=0 // pred_region
    _
  $region29: #{base_block_forward.1} parent=0 // pred_fallthru
    _
  // Predicated region
  $region30: #{base_block_forward.1} parent=0 // pred_check
    _
  $region31: #{base_block_forward.1} parent=0 // pred_check_branch
    %32 = sbr.rel (0) target = $region33
  $region32: #{base_block_forward.1} parent=0 // pred_region
    _
  $region33: #{base_block_forward.1} parent=0 // pred_fallthru
    _
  // Predicated region
  $region34: #{base_block_forward.1} parent=0 // pred_check
    _
  $region35: #{base_block_forward.1} parent=0 // pred_check_branch
    %34 = sbr.rel (0) target = $region37
  $region36: #{base_block_forward.1} parent=0 // pred_region
    _
  $region37: #{base_block_forward.1} parent=0 // pred_fallthru
    _
  // Predicated region
  $region38: #{base_block_forward.1} parent=0 // pred_check
    _
  $region39: #{base_block_forward.1} parent=0 // pred_check_branch
    %36 = sbr.rel (0) target = $region41
  $region40: #{base_block_forward.1} parent=0 // pred_region
    _
  $region41: #{base_block_forward.1} parent=0 // pred_fallthru
    _
  // Predicated region
  $region42: #{base_block_forward.1} parent=0 // pred_check
    _
  $region43: #{base_block_forward.1} parent=0 // pred_check_branch
    %38 = sbr.rel (0) target = $region45
  $region44: #{base_block_forward.1} parent=0 // pred_region
    _
  $region45: #{base_block_forward.1} parent=0 // pred_fallthru
    _
  // Predicated region
  $region46: #{base_block_forward.1} parent=0 // pred_check
    _
  $region47: #{base_block_forward.1} parent=0 // pred_check_branch
    %40 = sbr.rel (0) target = $region49
  $region48: #{base_block_forward.1} parent=0 // pred_region
    _
  $region49: #{base_block_forward.1} parent=0 // pred_fallthru
    _
  %v41 = vld [vmem:[%s3] sm:$0xff]
  %v42 = vld [vmem:[%s3 + $0x10] sm:$0xff]
  %v43 = vld [vmem:[%s3 + $0x20] sm:$0xff]
  %v44 = vld [vmem:[%s3 + $0x30] sm:$0xff]
  %v45 = vld [vmem:[%s3 + $0x40] sm:$0xff]
  %v46 = vld [vmem:[%s3 + $0x50] sm:$0xff]
  %v47 = vld [vmem:[%s3 + $0x60] sm:$0xff]
  %v48 = vld [vmem:[%s3 + $0x70] sm:$0xff]
  %v49 = vld [vmem:[%s3 + $0x90] sm:$0xff]
  %v50 = vld [vmem:[%s3 + $0xa0] sm:$0xff]
  %v51 = vld [vmem:[%s3 + $0xb0] sm:$0xff]
  %v52 = vld [vmem:[%s3 + $0xc0] sm:$0xff]
  %v53 = vld [vmem:[%s3 + $0xd0] sm:$0xff]
  %v54 = vld [vmem:[%s3 + $0xe0] sm:$0xff]
  %v55 = vld [vmem:[%s3 + $0xf0] sm:$0xff]
  %v56 = vld [vmem:[%s3 + $0x100] sm:$0xff]
  %v57 = vld [vmem:[%s0] sm:$0xff]
  %v58 = vld [vmem:[%s0 + $0x10] sm:$0xff]
  %v59 = vld [vmem:[%s0 + $0x20] sm:$0xff]
  %v60 = vld [vmem:[%s0 + $0x30] sm:$0xff]
  %v61 = vld [vmem:[%s0 + $0x40] sm:$0xff]
  %v62 = vld [vmem:[%s0 + $0x50] sm:$0xff]
  %v63 = vld [vmem:[%s0 + $0x60] sm:$0xff]
  %v64 = vld [vmem:[%s0 + $0x70] sm:$0xff]
  %v65 = vld [vmem:[%s0 + $0x90] sm:$0xff]
  %v66 = vld [vmem:[%s0 + $0xa0] sm:$0xff]
  %v67 = vld [vmem:[%s0 + $0xb0] sm:$0xff]
  %v68 = vld [vmem:[%s0 + $0xc0] sm:$0xff]
  %v69 = vld [vmem:[%s0 + $0xd0] sm:$0xff]
  %v70 = vld [vmem:[%s0 + $0xe0] sm:$0xff]
  %v71 = vld [vmem:[%s0 + $0xf0] sm:$0xff]
  %v72 = vld [vmem:[%s0 + $0x100] sm:$0xff]
  %v73 = vld [vmem:[%s4] sm:$0xf]
  %v74 = vld [vmem:[%s1] sm:$0xff]
  %v75 = vld [vmem:[%s1 + $0x10] sm:$0xff]
  %v76 = vld [vmem:[%s1 + $0x20] sm:$0xff]
  %v77 = vld [vmem:[%s1 + $0x30] sm:$0xff]
  %v78 = vld [vmem:[%s1 + $0x40] sm:$0xff]
  %v79 = vld [vmem:[%s1 + $0x50] sm:$0xff]
  %v80 = vld [vmem:[%s1 + $0x60] sm:$0xff]
  %v81 = vld [vmem:[%s1 + $0x70] sm:$0xff]
  %v82 = vld [vmem:[%s1 + $0x90] sm:$0xff]
  %v83 = vld [vmem:[%s1 + $0xa0] sm:$0xff]
  %v84 = vld [vmem:[%s1 + $0xb0] sm:$0xff]
  %v85 = vld [vmem:[%s1 + $0xc0] sm:$0xff]
  %v86 = vld [vmem:[%s1 + $0xd0] sm:$0xff]
  %v87 = vld [vmem:[%s1 + $0xe0] sm:$0xff]
  %v88 = vld [vmem:[%s1 + $0xf0] sm:$0xff]
  %v89 = vld [vmem:[%s1 + $0x100] sm:$0xff]
  %s90 = scalar_lea.vmem %s4, 4
  %v91 = vld [vmem:[%s90] sm:$0xf]
  %vm92 = vcmask 31744
  %v94 = vsel %vm92, %v74, 0
  %v97 = vsel %vm92, %v75, 0
  %v100 = vsel %vm92, %v76, 0
  %v103 = vsel %vm92, %v77, 0
  %v106 = vsel %vm92, %v78, 0
  %v109 = vsel %vm92, %v79, 0
  %v112 = vsel %vm92, %v80, 0
  %v115 = vsel %vm92, %v81, 0
  %v118 = vsel %vm92, %v82, 0
  %v121 = vsel %vm92, %v83, 0
  %v124 = vsel %vm92, %v84, 0
  %v127 = vsel %vm92, %v85, 0
  %v130 = vsel %vm92, %v86, 0
  %v133 = vsel %vm92, %v87, 0
  %v136 = vsel %vm92, %v88, 0
  %v139 = vsel %vm92, %v89, 0
  %vm141 = vcmask 1043456
  %v143 = vsel %vm141, %v91, 0
  %145 = vmatpush.msra.mxu0 0.0
  %146 = vmatpush.msra.mxu0 0.0
  %147 = vmatpush.msra.mxu0 0.0
  %148 = vmatpush.msra.mxu0 0.0
  %149 = vmatpush.msra.mxu0 0.0
  %150 = vmatpush.msra.mxu0 0.0
  %151 = vmatpush.msra.mxu0 0.0
  %152 = vmatpush.msra.mxu0 0.0
  %153 = vmatpush.msra.mxu0 0.0
  %154 = vmatpush.msra.mxu0 0.0
  %155 = vmatpush.msra.mxu0 0.0
  %156 = vmatpush.msra.mxu0 0.0
  %157 = vmatpush.msra.mxu0 0.0
  %158 = vmatpush.msra.mxu0 0.0
  %159 = vmatpush.msra.mxu0 0.0
  %160 = vmatpush.msra.mxu0 %v143
  %161 = vmatmul.f32.gmra.mxu0 %v94
  %v162 = vpop.f32.mrf.mxu0
  %v163 = vadd.f32 0.0, %v162
  %164 = vmatmul.f32.gmra.mxu0 %v97
  %v165 = vpop.f32.mrf.mxu0
  %v166 = vadd.f32 0.0, %v165
  %167 = vmatmul.f32.gmra.mxu0 %v100
  %v168 = vpop.f32.mrf.mxu0
  %v169 = vadd.f32 0.0, %v168
  %170 = vmatmul.f32.gmra.mxu0 %v103
  %v171 = vpop.f32.mrf.mxu0
  %v172 = vadd.f32 0.0, %v171
  %173 = vmatmul.f32.gmra.mxu0 %v106
  %v174 = vpop.f32.mrf.mxu0
  %v175 = vadd.f32 0.0, %v174
  %176 = vmatmul.f32.gmra.mxu0 %v109
  %v177 = vpop.f32.mrf.mxu0
  %v178 = vadd.f32 0.0, %v177
  %179 = vmatmul.f32.gmra.mxu0 %v112
  %v180 = vpop.f32.mrf.mxu0
  %v181 = vadd.f32 0.0, %v180
  %182 = vmatmul.f32.gmra.mxu0 %v115
  %v183 = vpop.f32.mrf.mxu0
  %v184 = vadd.f32 0.0, %v183
  %185 = vmatmul.f32.gmra.mxu0 %v118
  %v186 = vpop.f32.mrf.mxu0
  %v187 = vadd.f32 0.0, %v186
  %188 = vmatmul.f32.gmra.mxu0 %v121
  %v189 = vpop.f32.mrf.mxu0
  %v190 = vadd.f32 0.0, %v189
  %191 = vmatmul.f32.gmra.mxu0 %v124
  %v192 = vpop.f32.mrf.mxu0
  %v193 = vadd.f32 0.0, %v192
  %194 = vmatmul.f32.gmra.mxu0 %v127
  %v195 = vpop.f32.mrf.mxu0
  %v196 = vadd.f32 0.0, %v195
  %197 = vmatmul.f32.gmra.mxu0 %v130
  %v198 = vpop.f32.mrf.mxu0
  %v199 = vadd.f32 0.0, %v198
  %200 = vmatmul.f32.gmra.mxu0 %v133
  %v201 = vpop.f32.mrf.mxu0
  %v202 = vadd.f32 0.0, %v201
  %203 = vmatmul.f32.gmra.mxu0 %v136
  %v204 = vpop.f32.mrf.mxu0
  %v205 = vadd.f32 0.0, %v204
  %206 = vmatmul.f32.gmra.mxu0 %v139
  %v207 = vpop.f32.mrf.mxu0
  %v208 = vadd.f32 0.0, %v207
  %209 = vdwg.mxu0
  %v211 = vsel %vm92, %v57, 0
  %v214 = vsel %vm92, %v58, 0
  %v217 = vsel %vm92, %v59, 0
  %v220 = vsel %vm92, %v60, 0
  %v223 = vsel %vm92, %v61, 0
  %v226 = vsel %vm92, %v62, 0
  %v229 = vsel %vm92, %v63, 0
  %v232 = vsel %vm92, %v64, 0
  %v235 = vsel %vm92, %v65, 0
  %v238 = vsel %vm92, %v66, 0
  %v241 = vsel %vm92, %v67, 0
  %v244 = vsel %vm92, %v68, 0
  %v247 = vsel %vm92, %v69, 0
  %v250 = vsel %vm92, %v70, 0
  %v253 = vsel %vm92, %v71, 0
  %v256 = vsel %vm92, %v72, 0
  %v259 = vsel %vm141, %v73, 0
  %261 = vmatpush.msra.mxu0 0.0
  %262 = vmatpush.msra.mxu0 0.0
  %263 = vmatpush.msra.mxu0 0.0
  %264 = vmatpush.msra.mxu0 0.0
  %265 = vmatpush.msra.mxu0 0.0
  %266 = vmatpush.msra.mxu0 0.0
  %267 = vmatpush.msra.mxu0 0.0
  %268 = vmatpush.msra.mxu0 0.0
  %269 = vmatpush.msra.mxu0 0.0
  %270 = vmatpush.msra.mxu0 0.0
  %271 = vmatpush.msra.mxu0 0.0
  %272 = vmatpush.msra.mxu0 0.0
  %273 = vmatpush.msra.mxu0 0.0
  %274 = vmatpush.msra.mxu0 0.0
  %275 = vmatpush.msra.mxu0 0.0
  %276 = vmatpush.msra.mxu0 %v259
  %277 = vmatmul.f32.gmra.mxu0 %v211
  %v278 = vpop.f32.mrf.mxu0
  %v279 = vadd.f32 %v163, %v278
  %280 = vmatmul.f32.gmra.mxu0 %v214
  %v281 = vpop.f32.mrf.mxu0
  %v282 = vadd.f32 %v166, %v281
  %283 = vmatmul.f32.gmra.mxu0 %v217
  %v284 = vpop.f32.mrf.mxu0
  %v285 = vadd.f32 %v169, %v284
  %286 = vmatmul.f32.gmra.mxu0 %v220
  %v287 = vpop.f32.mrf.mxu0
  %v288 = vadd.f32 %v172, %v287
  %289 = vmatmul.f32.gmra.mxu0 %v223
  %v290 = vpop.f32.mrf.mxu0
  %v291 = vadd.f32 %v175, %v290
  %292 = vmatmul.f32.gmra.mxu0 %v226
  %v293 = vpop.f32.mrf.mxu0
  %v294 = vadd.f32 %v178, %v293
  %295 = vmatmul.f32.gmra.mxu0 %v229
  %v296 = vpop.f32.mrf.mxu0
  %v297 = vadd.f32 %v181, %v296
  %298 = vmatmul.f32.gmra.mxu0 %v232
  %v299 = vpop.f32.mrf.mxu0
  %v300 = vadd.f32 %v184, %v299
  %301 = vmatmul.f32.gmra.mxu0 %v235
  %v302 = vpop.f32.mrf.mxu0
  %v303 = vadd.f32 %v187, %v302
  %304 = vmatmul.f32.gmra.mxu0 %v238
  %v305 = vpop.f32.mrf.mxu0
  %v306 = vadd.f32 %v190, %v305
  %307 = vmatmul.f32.gmra.mxu0 %v241
  %v308 = vpop.f32.mrf.mxu0
  %v309 = vadd.f32 %v193, %v308
  %310 = vmatmul.f32.gmra.mxu0 %v244
  %v311 = vpop.f32.mrf.mxu0
  %v312 = vadd.f32 %v196, %v311
  %313 = vmatmul.f32.gmra.mxu0 %v247
  %v314 = vpop.f32.mrf.mxu0
  %v315 = vadd.f32 %v199, %v314
  %316 = vmatmul.f32.gmra.mxu0 %v250
  %v317 = vpop.f32.mrf.mxu0
  %v318 = vadd.f32 %v202, %v317
  %319 = vmatmul.f32.gmra.mxu0 %v253
  %v320 = vpop.f32.mrf.mxu0
  %v321 = vadd.f32 %v205, %v320
  %322 = vmatmul.f32.gmra.mxu0 %v256
  %v323 = vpop.f32.mrf.mxu0
  %v324 = vadd.f32 %v208, %v323
  %325 = vdwg.mxu0
  %v326 = vld [vmem:[%s0 + $0x1] sm:$0xff]
  %v327 = vld [vmem:[%s0 + $0x11] sm:$0xff]
  %v328 = vld [vmem:[%s0 + $0x21] sm:$0xff]
  %v329 = vld [vmem:[%s0 + $0x31] sm:$0xff]
  %v330 = vld [vmem:[%s0 + $0x41] sm:$0xff]
  %v331 = vld [vmem:[%s0 + $0x51] sm:$0xff]
  %v332 = vld [vmem:[%s0 + $0x61] sm:$0xff]
  %v333 = vld [vmem:[%s0 + $0x71] sm:$0xff]
  %v334 = vld [vmem:[%s0 + $0x91] sm:$0xff]
  %v335 = vld [vmem:[%s0 + $0xa1] sm:$0xff]
  %v336 = vld [vmem:[%s0 + $0xb1] sm:$0xff]
  %v337 = vld [vmem:[%s0 + $0xc1] sm:$0xff]
  %v338 = vld [vmem:[%s0 + $0xd1] sm:$0xff]
  %v339 = vld [vmem:[%s0 + $0xe1] sm:$0xff]
  %v340 = vld [vmem:[%s0 + $0xf1] sm:$0xff]
  %v341 = vld [vmem:[%s0 + $0x101] sm:$0xff]
  %s342 = scalar_lea.vmem %s4, 8
  %v343 = vld [vmem:[%s342] sm:$0xf]
  %v345 = vsel %vm92, %v326, 0
  %v348 = vsel %vm92, %v327, 0
  %v351 = vsel %vm92, %v328, 0
  %v354 = vsel %vm92, %v329, 0
  %v357 = vsel %vm92, %v330, 0
  %v360 = vsel %vm92, %v331, 0
  %v363 = vsel %vm92, %v332, 0
  %v366 = vsel %vm92, %v333, 0
  %v369 = vsel %vm92, %v334, 0
  %v372 = vsel %vm92, %v335, 0
  %v375 = vsel %vm92, %v336, 0
  %v378 = vsel %vm92, %v337, 0
  %v381 = vsel %vm92, %v338, 0
  %v384 = vsel %vm92, %v339, 0
  %v387 = vsel %vm92, %v340, 0
  %v390 = vsel %vm92, %v341, 0
  %v393 = vsel %vm141, %v343, 0
  %395 = vmatpush.msra.mxu0 0.0
  %396 = vmatpush.msra.mxu0 0.0
  %397 = vmatpush.msra.mxu0 0.0
  %398 = vmatpush.msra.mxu0 0.0
  %399 = vmatpush.msra.mxu0 0.0
  %400 = vmatpush.msra.mxu0 0.0
  %401 = vmatpush.msra.mxu0 0.0
  %402 = vmatpush.msra.mxu0 0.0
  %403 = vmatpush.msra.mxu0 0.0
  %404 = vmatpush.msra.mxu0 0.0
  %405 = vmatpush.msra.mxu0 0.0
  %406 = vmatpush.msra.mxu0 0.0
  %407 = vmatpush.msra.mxu0 0.0
  %408 = vmatpush.msra.mxu0 0.0
  %409 = vmatpush.msra.mxu0 0.0
  %410 = vmatpush.msra.mxu0 %v393
  %411 = vmatmul.f32.gmra.mxu0 %v345
  %v412 = vpop.f32.mrf.mxu0
  %v413 = vadd.f32 0.0, %v412
  %414 = vmatmul.f32.gmra.mxu0 %v348
  %v415 = vpop.f32.mrf.mxu0
  %v416 = vadd.f32 0.0, %v415
  %417 = vmatmul.f32.gmra.mxu0 %v351
  %v418 = vpop.f32.mrf.mxu0
  %v419 = vadd.f32 0.0, %v418
  %420 = vmatmul.f32.gmra.mxu0 %v354
  %v421 = vpop.f32.mrf.mxu0
  %v422 = vadd.f32 0.0, %v421
  %423 = vmatmul.f32.gmra.mxu0 %v357
  %v424 = vpop.f32.mrf.mxu0
  %v425 = vadd.f32 0.0, %v424
  %426 = vmatmul.f32.gmra.mxu0 %v360
  %v427 = vpop.f32.mrf.mxu0
  %v428 = vadd.f32 0.0, %v427
  %429 = vmatmul.f32.gmra.mxu0 %v363
  %v430 = vpop.f32.mrf.mxu0
  %v431 = vadd.f32 0.0, %v430
  %432 = vmatmul.f32.gmra.mxu0 %v366
  %v433 = vpop.f32.mrf.mxu0
  %v434 = vadd.f32 0.0, %v433
  %435 = vmatmul.f32.gmra.mxu0 %v369
  %v436 = vpop.f32.mrf.mxu0
  %v437 = vadd.f32 0.0, %v436
  %438 = vmatmul.f32.gmra.mxu0 %v372
  %v439 = vpop.f32.mrf.mxu0
  %v440 = vadd.f32 0.0, %v439
  %441 = vmatmul.f32.gmra.mxu0 %v375
  %v442 = vpop.f32.mrf.mxu0
  %v443 = vadd.f32 0.0, %v442
  %444 = vmatmul.f32.gmra.mxu0 %v378
  %v445 = vpop.f32.mrf.mxu0
  %v446 = vadd.f32 0.0, %v445
  %447 = vmatmul.f32.gmra.mxu0 %v381
  %v448 = vpop.f32.mrf.mxu0
  %v449 = vadd.f32 0.0, %v448
  %450 = vmatmul.f32.gmra.mxu0 %v384
  %v451 = vpop.f32.mrf.mxu0
  %v452 = vadd.f32 0.0, %v451
  %453 = vmatmul.f32.gmra.mxu0 %v387
  %v454 = vpop.f32.mrf.mxu0
  %v455 = vadd.f32 0.0, %v454
  %456 = vmatmul.f32.gmra.mxu0 %v390
  %v457 = vpop.f32.mrf.mxu0
  %v458 = vadd.f32 0.0, %v457
  %459 = vdwg.mxu0
  %v460 = vadd.f32 %v279, %v413
  %v461 = vadd.f32 %v282, %v416
  %v462 = vadd.f32 %v285, %v419
  %v463 = vadd.f32 %v288, %v422
  %v464 = vadd.f32 %v291, %v425
  %v465 = vadd.f32 %v294, %v428
  %v466 = vadd.f32 %v297, %v431
  %v467 = vadd.f32 %v300, %v434
  %v468 = vadd.f32 %v303, %v437
  %v469 = vadd.f32 %v306, %v440
  %v470 = vadd.f32 %v309, %v443
  %v471 = vadd.f32 %v312, %v446
  %v472 = vadd.f32 %v315, %v449
  %v473 = vadd.f32 %v318, %v452
  %v474 = vadd.f32 %v321, %v455
  %v475 = vadd.f32 %v324, %v458
  %v476 = vld [vmem:[%s2] sm:$0xff]
  %v477 = vld [vmem:[%s2 + $0x10] sm:$0xff]
  %v478 = vld [vmem:[%s2 + $0x20] sm:$0xff]
  %v479 = vld [vmem:[%s2 + $0x30] sm:$0xff]
  %v480 = vld [vmem:[%s2 + $0x40] sm:$0xff]
  %v481 = vld [vmem:[%s2 + $0x50] sm:$0xff]
  %v482 = vld [vmem:[%s2 + $0x60] sm:$0xff]
  %v483 = vld [vmem:[%s2 + $0x70] sm:$0xff]
  %v484 = vld [vmem:[%s2 + $0x90] sm:$0xff]
  %v485 = vld [vmem:[%s2 + $0xa0] sm:$0xff]
  %v486 = vld [vmem:[%s2 + $0xb0] sm:$0xff]
  %v487 = vld [vmem:[%s2 + $0xc0] sm:$0xff]
  %v488 = vld [vmem:[%s2 + $0xd0] sm:$0xff]
  %v489 = vld [vmem:[%s2 + $0xe0] sm:$0xff]
  %v490 = vld [vmem:[%s2 + $0xf0] sm:$0xff]
  %v491 = vld [vmem:[%s2 + $0x100] sm:$0xff]
  %s492 = scalar_lea.vmem %s4, 12
  %v493 = vld [vmem:[%s492] sm:$0xf]
  %v495 = vsel %vm92, %v476, 0
  %v498 = vsel %vm92, %v477, 0
  %v501 = vsel %vm92, %v478, 0
  %v504 = vsel %vm92, %v479, 0
  %v507 = vsel %vm92, %v480, 0
  %v510 = vsel %vm92, %v481, 0
  %v513 = vsel %vm92, %v482, 0
  %v516 = vsel %vm92, %v483, 0
  %v519 = vsel %vm92, %v484, 0
  %v522 = vsel %vm92, %v485, 0
  %v525 = vsel %vm92, %v486, 0
  %v528 = vsel %vm92, %v487, 0
  %v531 = vsel %vm92, %v488, 0
  %v534 = vsel %vm92, %v489, 0
  %v537 = vsel %vm92, %v490, 0
  %v540 = vsel %vm92, %v491, 0
  %v543 = vsel %vm141, %v493, 0
  %545 = vmatpush.msra.mxu0 0.0
  %546 = vmatpush.msra.mxu0 0.0
  %547 = vmatpush.msra.mxu0 0.0
  %548 = vmatpush.msra.mxu0 0.0
  %549 = vmatpush.msra.mxu0 0.0
  %550 = vmatpush.msra.mxu0 0.0
  %551 = vmatpush.msra.mxu0 0.0
  %552 = vmatpush.msra.mxu0 0.0
  %553 = vmatpush.msra.mxu0 0.0
  %554 = vmatpush.msra.mxu0 0.0
  %555 = vmatpush.msra.mxu0 0.0
  %556 = vmatpush.msra.mxu0 0.0
  %557 = vmatpush.msra.mxu0 0.0
  %558 = vmatpush.msra.mxu0 0.0
  %559 = vmatpush.msra.mxu0 0.0
  %560 = vmatpush.msra.mxu0 %v543
  %561 = vmatmul.f32.gmra.mxu0 %v495
  %v562 = vpop.f32.mrf.mxu0
  %v563 = vadd.f32 0.0, %v562
  %564 = vmatmul.f32.gmra.mxu0 %v498
  %v565 = vpop.f32.mrf.mxu0
  %v566 = vadd.f32 0.0, %v565
  %567 = vmatmul.f32.gmra.mxu0 %v501
  %v568 = vpop.f32.mrf.mxu0
  %v569 = vadd.f32 0.0, %v568
  %570 = vmatmul.f32.gmra.mxu0 %v504
  %v571 = vpop.f32.mrf.mxu0
  %v572 = vadd.f32 0.0, %v571
  %573 = vmatmul.f32.gmra.mxu0 %v507
  %v574 = vpop.f32.mrf.mxu0
  %v575 = vadd.f32 0.0, %v574
  %576 = vmatmul.f32.gmra.mxu0 %v510
  %v577 = vpop.f32.mrf.mxu0
  %v578 = vadd.f32 0.0, %v577
  %579 = vmatmul.f32.gmra.mxu0 %v513
  %v580 = vpop.f32.mrf.mxu0
  %v581 = vadd.f32 0.0, %v580
  %582 = vmatmul.f32.gmra.mxu0 %v516
  %v583 = vpop.f32.mrf.mxu0
  %v584 = vadd.f32 0.0, %v583
  %585 = vmatmul.f32.gmra.mxu0 %v519
  %v586 = vpop.f32.mrf.mxu0
  %v587 = vadd.f32 0.0, %v586
  %588 = vmatmul.f32.gmra.mxu0 %v522
  %v589 = vpop.f32.mrf.mxu0
  %v590 = vadd.f32 0.0, %v589
  %591 = vmatmul.f32.gmra.mxu0 %v525
  %v592 = vpop.f32.mrf.mxu0
  %v593 = vadd.f32 0.0, %v592
  %594 = vmatmul.f32.gmra.mxu0 %v528
  %v595 = vpop.f32.mrf.mxu0
  %v596 = vadd.f32 0.0, %v595
  %597 = vmatmul.f32.gmra.mxu0 %v531
  %v598 = vpop.f32.mrf.mxu0
  %v599 = vadd.f32 0.0, %v598
  %600 = vmatmul.f32.gmra.mxu0 %v534
  %v601 = vpop.f32.mrf.mxu0
  %v602 = vadd.f32 0.0, %v601
  %603 = vmatmul.f32.gmra.mxu0 %v537
  %v604 = vpop.f32.mrf.mxu0
  %v605 = vadd.f32 0.0, %v604
  %606 = vmatmul.f32.gmra.mxu0 %v540
  %v607 = vpop.f32.mrf.mxu0
  %v608 = vadd.f32 0.0, %v607
  %609 = vdwg.mxu0
  %v610 = vadd.f32 %v460, %v563
  %v611 = vadd.f32 %v461, %v566
  %v612 = vadd.f32 %v462, %v569
  %v613 = vadd.f32 %v463, %v572
  %v614 = vadd.f32 %v464, %v575
  %v615 = vadd.f32 %v465, %v578
  %v616 = vadd.f32 %v466, %v581
  %v617 = vadd.f32 %v467, %v584
  %v618 = vadd.f32 %v468, %v587
  %v619 = vadd.f32 %v469, %v590
  %v620 = vadd.f32 %v470, %v593
  %v621 = vadd.f32 %v471, %v596
  %v622 = vadd.f32 %v472, %v599
  %v623 = vadd.f32 %v473, %v602
  %v624 = vadd.f32 %v474, %v605
  %v625 = vadd.f32 %v475, %v608
  %s626 = scalar_lea.vmem %s4, 16
  %v627 = vld [vmem:[%s626] sm:$0xf]
  %v629 = vsel %vm92, %v41, 0
  %v632 = vsel %vm92, %v42, 0
  %v635 = vsel %vm92, %v43, 0
  %v638 = vsel %vm92, %v44, 0
  %v641 = vsel %vm92, %v45, 0
  %v644 = vsel %vm92, %v46, 0
  %v647 = vsel %vm92, %v47, 0
  %v650 = vsel %vm92, %v48, 0
  %v653 = vsel %vm92, %v49, 0
  %v656 = vsel %vm92, %v50, 0
  %v659 = vsel %vm92, %v51, 0
  %v662 = vsel %vm92, %v52, 0
  %v665 = vsel %vm92, %v53, 0
  %v668 = vsel %vm92, %v54, 0
  %v671 = vsel %vm92, %v55, 0
  %v674 = vsel %vm92, %v56, 0
  %v677 = vsel %vm141, %v627, 0
  %679 = vmatpush.msra.mxu0 0.0
  %680 = vmatpush.msra.mxu0 0.0
  %681 = vmatpush.msra.mxu0 0.0
  %682 = vmatpush.msra.mxu0 0.0
  %683 = vmatpush.msra.mxu0 0.0
  %684 = vmatpush.msra.mxu0 0.0
  %685 = vmatpush.msra.mxu0 0.0
  %686 = vmatpush.msra.mxu0 0.0
  %687 = vmatpush.msra.mxu0 0.0
  %688 = vmatpush.msra.mxu0 0.0
  %689 = vmatpush.msra.mxu0 0.0
  %690 = vmatpush.msra.mxu0 0.0
  %691 = vmatpush.msra.mxu0 0.0
  %692 = vmatpush.msra.mxu0 0.0
  %693 = vmatpush.msra.mxu0 0.0
  %694 = vmatpush.msra.mxu0 %v677
  %695 = vmatmul.f32.gmra.mxu0 %v629
  %v696 = vpop.f32.mrf.mxu0
  %v697 = vadd.f32 0.0, %v696
  %698 = vmatmul.f32.gmra.mxu0 %v632
  %v699 = vpop.f32.mrf.mxu0
  %v700 = vadd.f32 0.0, %v699
  %701 = vmatmul.f32.gmra.mxu0 %v635
  %v702 = vpop.f32.mrf.mxu0
  %v703 = vadd.f32 0.0, %v702
  %704 = vmatmul.f32.gmra.mxu0 %v638
  %v705 = vpop.f32.mrf.mxu0
  %v706 = vadd.f32 0.0, %v705
  %707 = vmatmul.f32.gmra.mxu0 %v641
  %v708 = vpop.f32.mrf.mxu0
  %v709 = vadd.f32 0.0, %v708
  %710 = vmatmul.f32.gmra.mxu0 %v644
  %v711 = vpop.f32.mrf.mxu0
  %v712 = vadd.f32 0.0, %v711
  %713 = vmatmul.f32.gmra.mxu0 %v647
  %v714 = vpop.f32.mrf.mxu0
  %v715 = vadd.f32 0.0, %v714
  %716 = vmatmul.f32.gmra.mxu0 %v650
  %v717 = vpop.f32.mrf.mxu0
  %v718 = vadd.f32 0.0, %v717
  %719 = vmatmul.f32.gmra.mxu0 %v653
  %v720 = vpop.f32.mrf.mxu0
  %v721 = vadd.f32 0.0, %v720
  %722 = vmatmul.f32.gmra.mxu0 %v656
  %v723 = vpop.f32.mrf.mxu0
  %v724 = vadd.f32 0.0, %v723
  %725 = vmatmul.f32.gmra.mxu0 %v659
  %v726 = vpop.f32.mrf.mxu0
  %v727 = vadd.f32 0.0, %v726
  %728 = vmatmul.f32.gmra.mxu0 %v662
  %v729 = vpop.f32.mrf.mxu0
  %v730 = vadd.f32 0.0, %v729
  %731 = vmatmul.f32.gmra.mxu0 %v665
  %v732 = vpop.f32.mrf.mxu0
  %v733 = vadd.f32 0.0, %v732
  %734 = vmatmul.f32.gmra.mxu0 %v668
  %v735 = vpop.f32.mrf.mxu0
  %v736 = vadd.f32 0.0, %v735
  %737 = vmatmul.f32.gmra.mxu0 %v671
  %v738 = vpop.f32.mrf.mxu0
  %v739 = vadd.f32 0.0, %v738
  %740 = vmatmul.f32.gmra.mxu0 %v674
  %v741 = vpop.f32.mrf.mxu0
  %v742 = vadd.f32 0.0, %v741
  %743 = vdwg.mxu0
  %v744 = vadd.f32 %v610, %v697
  %v745 = vadd.f32 %v611, %v700
  %v746 = vadd.f32 %v612, %v703
  %v747 = vadd.f32 %v613, %v706
  %v748 = vadd.f32 %v614, %v709
  %v749 = vadd.f32 %v615, %v712
  %v750 = vadd.f32 %v616, %v715
  %v751 = vadd.f32 %v617, %v718
  %v752 = vadd.f32 %v618, %v721
  %v753 = vadd.f32 %v619, %v724
  %v754 = vadd.f32 %v620, %v727
  %v755 = vadd.f32 %v621, %v730
  %v756 = vadd.f32 %v622, %v733
  %v757 = vadd.f32 %v623, %v736
  %v758 = vadd.f32 %v624, %v739
  %v759 = vadd.f32 %v625, %v742
  %v760 = vld [vmem:[%s2 + $0x1] sm:$0xff]
  %v761 = vld [vmem:[%s2 + $0x11] sm:$0xff]
  %v762 = vld [vmem:[%s2 + $0x21] sm:$0xff]
  %v763 = vld [vmem:[%s2 + $0x31] sm:$0xff]
  %v764 = vld [vmem:[%s2 + $0x41] sm:$0xff]
  %v765 = vld [vmem:[%s2 + $0x51] sm:$0xff]
  %v766 = vld [vmem:[%s2 + $0x61] sm:$0xff]
  %v767 = vld [vmem:[%s2 + $0x71] sm:$0xff]
  %v768 = vld [vmem:[%s2 + $0x91] sm:$0xff]
  %v769 = vld [vmem:[%s2 + $0xa1] sm:$0xff]
  %v770 = vld [vmem:[%s2 + $0xb1] sm:$0xff]
  %v771 = vld [vmem:[%s2 + $0xc1] sm:$0xff]
  %v772 = vld [vmem:[%s2 + $0xd1] sm:$0xff]
  %v773 = vld [vmem:[%s2 + $0xe1] sm:$0xff]
  %v774 = vld [vmem:[%s2 + $0xf1] sm:$0xff]
  %v775 = vld [vmem:[%s2 + $0x101] sm:$0xff]
  %s776 = scalar_lea.vmem %s4, 20
  %v777 = vld [vmem:[%s776] sm:$0xf]
  %v779 = vsel %vm92, %v760, 0
  %v782 = vsel %vm92, %v761, 0
  %v785 = vsel %vm92, %v762, 0
  %v788 = vsel %vm92, %v763, 0
  %v791 = vsel %vm92, %v764, 0
  %v794 = vsel %vm92, %v765, 0
  %v797 = vsel %vm92, %v766, 0
  %v800 = vsel %vm92, %v767, 0
  %v803 = vsel %vm92, %v768, 0
  %v806 = vsel %vm92, %v769, 0
  %v809 = vsel %vm92, %v770, 0
  %v812 = vsel %vm92, %v771, 0
  %v815 = vsel %vm92, %v772, 0
  %v818 = vsel %vm92, %v773, 0
  %v821 = vsel %vm92, %v774, 0
  %v824 = vsel %vm92, %v775, 0
  %v827 = vsel %vm141, %v777, 0
  %829 = vmatpush.msra.mxu0 0.0
  %830 = vmatpush.msra.mxu0 0.0
  %831 = vmatpush.msra.mxu0 0.0
  %832 = vmatpush.msra.mxu0 0.0
  %833 = vmatpush.msra.mxu0 0.0
  %834 = vmatpush.msra.mxu0 0.0
  %835 = vmatpush.msra.mxu0 0.0
  %836 = vmatpush.msra.mxu0 0.0
  %837 = vmatpush.msra.mxu0 0.0
  %838 = vmatpush.msra.mxu0 0.0
  %839 = vmatpush.msra.mxu0 0.0
  %840 = vmatpush.msra.mxu0 0.0
  %841 = vmatpush.msra.mxu0 0.0
  %842 = vmatpush.msra.mxu0 0.0
  %843 = vmatpush.msra.mxu0 0.0
  %844 = vmatpush.msra.mxu0 %v827
  %845 = vmatmul.f32.gmra.mxu0 %v779
  %v846 = vpop.f32.mrf.mxu0
  %v847 = vadd.f32 0.0, %v846
  %848 = vmatmul.f32.gmra.mxu0 %v782
  %v849 = vpop.f32.mrf.mxu0
  %v850 = vadd.f32 0.0, %v849
  %851 = vmatmul.f32.gmra.mxu0 %v785
  %v852 = vpop.f32.mrf.mxu0
  %v853 = vadd.f32 0.0, %v852
  %854 = vmatmul.f32.gmra.mxu0 %v788
  %v855 = vpop.f32.mrf.mxu0
  %v856 = vadd.f32 0.0, %v855
  %857 = vmatmul.f32.gmra.mxu0 %v791
  %v858 = vpop.f32.mrf.mxu0
  %v859 = vadd.f32 0.0, %v858
  %860 = vmatmul.f32.gmra.mxu0 %v794
  %v861 = vpop.f32.mrf.mxu0
  %v862 = vadd.f32 0.0, %v861
  %863 = vmatmul.f32.gmra.mxu0 %v797
  %v864 = vpop.f32.mrf.mxu0
  %v865 = vadd.f32 0.0, %v864
  %866 = vmatmul.f32.gmra.mxu0 %v800
  %v867 = vpop.f32.mrf.mxu0
  %v868 = vadd.f32 0.0, %v867
  %869 = vmatmul.f32.gmra.mxu0 %v803
  %v870 = vpop.f32.mrf.mxu0
  %v871 = vadd.f32 0.0, %v870
  %872 = vmatmul.f32.gmra.mxu0 %v806
  %v873 = vpop.f32.mrf.mxu0
  %v874 = vadd.f32 0.0, %v873
  %875 = vmatmul.f32.gmra.mxu0 %v809
  %v876 = vpop.f32.mrf.mxu0
  %v877 = vadd.f32 0.0, %v876
  %878 = vmatmul.f32.gmra.mxu0 %v812
  %v879 = vpop.f32.mrf.mxu0
  %v880 = vadd.f32 0.0, %v879
  %881 = vmatmul.f32.gmra.mxu0 %v815
  %v882 = vpop.f32.mrf.mxu0
  %v883 = vadd.f32 0.0, %v882
  %884 = vmatmul.f32.gmra.mxu0 %v818
  %v885 = vpop.f32.mrf.mxu0
  %v886 = vadd.f32 0.0, %v885
  %887 = vmatmul.f32.gmra.mxu0 %v821
  %v888 = vpop.f32.mrf.mxu0
  %v889 = vadd.f32 0.0, %v888
  %890 = vmatmul.f32.gmra.mxu0 %v824
  %v891 = vpop.f32.mrf.mxu0
  %v892 = vadd.f32 0.0, %v891
  %893 = vdwg.mxu0
  %v894 = vadd.f32 %v744, %v847
  %v895 = vadd.f32 %v745, %v850
  %v896 = vadd.f32 %v746, %v853
  %v897 = vadd.f32 %v747, %v856
  %v898 = vadd.f32 %v748, %v859
  %v899 = vadd.f32 %v749, %v862
  %v900 = vadd.f32 %v750, %v865
  %v901 = vadd.f32 %v751, %v868
  %v902 = vadd.f32 %v752, %v871
  %v903 = vadd.f32 %v753, %v874
  %v904 = vadd.f32 %v754, %v877
  %v905 = vadd.f32 %v755, %v880
  %v906 = vadd.f32 %v756, %v883
  %v907 = vadd.f32 %v757, %v886
  %v908 = vadd.f32 %v758, %v889
  %v909 = vadd.f32 %v759, %v892
  %s910 = scalar_lea.vmem %s0, 16
  %v911 = vld [vmem:[%s910] sm:$0xff]
  %v912 = vld [vmem:[%s910 + $0x10] sm:$0xff]
  %v913 = vld [vmem:[%s910 + $0x20] sm:$0xff]
  %v914 = vld [vmem:[%s910 + $0x30] sm:$0xff]
  %v915 = vld [vmem:[%s910 + $0x40] sm:$0xff]
  %v916 = vld [vmem:[%s910 + $0x50] sm:$0xff]
  %v917 = vld [vmem:[%s910 + $0x60] sm:$0xff]
  %v918 = vld [vmem:[%s910 + $0x70] sm:$0xff]
  %v919 = vld [vmem:[%s910 + $0x90] sm:$0xff]
  %v920 = vld [vmem:[%s910 + $0xa0] sm:$0xff]
  %v921 = vld [vmem:[%s910 + $0xb0] sm:$0xff]
  %v922 = vld [vmem:[%s910 + $0xc0] sm:$0xff]
  %v923 = vld [vmem:[%s910 + $0xd0] sm:$0xff]
  %v924 = vld [vmem:[%s910 + $0xe0] sm:$0xff]
  %v925 = vld [vmem:[%s910 + $0xf0] sm:$0xff]
  %v926 = vld [vmem:[%s910 + $0x100] sm:$0xff]
  %s927 = scalar_lea.vmem %s4, 24
  %v928 = vld [vmem:[%s927] sm:$0xf]
  %v930 = vsel %vm92, %v911, 0
  %v933 = vsel %vm92, %v912, 0
  %v936 = vsel %vm92, %v913, 0
  %v939 = vsel %vm92, %v914, 0
  %v942 = vsel %vm92, %v915, 0
  %v945 = vsel %vm92, %v916, 0
  %v948 = vsel %vm92, %v917, 0
  %v951 = vsel %vm92, %v918, 0
  %v954 = vsel %vm92, %v919, 0
  %v957 = vsel %vm92, %v920, 0
  %v960 = vsel %vm92, %v921, 0
  %v963 = vsel %vm92, %v922, 0
  %v966 = vsel %vm92, %v923, 0
  %v969 = vsel %vm92, %v924, 0
  %v972 = vsel %vm92, %v925, 0
  %v975 = vsel %vm92, %v926, 0
  %v978 = vsel %vm141, %v928, 0
  %980 = vmatpush.msra.mxu0 0.0
  %981 = vmatpush.msra.mxu0 0.0
  %982 = vmatpush.msra.mxu0 0.0
  %983 = vmatpush.msra.mxu0 0.0
  %984 = vmatpush.msra.mxu0 0.0
  %985 = vmatpush.msra.mxu0 0.0
  %986 = vmatpush.msra.mxu0 0.0
  %987 = vmatpush.msra.mxu0 0.0
  %988 = vmatpush.msra.mxu0 0.0
  %989 = vmatpush.msra.mxu0 0.0
  %990 = vmatpush.msra.mxu0 0.0
  %991 = vmatpush.msra.mxu0 0.0
  %992 = vmatpush.msra.mxu0 0.0
  %993 = vmatpush.msra.mxu0 0.0
  %994 = vmatpush.msra.mxu0 0.0
  %995 = vmatpush.msra.mxu0 %v978
  %996 = vmatmul.f32.gmra.mxu0 %v930
  %v997 = vpop.f32.mrf.mxu0
  %v998 = vadd.f32 0.0, %v997
  %999 = vmatmul.f32.gmra.mxu0 %v933
  %v1000 = vpop.f32.mrf.mxu0
  %v1001 = vadd.f32 0.0, %v1000
  %1002 = vmatmul.f32.gmra.mxu0 %v936
  %v1003 = vpop.f32.mrf.mxu0
  %v1004 = vadd.f32 0.0, %v1003
  %1005 = vmatmul.f32.gmra.mxu0 %v939
  %v1006 = vpop.f32.mrf.mxu0
  %v1007 = vadd.f32 0.0, %v1006
  %1008 = vmatmul.f32.gmra.mxu0 %v942
  %v1009 = vpop.f32.mrf.mxu0
  %v1010 = vadd.f32 0.0, %v1009
  %1011 = vmatmul.f32.gmra.mxu0 %v945
  %v1012 = vpop.f32.mrf.mxu0
  %v1013 = vadd.f32 0.0, %v1012
  %1014 = vmatmul.f32.gmra.mxu0 %v948
  %v1015 = vpop.f32.mrf.mxu0
  %v1016 = vadd.f32 0.0, %v1015
  %1017 = vmatmul.f32.gmra.mxu0 %v951
  %v1018 = vpop.f32.mrf.mxu0
  %v1019 = vadd.f32 0.0, %v1018
  %1020 = vmatmul.f32.gmra.mxu0 %v954
  %v1021 = vpop.f32.mrf.mxu0
  %v1022 = vadd.f32 0.0, %v1021
  %1023 = vmatmul.f32.gmra.mxu0 %v957
  %v1024 = vpop.f32.mrf.mxu0
  %v1025 = vadd.f32 0.0, %v1024
  %1026 = vmatmul.f32.gmra.mxu0 %v960
  %v1027 = vpop.f32.mrf.mxu0
  %v1028 = vadd.f32 0.0, %v1027
  %1029 = vmatmul.f32.gmra.mxu0 %v963
  %v1030 = vpop.f32.mrf.mxu0
  %v1031 = vadd.f32 0.0, %v1030
  %1032 = vmatmul.f32.gmra.mxu0 %v966
  %v1033 = vpop.f32.mrf.mxu0
  %v1034 = vadd.f32 0.0, %v1033
  %1035 = vmatmul.f32.gmra.mxu0 %v969
  %v1036 = vpop.f32.mrf.mxu0
  %v1037 = vadd.f32 0.0, %v1036
  %1038 = vmatmul.f32.gmra.mxu0 %v972
  %v1039 = vpop.f32.mrf.mxu0
  %v1040 = vadd.f32 0.0, %v1039
  %1041 = vmatmul.f32.gmra.mxu0 %v975
  %v1042 = vpop.f32.mrf.mxu0
  %v1043 = vadd.f32 0.0, %v1042
  %1044 = vdwg.mxu0
  %v1045 = vadd.f32 %v894, %v998
  %v1046 = vadd.f32 %v895, %v1001
  %v1047 = vadd.f32 %v896, %v1004
  %v1048 = vadd.f32 %v897, %v1007
  %v1049 = vadd.f32 %v898, %v1010
  %v1050 = vadd.f32 %v899, %v1013
  %v1051 = vadd.f32 %v900, %v1016
  %v1052 = vadd.f32 %v901, %v1019
  %v1053 = vadd.f32 %v902, %v1022
  %v1054 = vadd.f32 %v903, %v1025
  %v1055 = vadd.f32 %v904, %v1028
  %v1056 = vadd.f32 %v905, %v1031
  %v1057 = vadd.f32 %v906, %v1034
  %v1058 = vadd.f32 %v907, %v1037
  %v1059 = vadd.f32 %v908, %v1040
  %v1060 = vadd.f32 %v909, %v1043
  %s1061 = scalar_lea.vmem %s1, 16
  %v1062 = vld [vmem:[%s1061] sm:$0xff]
  %v1063 = vld [vmem:[%s1061 + $0x10] sm:$0xff]
  %v1064 = vld [vmem:[%s1061 + $0x20] sm:$0xff]
  %v1065 = vld [vmem:[%s1061 + $0x30] sm:$0xff]
  %v1066 = vld [vmem:[%s1061 + $0x40] sm:$0xff]
  %v1067 = vld [vmem:[%s1061 + $0x50] sm:$0xff]
  %v1068 = vld [vmem:[%s1061 + $0x60] sm:$0xff]
  %v1069 = vld [vmem:[%s1061 + $0x70] sm:$0xff]
  %v1070 = vld [vmem:[%s1061 + $0x90] sm:$0xff]
  %v1071 = vld [vmem:[%s1061 + $0xa0] sm:$0xff]
  %v1072 = vld [vmem:[%s1061 + $0xb0] sm:$0xff]
  %v1073 = vld [vmem:[%s1061 + $0xc0] sm:$0xff]
  %v1074 = vld [vmem:[%s1061 + $0xd0] sm:$0xff]
  %v1075 = vld [vmem:[%s1061 + $0xe0] sm:$0xff]
  %v1076 = vld [vmem:[%s1061 + $0xf0] sm:$0xff]
  %v1077 = vld [vmem:[%s1061 + $0x100] sm:$0xff]
  %s1078 = scalar_lea.vmem %s4, 28
  %v1079 = vld [vmem:[%s1078] sm:$0xf]
  %v1081 = vsel %vm92, %v1062, 0
  %v1084 = vsel %vm92, %v1063, 0
  %v1087 = vsel %vm92, %v1064, 0
  %v1090 = vsel %vm92, %v1065, 0
  %v1093 = vsel %vm92, %v1066, 0
  %v1096 = vsel %vm92, %v1067, 0
  %v1099 = vsel %vm92, %v1068, 0
  %v1102 = vsel %vm92, %v1069, 0
  %v1105 = vsel %vm92, %v1070, 0
  %v1108 = vsel %vm92, %v1071, 0
  %v1111 = vsel %vm92, %v1072, 0
  %v1114 = vsel %vm92, %v1073, 0
  %v1117 = vsel %vm92, %v1074, 0
  %v1120 = vsel %vm92, %v1075, 0
  %v1123 = vsel %vm92, %v1076, 0
  %v1126 = vsel %vm92, %v1077, 0
  %v1129 = vsel %vm141, %v1079, 0
  %1131 = vmatpush.msra.mxu0 0.0
  %1132 = vmatpush.msra.mxu0 0.0
  %1133 = vmatpush.msra.mxu0 0.0
  %1134 = vmatpush.msra.mxu0 0.0
  %1135 = vmatpush.msra.mxu0 0.0
  %1136 = vmatpush.msra.mxu0 0.0
  %1137 = vmatpush.msra.mxu0 0.0
  %1138 = vmatpush.msra.mxu0 0.0
  %1139 = vmatpush.msra.mxu0 0.0
  %1140 = vmatpush.msra.mxu0 0.0
  %1141 = vmatpush.msra.mxu0 0.0
  %1142 = vmatpush.msra.mxu0 0.0
  %1143 = vmatpush.msra.mxu0 0.0
  %1144 = vmatpush.msra.mxu0 0.0
  %1145 = vmatpush.msra.mxu0 0.0
  %1146 = vmatpush.msra.mxu0 %v1129
  %1147 = vmatmul.f32.gmra.mxu0 %v1081
  %v1148 = vpop.f32.mrf.mxu0
  %v1149 = vadd.f32 0.0, %v1148
  %1150 = vmatmul.f32.gmra.mxu0 %v1084
  %v1151 = vpop.f32.mrf.mxu0
  %v1152 = vadd.f32 0.0, %v1151
  %1153 = vmatmul.f32.gmra.mxu0 %v1087
  %v1154 = vpop.f32.mrf.mxu0
  %v1155 = vadd.f32 0.0, %v1154
  %1156 = vmatmul.f32.gmra.mxu0 %v1090
  %v1157 = vpop.f32.mrf.mxu0
  %v1158 = vadd.f32 0.0, %v1157
  %1159 = vmatmul.f32.gmra.mxu0 %v1093
  %v1160 = vpop.f32.mrf.mxu0
  %v1161 = vadd.f32 0.0, %v1160
  %1162 = vmatmul.f32.gmra.mxu0 %v1096
  %v1163 = vpop.f32.mrf.mxu0
  %v1164 = vadd.f32 0.0, %v1163
  %1165 = vmatmul.f32.gmra.mxu0 %v1099
  %v1166 = vpop.f32.mrf.mxu0
  %v1167 = vadd.f32 0.0, %v1166
  %1168 = vmatmul.f32.gmra.mxu0 %v1102
  %v1169 = vpop.f32.mrf.mxu0
  %v1170 = vadd.f32 0.0, %v1169
  %1171 = vmatmul.f32.gmra.mxu0 %v1105
  %v1172 = vpop.f32.mrf.mxu0
  %v1173 = vadd.f32 0.0, %v1172
  %1174 = vmatmul.f32.gmra.mxu0 %v1108
  %v1175 = vpop.f32.mrf.mxu0
  %v1176 = vadd.f32 0.0, %v1175
  %1177 = vmatmul.f32.gmra.mxu0 %v1111
  %v1178 = vpop.f32.mrf.mxu0
  %v1179 = vadd.f32 0.0, %v1178
  %1180 = vmatmul.f32.gmra.mxu0 %v1114
  %v1181 = vpop.f32.mrf.mxu0
  %v1182 = vadd.f32 0.0, %v1181
  %1183 = vmatmul.f32.gmra.mxu0 %v1117
  %v1184 = vpop.f32.mrf.mxu0
  %v1185 = vadd.f32 0.0, %v1184
  %1186 = vmatmul.f32.gmra.mxu0 %v1120
  %v1187 = vpop.f32.mrf.mxu0
  %v1188 = vadd.f32 0.0, %v1187
  %1189 = vmatmul.f32.gmra.mxu0 %v1123
  %v1190 = vpop.f32.mrf.mxu0
  %v1191 = vadd.f32 0.0, %v1190
  %1192 = vmatmul.f32.gmra.mxu0 %v1126
  %v1193 = vpop.f32.mrf.mxu0
  %v1194 = vadd.f32 0.0, %v1193
  %1195 = vdwg.mxu0
  %v1196 = vadd.f32 %v1045, %v1149
  %v1197 = vadd.f32 %v1046, %v1152
  %v1198 = vadd.f32 %v1047, %v1155
  %v1199 = vadd.f32 %v1048, %v1158
  %v1200 = vadd.f32 %v1049, %v1161
  %v1201 = vadd.f32 %v1050, %v1164
  %v1202 = vadd.f32 %v1051, %v1167
  %v1203 = vadd.f32 %v1052, %v1170
  %v1204 = vadd.f32 %v1053, %v1173
  %v1205 = vadd.f32 %v1054, %v1176
  %v1206 = vadd.f32 %v1055, %v1179
  %v1207 = vadd.f32 %v1056, %v1182
  %v1208 = vadd.f32 %v1057, %v1185
  %v1209 = vadd.f32 %v1058, %v1188
  %v1210 = vadd.f32 %v1059, %v1191
  %v1211 = vadd.f32 %v1060, %v1194
  %v1212 = vld [vmem:[%s910 + $0x1] sm:$0xff]
  %v1213 = vld [vmem:[%s910 + $0x11] sm:$0xff]
  %v1214 = vld [vmem:[%s910 + $0x21] sm:$0xff]
  %v1215 = vld [vmem:[%s910 + $0x31] sm:$0xff]
  %v1216 = vld [vmem:[%s910 + $0x41] sm:$0xff]
  %v1217 = vld [vmem:[%s910 + $0x51] sm:$0xff]
  %v1218 = vld [vmem:[%s910 + $0x61] sm:$0xff]
  %v1219 = vld [vmem:[%s910 + $0x71] sm:$0xff]
  %v1220 = vld [vmem:[%s910 + $0x91] sm:$0xff]
  %v1221 = vld [vmem:[%s910 + $0xa1] sm:$0xff]
  %v1222 = vld [vmem:[%s910 + $0xb1] sm:$0xff]
  %v1223 = vld [vmem:[%s910 + $0xc1] sm:$0xff]
  %v1224 = vld [vmem:[%s910 + $0xd1] sm:$0xff]
  %v1225 = vld [vmem:[%s910 + $0xe1] sm:$0xff]
  %v1226 = vld [vmem:[%s910 + $0xf1] sm:$0xff]
  %v1227 = vld [vmem:[%s910 + $0x101] sm:$0xff]
  %s1228 = scalar_lea.vmem %s4, 32
  %v1229 = vld [vmem:[%s1228] sm:$0xf]
  %v1231 = vsel %vm92, %v1212, 0
  %v1234 = vsel %vm92, %v1213, 0
  %v1237 = vsel %vm92, %v1214, 0
  %v1240 = vsel %vm92, %v1215, 0
  %v1243 = vsel %vm92, %v1216, 0
  %v1246 = vsel %vm92, %v1217, 0
  %v1249 = vsel %vm92, %v1218, 0
  %v1252 = vsel %vm92, %v1219, 0
  %v1255 = vsel %vm92, %v1220, 0
  %v1258 = vsel %vm92, %v1221, 0
  %v1261 = vsel %vm92, %v1222, 0
  %v1264 = vsel %vm92, %v1223, 0
  %v1267 = vsel %vm92, %v1224, 0
  %v1270 = vsel %vm92, %v1225, 0
  %v1273 = vsel %vm92, %v1226, 0
  %v1276 = vsel %vm92, %v1227, 0
  %v1279 = vsel %vm141, %v1229, 0
  %1281 = vmatpush.msra.mxu0 0.0
  %1282 = vmatpush.msra.mxu0 0.0
  %1283 = vmatpush.msra.mxu0 0.0
  %1284 = vmatpush.msra.mxu0 0.0
  %1285 = vmatpush.msra.mxu0 0.0
  %1286 = vmatpush.msra.mxu0 0.0
  %1287 = vmatpush.msra.mxu0 0.0
  %1288 = vmatpush.msra.mxu0 0.0
  %1289 = vmatpush.msra.mxu0 0.0
  %1290 = vmatpush.msra.mxu0 0.0
  %1291 = vmatpush.msra.mxu0 0.0
  %1292 = vmatpush.msra.mxu0 0.0
  %1293 = vmatpush.msra.mxu0 0.0
  %1294 = vmatpush.msra.mxu0 0.0
  %1295 = vmatpush.msra.mxu0 0.0
  %1296 = vmatpush.msra.mxu0 %v1279
  %1297 = vmatmul.f32.gmra.mxu0 %v1231
  %v1298 = vpop.f32.mrf.mxu0
  %v1299 = vadd.f32 0.0, %v1298
  %1300 = vmatmul.f32.gmra.mxu0 %v1234
  %v1301 = vpop.f32.mrf.mxu0
  %v1302 = vadd.f32 0.0, %v1301
  %1303 = vmatmul.f32.gmra.mxu0 %v1237
  %v1304 = vpop.f32.mrf.mxu0
  %v1305 = vadd.f32 0.0, %v1304
  %1306 = vmatmul.f32.gmra.mxu0 %v1240
  %v1307 = vpop.f32.mrf.mxu0
  %v1308 = vadd.f32 0.0, %v1307
  %1309 = vmatmul.f32.gmra.mxu0 %v1243
  %v1310 = vpop.f32.mrf.mxu0
  %v1311 = vadd.f32 0.0, %v1310
  %1312 = vmatmul.f32.gmra.mxu0 %v1246
  %v1313 = vpop.f32.mrf.mxu0
  %v1314 = vadd.f32 0.0, %v1313
  %1315 = vmatmul.f32.gmra.mxu0 %v1249
  %v1316 = vpop.f32.mrf.mxu0
  %v1317 = vadd.f32 0.0, %v1316
  %1318 = vmatmul.f32.gmra.mxu0 %v1252
  %v1319 = vpop.f32.mrf.mxu0
  %v1320 = vadd.f32 0.0, %v1319
  %1321 = vmatmul.f32.gmra.mxu0 %v1255
  %v1322 = vpop.f32.mrf.mxu0
  %v1323 = vadd.f32 0.0, %v1322
  %1324 = vmatmul.f32.gmra.mxu0 %v1258
  %v1325 = vpop.f32.mrf.mxu0
  %v1326 = vadd.f32 0.0, %v1325
  %1327 = vmatmul.f32.gmra.mxu0 %v1261
  %v1328 = vpop.f32.mrf.mxu0
  %v1329 = vadd.f32 0.0, %v1328
  %1330 = vmatmul.f32.gmra.mxu0 %v1264
  %v1331 = vpop.f32.mrf.mxu0
  %v1332 = vadd.f32 0.0, %v1331
  %1333 = vmatmul.f32.gmra.mxu0 %v1267
  %v1334 = vpop.f32.mrf.mxu0
  %v1335 = vadd.f32 0.0, %v1334
  %1336 = vmatmul.f32.gmra.mxu0 %v1270
  %v1337 = vpop.f32.mrf.mxu0
  %v1338 = vadd.f32 0.0, %v1337
  %1339 = vmatmul.f32.gmra.mxu0 %v1273
  %v1340 = vpop.f32.mrf.mxu0
  %v1341 = vadd.f32 0.0, %v1340
  %1342 = vmatmul.f32.gmra.mxu0 %v1276
  %v1343 = vpop.f32.mrf.mxu0
  %v1344 = vadd.f32 0.0, %v1343
  %1345 = vdwg.mxu0
  %v1346 = vadd.f32 %v1196, %v1299
  %v1347 = vadd.f32 %v1197, %v1302
  %v1348 = vadd.f32 %v1198, %v1305
  %v1349 = vadd.f32 %v1199, %v1308
  %v1350 = vadd.f32 %v1200, %v1311
  %v1351 = vadd.f32 %v1201, %v1314
  %v1352 = vadd.f32 %v1202, %v1317
  %v1353 = vadd.f32 %v1203, %v1320
  %v1354 = vadd.f32 %v1204, %v1323
  %v1355 = vadd.f32 %v1205, %v1326
  %v1356 = vadd.f32 %v1206, %v1329
  %v1357 = vadd.f32 %v1207, %v1332
  %v1358 = vadd.f32 %v1208, %v1335
  %v1359 = vadd.f32 %v1209, %v1338
  %v1360 = vadd.f32 %v1210, %v1341
  %v1361 = vadd.f32 %v1211, %v1344
  %v1362 = vadd.f32 %v1346, %v1347
  %v1363 = vadd.f32 %v1362, %v1348
  %v1364 = vadd.f32 %v1363, %v1349
  %v1365 = vadd.f32 %v1364, %v1350
  %v1366 = vadd.f32 %v1365, %v1351
  %v1367 = vadd.f32 %v1366, %v1352
  %v1368 = vadd.f32 %v1367, %v1353
  %v1369 = vadd.f32 %v1368, %v1354
  %v1370 = vadd.f32 %v1369, %v1355
  %v1371 = vadd.f32 %v1370, %v1356
  %v1372 = vadd.f32 %v1371, %v1357
  %v1373 = vadd.f32 %v1372, %v1358
  %v1374 = vadd.f32 %v1373, %v1359
  %v1375 = vadd.f32 %v1374, %v1360
  %v1376 = vadd.f32 %v1375, %v1361
  %v1377 = vrot.slane %v1376, 4
  %v1378 = vadd.f32 %v1376, %v1377
  %v1379 = vrot.slane %v1378, 2
  %v1380 = vadd.f32 %v1378, %v1379
  %v1381 = vrot.slane %v1380, 1
  %v1382 = vadd.f32 %v1380, %v1381
  %v1383 = vmul.f32 %v1382, 0.0078125
  %v1384 = vmul.f32 %v1346, %v1346
  %v1385 = vmul.f32 %v1347, %v1347
  %v1386 = vmul.f32 %v1348, %v1348
  %v1387 = vmul.f32 %v1349, %v1349
  %v1388 = vmul.f32 %v1350, %v1350
  %v1389 = vmul.f32 %v1351, %v1351
  %v1390 = vmul.f32 %v1352, %v1352
  %v1391 = vmul.f32 %v1353, %v1353
  %v1392 = vmul.f32 %v1354, %v1354
  %v1393 = vmul.f32 %v1355, %v1355
  %v1394 = vmul.f32 %v1356, %v1356
  %v1395 = vmul.f32 %v1357, %v1357
  %v1396 = vmul.f32 %v1358, %v1358
  %v1397 = vmul.f32 %v1359, %v1359
  %v1398 = vmul.f32 %v1360, %v1360
  %v1399 = vmul.f32 %v1361, %v1361
  %v1400 = vadd.f32 %v1384, %v1385
  %v1401 = vadd.f32 %v1400, %v1386
  %v1402 = vadd.f32 %v1401, %v1387
  %v1403 = vadd.f32 %v1402, %v1388
  %v1404 = vadd.f32 %v1403, %v1389
  %v1405 = vadd.f32 %v1404, %v1390
  %v1406 = vadd.f32 %v1405, %v1391
  %v1407 = vadd.f32 %v1406, %v1392
  %v1408 = vadd.f32 %v1407, %v1393
  %v1409 = vadd.f32 %v1408, %v1394
  %v1410 = vadd.f32 %v1409, %v1395
  %v1411 = vadd.f32 %v1410, %v1396
  %v1412 = vadd.f32 %v1411, %v1397
  %v1413 = vadd.f32 %v1412, %v1398
  %v1414 = vadd.f32 %v1413, %v1399
  %v1415 = vrot.slane %v1414, 4
  %v1416 = vadd.f32 %v1414, %v1415
  %v1417 = vrot.slane %v1416, 2
  %v1418 = vadd.f32 %v1416, %v1417
  %v1419 = vrot.slane %v1418, 1
  %v1420 = vadd.f32 %v1418, %v1419
  %v1421 = vmul.f32 %v1420, 0.0078125
  %v1422 = vmul.f32 %v1383, %v1383
  %v1423 = vsub.f32 %v1421, %v1422
  %v1424 = vsub.f32 %v1346, %v1383
  %v1425 = vsub.f32 %v1347, %v1383
  %v1426 = vsub.f32 %v1348, %v1383
  %v1427 = vsub.f32 %v1349, %v1383
  %v1428 = vsub.f32 %v1350, %v1383
  %v1429 = vsub.f32 %v1351, %v1383
  %v1430 = vsub.f32 %v1352, %v1383
  %v1431 = vsub.f32 %v1353, %v1383
  %v1432 = vsub.f32 %v1354, %v1383
  %v1433 = vsub.f32 %v1355, %v1383
  %v1434 = vsub.f32 %v1356, %v1383
  %v1435 = vsub.f32 %v1357, %v1383
  %v1436 = vsub.f32 %v1358, %v1383
  %v1437 = vsub.f32 %v1359, %v1383
  %v1438 = vsub.f32 %v1360, %v1383
  %v1439 = vsub.f32 %v1361, %v1383
  %v1440 = vadd.f32 %v1423, 1e-05
  %v1441 = vrsqrt.pop %v1440
  %v1442 = vmul.f32 %v1441, %v1440
  %v1443 = vmul.f32 %v1442, %v1441
  %v1444 = vmul.f32 0.5, %v1443
  %v1445 = vsub.f32 1.5, %v1444
  %v1446 = vmul.f32 %v1441, %v1445
  %vm1447 = vweird.f32 %v1440
  %vm1448 = vweird.f32 %v1441
  %vm1449 = vmor %vm1447, %vm1448
  %v1450 = vsel %vm1449, %v1441, %v1446
  %v1451 = vmul.f32 %v1424, %v1450
  %v1452 = vmul.f32 %v1425, %v1450
  %v1453 = vmul.f32 %v1426, %v1450
  %v1454 = vmul.f32 %v1427, %v1450
  %v1455 = vmul.f32 %v1428, %v1450
  %v1456 = vmul.f32 %v1429, %v1450
  %v1457 = vmul.f32 %v1430, %v1450
  %v1458 = vmul.f32 %v1431, %v1450
  %v1459 = vmul.f32 %v1432, %v1450
  %v1460 = vmul.f32 %v1433, %v1450
  %v1461 = vmul.f32 %v1434, %v1450
  %v1462 = vmul.f32 %v1435, %v1450
  %v1463 = vmul.f32 %v1436, %v1450
  %v1464 = vmul.f32 %v1437, %v1450
  %v1465 = vmul.f32 %v1438, %v1450
  %v1466 = vmul.f32 %v1439, %v1450
  %v1467 = vld [vmem:[%s5] sm:$0x1]
  %v1469 = vperm.slane %v1467, 0
  %v1471 = vmul.f32 %v1451, %v1469
  %v1472 = vmul.f32 %v1452, %v1469
  %v1473 = vmul.f32 %v1453, %v1469
  %v1474 = vmul.f32 %v1454, %v1469
  %v1475 = vmul.f32 %v1455, %v1469
  %v1476 = vmul.f32 %v1456, %v1469
  %v1477 = vmul.f32 %v1457, %v1469
  %v1478 = vmul.f32 %v1458, %v1469
  %v1479 = vmul.f32 %v1459, %v1469
  %v1480 = vmul.f32 %v1460, %v1469
  %v1481 = vmul.f32 %v1461, %v1469
  %v1482 = vmul.f32 %v1462, %v1469
  %v1483 = vmul.f32 %v1463, %v1469
  %v1484 = vmul.f32 %v1464, %v1469
  %v1485 = vmul.f32 %v1465, %v1469
  %v1486 = vmul.f32 %v1466, %v1469
  %v1487 = vld [vmem:[%s6] sm:$0x1]
  %v1489 = vperm.slane %v1487, 0
  %v1491 = vadd.f32 %v1471, %v1489
  %v1492 = vadd.f32 %v1472, %v1489
  %v1493 = vadd.f32 %v1473, %v1489
  %v1494 = vadd.f32 %v1474, %v1489
  %v1495 = vadd.f32 %v1475, %v1489
  %v1496 = vadd.f32 %v1476, %v1489
  %v1497 = vadd.f32 %v1477, %v1489
  %v1498 = vadd.f32 %v1478, %v1489
  %v1499 = vadd.f32 %v1479, %v1489
  %v1500 = vadd.f32 %v1480, %v1489
  %v1501 = vadd.f32 %v1481, %v1489
  %v1502 = vadd.f32 %v1482, %v1489
  %v1503 = vadd.f32 %v1483, %v1489
  %v1504 = vadd.f32 %v1484, %v1489
  %v1505 = vadd.f32 %v1485, %v1489
  %v1506 = vadd.f32 %v1486, %v1489
  %v1507 = vmax.f32 %v1491, 0.0
  %v1508 = vmax.f32 %v1492, 0.0
  %v1509 = vmax.f32 %v1493, 0.0
  %v1510 = vmax.f32 %v1494, 0.0
  %v1511 = vmax.f32 %v1495, 0.0
  %v1512 = vmax.f32 %v1496, 0.0
  %v1513 = vmax.f32 %v1497, 0.0
  %v1514 = vmax.f32 %v1498, 0.0
  %v1515 = vmax.f32 %v1499, 0.0
  %v1516 = vmax.f32 %v1500, 0.0
  %v1517 = vmax.f32 %v1501, 0.0
  %v1518 = vmax.f32 %v1502, 0.0
  %v1519 = vmax.f32 %v1503, 0.0
  %v1520 = vmax.f32 %v1504, 0.0
  %v1521 = vmax.f32 %v1505, 0.0
  %v1522 = vmax.f32 %v1506, 0.0
  %1523 = vst [vmem:[#allocation2] sm:$0xff] 0.0
  %1524 = vst [vmem:[#allocation2 + $0x8] sm:$0x3] 0.0
  %1525 = vst [vmem:[#allocation2 + $0x10] sm:$0xff] 0.0
  %1526 = vst [vmem:[#allocation2 + $0x18] sm:$0x3] 0.0
  %1527 = vst [vmem:[#allocation2 + $0x20] sm:$0xff] 0.0
  %1528 = vst [vmem:[#allocation2 + $0x28] sm:$0x3] 0.0
  %1529 = vst [vmem:[#allocation2 + $0x30] sm:$0xff] 0.0
  %1530 = vst [vmem:[#allocation2 + $0x38] sm:$0x3] 0.0
  %1531 = vst [vmem:[#allocation2 + $0x40] sm:$0xff] 0.0
  %1532 = vst [vmem:[#allocation2 + $0x48] sm:$0x3] 0.0
  %1533 = vst [vmem:[#allocation2 + $0x50] sm:$0xff] 0.0
  %1534 = vst [vmem:[#allocation2 + $0x58] sm:$0x3] 0.0
  %1535 = vst [vmem:[#allocation2 + $0x60] sm:$0xff] 0.0
  %1536 = vst [vmem:[#allocation2 + $0x68] sm:$0x3] 0.0
  %1537 = vst [vmem:[#allocation2 + $0x70] sm:$0xff] 0.0
  %1538 = vst [vmem:[#allocation2 + $0x78] sm:$0x3] 0.0
  %1539 = vst [vmem:[#allocation2 + $0x80] sm:$0xff] 0.0
  %1540 = vst [vmem:[#allocation2 + $0x88] sm:$0x3] 0.0
  %1541 = vst [vmem:[#allocation2 + $0x90] sm:$0xff] 0.0
  %1542 = vst [vmem:[#allocation2 + $0x98] sm:$0x3] 0.0
  %1543 = vst [vmem:[#allocation2 + $0xa0] sm:$0xff] 0.0
  %1544 = vst [vmem:[#allocation2 + $0xa8] sm:$0x3] 0.0
  %1545 = vst [vmem:[#allocation2 + $0xb0] sm:$0xff] 0.0
  %1546 = vst [vmem:[#allocation2 + $0xb8] sm:$0x3] 0.0
  %1547 = vst [vmem:[#allocation2 + $0xc0] sm:$0xff] 0.0
  %1548 = vst [vmem:[#allocation2 + $0xc8] sm:$0x3] 0.0
  %1549 = vst [vmem:[#allocation2 + $0xd0] sm:$0xff] 0.0
  %1550 = vst [vmem:[#allocation2 + $0xd8] sm:$0x3] 0.0
  %1551 = vst [vmem:[#allocation2 + $0xe0] sm:$0xff] 0.0
  %1552 = vst [vmem:[#allocation2 + $0xe8] sm:$0x3] 0.0
  %1553 = vst [vmem:[#allocation2 + $0xf0] sm:$0xff] 0.0
  %1554 = vst [vmem:[#allocation2 + $0xf8] sm:$0x3] 0.0
  %1555 = vst [vmem:[#allocation2 + $0x100] sm:$0xff] 0.0
  %1556 = vst [vmem:[#allocation2 + $0x108] sm:$0x3] 0.0
  %1557 = vst [vmem:[#allocation2 + $0x110] sm:$0xff] 0.0
  %1558 = vst [vmem:[#allocation2 + $0x118] sm:$0x3] 0.0
  %1559 = vst [vmem:[#allocation2 + $0x120] sm:$0xff] 0.0
  %1560 = vst [vmem:[#allocation2 + $0x128] sm:$0x3] 0.0
  %1561 = vst [vmem:[#allocation2 + $0x130] sm:$0xff] 0.0
  %1562 = vst [vmem:[#allocation2 + $0x138] sm:$0x3] 0.0
  %s1563 = scalar_lea.vmem [#allocation2], 16
  %1564 = vst [vmem:[%s1563 + $0x1] sm:$0xff] %v1507
  %1565 = vst [vmem:[%s1563 + $0x11] sm:$0xff] %v1508
  %1566 = vst [vmem:[%s1563 + $0x21] sm:$0xff] %v1509
  %1567 = vst [vmem:[%s1563 + $0x31] sm:$0xff] %v1510
  %1568 = vst [vmem:[%s1563 + $0x41] sm:$0xff] %v1511
  %1569 = vst [vmem:[%s1563 + $0x51] sm:$0xff] %v1512
  %1570 = vst [vmem:[%s1563 + $0x61] sm:$0xff] %v1513
  %1571 = vst [vmem:[%s1563 + $0x71] sm:$0xff] %v1514
  %1572 = vst [vmem:[%s1563 + $0xa1] sm:$0xff] %v1515
  %1573 = vst [vmem:[%s1563 + $0xb1] sm:$0xff] %v1516
  %1574 = vst [vmem:[%s1563 + $0xc1] sm:$0xff] %v1517
  %1575 = vst [vmem:[%s1563 + $0xd1] sm:$0xff] %v1518
  %1576 = vst [vmem:[%s1563 + $0xe1] sm:$0xff] %v1519
  %1577 = vst [vmem:[%s1563 + $0xf1] sm:$0xff] %v1520
  %1578 = vst [vmem:[%s1563 + $0x101] sm:$0xff] %v1521
  %1579 = vst [vmem:[%s1563 + $0x111] sm:$0xff] %v1522
  %v1580 = vld [vmem:[#allocation2] sm:$0xff]
  %v1581 = vld [vmem:[#allocation2 + $0x10] sm:$0xff]
  %v1582 = vld [vmem:[#allocation2 + $0x20] sm:$0xff]
  %v1583 = vld [vmem:[#allocation2 + $0x30] sm:$0xff]
  %v1584 = vld [vmem:[#allocation2 + $0x40] sm:$0xff]
  %v1585 = vld [vmem:[#allocation2 + $0x50] sm:$0xff]
  %v1586 = vld [vmem:[#allocation2 + $0x60] sm:$0xff]
  %v1587 = vld [vmem:[#allocation2 + $0x70] sm:$0xff]
  %v1588 = vld [vmem:[#allocation2 + $0xa0] sm:$0xff]
  %v1589 = vld [vmem:[#allocation2 + $0xb0] sm:$0xff]
  %v1590 = vld [vmem:[#allocation2 + $0xc0] sm:$0xff]
  %v1591 = vld [vmem:[#allocation2 + $0xd0] sm:$0xff]
  %v1592 = vld [vmem:[#allocation2 + $0xe0] sm:$0xff]
  %v1593 = vld [vmem:[#allocation2 + $0xf0] sm:$0xff]
  %v1594 = vld [vmem:[#allocation2 + $0x100] sm:$0xff]
  %v1595 = vld [vmem:[#allocation2 + $0x110] sm:$0xff]
  %v1596 = vld [vmem:[%s7] sm:$0xff]
  %v1597 = vld [vmem:[%s7 + $0x8] sm:$0xff]
  %v1598 = vld [vmem:[%s7 + $0x10] sm:$0xff]
  %v1599 = vld [vmem:[%s7 + $0x18] sm:$0xff]
  %v1600 = vld [vmem:[%s7 + $0x20] sm:$0xff]
  %v1601 = vld [vmem:[%s7 + $0x28] sm:$0xff]
  %v1602 = vld [vmem:[%s7 + $0x30] sm:$0xff]
  %v1603 = vld [vmem:[%s7 + $0x38] sm:$0xff]
  %v1604 = vld [vmem:[%s7 + $0x40] sm:$0xff]
  %v1605 = vld [vmem:[%s7 + $0x48] sm:$0xff]
  %v1606 = vld [vmem:[%s7 + $0x50] sm:$0xff]
  %v1607 = vld [vmem:[%s7 + $0x58] sm:$0xff]
  %v1608 = vld [vmem:[%s7 + $0x60] sm:$0xff]
  %v1609 = vld [vmem:[%s7 + $0x68] sm:$0xff]
  %v1610 = vld [vmem:[%s7 + $0x70] sm:$0xff]
  %v1611 = vld [vmem:[%s7 + $0x78] sm:$0xff]
  %v1612 = vld [vmem:[#allocation2 + $0x1] sm:$0xff]
  %v1613 = vld [vmem:[#allocation2 + $0x11] sm:$0xff]
  %v1614 = vld [vmem:[#allocation2 + $0x21] sm:$0xff]
  %v1615 = vld [vmem:[#allocation2 + $0x31] sm:$0xff]
  %v1616 = vld [vmem:[#allocation2 + $0x41] sm:$0xff]
  %v1617 = vld [vmem:[#allocation2 + $0x51] sm:$0xff]
  %v1618 = vld [vmem:[#allocation2 + $0x61] sm:$0xff]
  %v1619 = vld [vmem:[#allocation2 + $0x71] sm:$0xff]
  %v1620 = vld [vmem:[#allocation2 + $0xa1] sm:$0xff]
  %v1621 = vld [vmem:[#allocation2 + $0xb1] sm:$0xff]
  %v1622 = vld [vmem:[#allocation2 + $0xc1] sm:$0xff]
  %v1623 = vld [vmem:[#allocation2 + $0xd1] sm:$0xff]
  %v1624 = vld [vmem:[#allocation2 + $0xe1] sm:$0xff]
  %v1625 = vld [vmem:[#allocation2 + $0xf1] sm:$0xff]
  %v1626 = vld [vmem:[#allocation2 + $0x101] sm:$0xff]
  %v1627 = vld [vmem:[#allocation2 + $0x111] sm:$0xff]
  %s1628 = scalar_lea.vmem %s7, 128
  %v1629 = vld [vmem:[%s1628] sm:$0xff]
  %v1630 = vld [vmem:[%s1628 + $0x8] sm:$0xff]
  %v1631 = vld [vmem:[%s1628 + $0x10] sm:$0xff]
  %v1632 = vld [vmem:[%s1628 + $0x18] sm:$0xff]
  %v1633 = vld [vmem:[%s1628 + $0x20] sm:$0xff]
  %v1634 = vld [vmem:[%s1628 + $0x28] sm:$0xff]
  %v1635 = vld [vmem:[%s1628 + $0x30] sm:$0xff]
  %v1636 = vld [vmem:[%s1628 + $0x38] sm:$0xff]
  %v1637 = vld [vmem:[%s1628 + $0x40] sm:$0xff]
  %v1638 = vld [vmem:[%s1628 + $0x48] sm:$0xff]
  %v1639 = vld [vmem:[%s1628 + $0x50] sm:$0xff]
  %v1640 = vld [vmem:[%s1628 + $0x58] sm:$0xff]
  %v1641 = vld [vmem:[%s1628 + $0x60] sm:$0xff]
  %v1642 = vld [vmem:[%s1628 + $0x68] sm:$0xff]
  %v1643 = vld [vmem:[%s1628 + $0x70] sm:$0xff]
  %v1644 = vld [vmem:[%s1628 + $0x78] sm:$0xff]
  %1645 = vmatpush.msra.mxu0 %v1644
  %1646 = vmatpush.msra.mxu0 %v1643
  %1647 = vmatpush.msra.mxu0 %v1642
  %1648 = vmatpush.msra.mxu0 %v1641
  %1649 = vmatpush.msra.mxu0 %v1640
  %1650 = vmatpush.msra.mxu0 %v1639
  %1651 = vmatpush.msra.mxu0 %v1638
  %1652 = vmatpush.msra.mxu0 %v1637
  %1653 = vmatpush.msra.mxu0 %v1636
  %1654 = vmatpush.msra.mxu0 %v1635
  %1655 = vmatpush.msra.mxu0 %v1634
  %1656 = vmatpush.msra.mxu0 %v1633
  %1657 = vmatpush.msra.mxu0 %v1632
  %1658 = vmatpush.msra.mxu0 %v1631
  %1659 = vmatpush.msra.mxu0 %v1630
  %1660 = vmatpush.msra.mxu0 %v1629
  %1661 = vmatmul.f32.gmra.mxu0 %v1612
  %v1662 = vpop.f32.mrf.mxu0
  %v1663 = vadd.f32 0.0, %v1662
  %1664 = vmatmul.f32.gmra.mxu0 %v1613
  %v1665 = vpop.f32.mrf.mxu0
  %v1666 = vadd.f32 0.0, %v1665
  %1667 = vmatmul.f32.gmra.mxu0 %v1614
  %v1668 = vpop.f32.mrf.mxu0
  %v1669 = vadd.f32 0.0, %v1668
  %1670 = vmatmul.f32.gmra.mxu0 %v1615
  %v1671 = vpop.f32.mrf.mxu0
  %v1672 = vadd.f32 0.0, %v1671
  %1673 = vmatmul.f32.gmra.mxu0 %v1616
  %v1674 = vpop.f32.mrf.mxu0
  %v1675 = vadd.f32 0.0, %v1674
  %1676 = vmatmul.f32.gmra.mxu0 %v1617
  %v1677 = vpop.f32.mrf.mxu0
  %v1678 = vadd.f32 0.0, %v1677
  %1679 = vmatmul.f32.gmra.mxu0 %v1618
  %v1680 = vpop.f32.mrf.mxu0
  %v1681 = vadd.f32 0.0, %v1680
  %1682 = vmatmul.f32.gmra.mxu0 %v1619
  %v1683 = vpop.f32.mrf.mxu0
  %v1684 = vadd.f32 0.0, %v1683
  %1685 = vmatmul.f32.gmra.mxu0 %v1620
  %v1686 = vpop.f32.mrf.mxu0
  %v1687 = vadd.f32 0.0, %v1686
  %1688 = vmatmul.f32.gmra.mxu0 %v1621
  %v1689 = vpop.f32.mrf.mxu0
  %v1690 = vadd.f32 0.0, %v1689
  %1691 = vmatmul.f32.gmra.mxu0 %v1622
  %v1692 = vpop.f32.mrf.mxu0
  %v1693 = vadd.f32 0.0, %v1692
  %1694 = vmatmul.f32.gmra.mxu0 %v1623
  %v1695 = vpop.f32.mrf.mxu0
  %v1696 = vadd.f32 0.0, %v1695
  %1697 = vmatmul.f32.gmra.mxu0 %v1624
  %v1698 = vpop.f32.mrf.mxu0
  %v1699 = vadd.f32 0.0, %v1698
  %1700 = vmatmul.f32.gmra.mxu0 %v1625
  %v1701 = vpop.f32.mrf.mxu0
  %v1702 = vadd.f32 0.0, %v1701
  %1703 = vmatmul.f32.gmra.mxu0 %v1626
  %v1704 = vpop.f32.mrf.mxu0
  %v1705 = vadd.f32 0.0, %v1704
  %1706 = vmatmul.f32.gmra.mxu0 %v1627
  %v1707 = vpop.f32.mrf.mxu0
  %v1708 = vadd.f32 0.0, %v1707
  %1709 = vdwg.mxu0
  %1710 = vmatpush.msra.mxu0 %v1611
  %1711 = vmatpush.msra.mxu0 %v1610
  %1712 = vmatpush.msra.mxu0 %v1609
  %1713 = vmatpush.msra.mxu0 %v1608
  %1714 = vmatpush.msra.mxu0 %v1607
  %1715 = vmatpush.msra.mxu0 %v1606
  %1716 = vmatpush.msra.mxu0 %v1605
  %1717 = vmatpush.msra.mxu0 %v1604
  %1718 = vmatpush.msra.mxu0 %v1603
  %1719 = vmatpush.msra.mxu0 %v1602
  %1720 = vmatpush.msra.mxu0 %v1601
  %1721 = vmatpush.msra.mxu0 %v1600
  %1722 = vmatpush.msra.mxu0 %v1599
  %1723 = vmatpush.msra.mxu0 %v1598
  %1724 = vmatpush.msra.mxu0 %v1597
  %1725 = vmatpush.msra.mxu0 %v1596
  %1726 = vmatmul.f32.gmra.mxu0 %v1580
  %v1727 = vpop.f32.mrf.mxu0
  %v1728 = vadd.f32 %v1663, %v1727
  %1729 = vmatmul.f32.gmra.mxu0 %v1581
  %v1730 = vpop.f32.mrf.mxu0
  %v1731 = vadd.f32 %v1666, %v1730
  %1732 = vmatmul.f32.gmra.mxu0 %v1582
  %v1733 = vpop.f32.mrf.mxu0
  %v1734 = vadd.f32 %v1669, %v1733
  %1735 = vmatmul.f32.gmra.mxu0 %v1583
  %v1736 = vpop.f32.mrf.mxu0
  %v1737 = vadd.f32 %v1672, %v1736
  %1738 = vmatmul.f32.gmra.mxu0 %v1584
  %v1739 = vpop.f32.mrf.mxu0
  %v1740 = vadd.f32 %v1675, %v1739
  %1741 = vmatmul.f32.gmra.mxu0 %v1585
  %v1742 = vpop.f32.mrf.mxu0
  %v1743 = vadd.f32 %v1678, %v1742
  %1744 = vmatmul.f32.gmra.mxu0 %v1586
  %v1745 = vpop.f32.mrf.mxu0
  %v1746 = vadd.f32 %v1681, %v1745
  %1747 = vmatmul.f32.gmra.mxu0 %v1587
  %v1748 = vpop.f32.mrf.mxu0
  %v1749 = vadd.f32 %v1684, %v1748
  %1750 = vmatmul.f32.gmra.mxu0 %v1588
  %v1751 = vpop.f32.mrf.mxu0
  %v1752 = vadd.f32 %v1687, %v1751
  %1753 = vmatmul.f32.gmra.mxu0 %v1589
  %v1754 = vpop.f32.mrf.mxu0
  %v1755 = vadd.f32 %v1690, %v1754
  %1756 = vmatmul.f32.gmra.mxu0 %v1590
  %v1757 = vpop.f32.mrf.mxu0
  %v1758 = vadd.f32 %v1693, %v1757
  %1759 = vmatmul.f32.gmra.mxu0 %v1591
  %v1760 = vpop.f32.mrf.mxu0
  %v1761 = vadd.f32 %v1696, %v1760
  %1762 = vmatmul.f32.gmra.mxu0 %v1592
  %v1763 = vpop.f32.mrf.mxu0
  %v1764 = vadd.f32 %v1699, %v1763
  %1765 = vmatmul.f32.gmra.mxu0 %v1593
  %v1766 = vpop.f32.mrf.mxu0
  %v1767 = vadd.f32 %v1702, %v1766
  %1768 = vmatmul.f32.gmra.mxu0 %v1594
  %v1769 = vpop.f32.mrf.mxu0
  %v1770 = vadd.f32 %v1705, %v1769
  %1771 = vmatmul.f32.gmra.mxu0 %v1595
  %v1772 = vpop.f32.mrf.mxu0
  %v1773 = vadd.f32 %v1708, %v1772
  %1774 = vdwg.mxu0
  %v1775 = vld [vmem:[#allocation2 + $0x2] sm:$0xff]
  %v1776 = vld [vmem:[#allocation2 + $0x12] sm:$0xff]
  %v1777 = vld [vmem:[#allocation2 + $0x22] sm:$0xff]
  %v1778 = vld [vmem:[#allocation2 + $0x32] sm:$0xff]
  %v1779 = vld [vmem:[#allocation2 + $0x42] sm:$0xff]
  %v1780 = vld [vmem:[#allocation2 + $0x52] sm:$0xff]
  %v1781 = vld [vmem:[#allocation2 + $0x62] sm:$0xff]
  %v1782 = vld [vmem:[#allocation2 + $0x72] sm:$0xff]
  %v1783 = vld [vmem:[#allocation2 + $0xa2] sm:$0xff]
  %v1784 = vld [vmem:[#allocation2 + $0xb2] sm:$0xff]
  %v1785 = vld [vmem:[#allocation2 + $0xc2] sm:$0xff]
  %v1786 = vld [vmem:[#allocation2 + $0xd2] sm:$0xff]
  %v1787 = vld [vmem:[#allocation2 + $0xe2] sm:$0xff]
  %v1788 = vld [vmem:[#allocation2 + $0xf2] sm:$0xff]
  %v1789 = vld [vmem:[#allocation2 + $0x102] sm:$0xff]
  %v1790 = vld [vmem:[#allocation2 + $0x112] sm:$0xff]
  %s1791 = scalar_lea.vmem %s7, 256
  %v1792 = vld [vmem:[%s1791] sm:$0xff]
  %v1793 = vld [vmem:[%s1791 + $0x8] sm:$0xff]
  %v1794 = vld [vmem:[%s1791 + $0x10] sm:$0xff]
  %v1795 = vld [vmem:[%s1791 + $0x18] sm:$0xff]
  %v1796 = vld [vmem:[%s1791 + $0x20] sm:$0xff]
  %v1797 = vld [vmem:[%s1791 + $0x28] sm:$0xff]
  %v1798 = vld [vmem:[%s1791 + $0x30] sm:$0xff]
  %v1799 = vld [vmem:[%s1791 + $0x38] sm:$0xff]
  %v1800 = vld [vmem:[%s1791 + $0x40] sm:$0xff]
  %v1801 = vld [vmem:[%s1791 + $0x48] sm:$0xff]
  %v1802 = vld [vmem:[%s1791 + $0x50] sm:$0xff]
  %v1803 = vld [vmem:[%s1791 + $0x58] sm:$0xff]
  %v1804 = vld [vmem:[%s1791 + $0x60] sm:$0xff]
  %v1805 = vld [vmem:[%s1791 + $0x68] sm:$0xff]
  %v1806 = vld [vmem:[%s1791 + $0x70] sm:$0xff]
  %v1807 = vld [vmem:[%s1791 + $0x78] sm:$0xff]
  %1808 = vmatpush.msra.mxu0 %v1807
  %1809 = vmatpush.msra.mxu0 %v1806
  %1810 = vmatpush.msra.mxu0 %v1805
  %1811 = vmatpush.msra.mxu0 %v1804
  %1812 = vmatpush.msra.mxu0 %v1803
  %1813 = vmatpush.msra.mxu0 %v1802
  %1814 = vmatpush.msra.mxu0 %v1801
  %1815 = vmatpush.msra.mxu0 %v1800
  %1816 = vmatpush.msra.mxu0 %v1799
  %1817 = vmatpush.msra.mxu0 %v1798
  %1818 = vmatpush.msra.mxu0 %v1797
  %1819 = vmatpush.msra.mxu0 %v1796
  %1820 = vmatpush.msra.mxu0 %v1795
  %1821 = vmatpush.msra.mxu0 %v1794
  %1822 = vmatpush.msra.mxu0 %v1793
  %1823 = vmatpush.msra.mxu0 %v1792
  %1824 = vmatmul.f32.gmra.mxu0 %v1775
  %v1825 = vpop.f32.mrf.mxu0
  %v1826 = vadd.f32 0.0, %v1825
  %1827 = vmatmul.f32.gmra.mxu0 %v1776
  %v1828 = vpop.f32.mrf.mxu0
  %v1829 = vadd.f32 0.0, %v1828
  %1830 = vmatmul.f32.gmra.mxu0 %v1777
  %v1831 = vpop.f32.mrf.mxu0
  %v1832 = vadd.f32 0.0, %v1831
  %1833 = vmatmul.f32.gmra.mxu0 %v1778
  %v1834 = vpop.f32.mrf.mxu0
  %v1835 = vadd.f32 0.0, %v1834
  %1836 = vmatmul.f32.gmra.mxu0 %v1779
  %v1837 = vpop.f32.mrf.mxu0
  %v1838 = vadd.f32 0.0, %v1837
  %1839 = vmatmul.f32.gmra.mxu0 %v1780
  %v1840 = vpop.f32.mrf.mxu0
  %v1841 = vadd.f32 0.0, %v1840
  %1842 = vmatmul.f32.gmra.mxu0 %v1781
  %v1843 = vpop.f32.mrf.mxu0
  %v1844 = vadd.f32 0.0, %v1843
  %1845 = vmatmul.f32.gmra.mxu0 %v1782
  %v1846 = vpop.f32.mrf.mxu0
  %v1847 = vadd.f32 0.0, %v1846
  %1848 = vmatmul.f32.gmra.mxu0 %v1783
  %v1849 = vpop.f32.mrf.mxu0
  %v1850 = vadd.f32 0.0, %v1849
  %1851 = vmatmul.f32.gmra.mxu0 %v1784
  %v1852 = vpop.f32.mrf.mxu0
  %v1853 = vadd.f32 0.0, %v1852
  %1854 = vmatmul.f32.gmra.mxu0 %v1785
  %v1855 = vpop.f32.mrf.mxu0
  %v1856 = vadd.f32 0.0, %v1855
  %1857 = vmatmul.f32.gmra.mxu0 %v1786
  %v1858 = vpop.f32.mrf.mxu0
  %v1859 = vadd.f32 0.0, %v1858
  %1860 = vmatmul.f32.gmra.mxu0 %v1787
  %v1861 = vpop.f32.mrf.mxu0
  %v1862 = vadd.f32 0.0, %v1861
  %1863 = vmatmul.f32.gmra.mxu0 %v1788
  %v1864 = vpop.f32.mrf.mxu0
  %v1865 = vadd.f32 0.0, %v1864
  %1866 = vmatmul.f32.gmra.mxu0 %v1789
  %v1867 = vpop.f32.mrf.mxu0
  %v1868 = vadd.f32 0.0, %v1867
  %1869 = vmatmul.f32.gmra.mxu0 %v1790
  %v1870 = vpop.f32.mrf.mxu0
  %v1871 = vadd.f32 0.0, %v1870
  %1872 = vdwg.mxu0
  %v1873 = vadd.f32 %v1728, %v1826
  %v1874 = vadd.f32 %v1731, %v1829
  %v1875 = vadd.f32 %v1734, %v1832
  %v1876 = vadd.f32 %v1737, %v1835
  %v1877 = vadd.f32 %v1740, %v1838
  %v1878 = vadd.f32 %v1743, %v1841
  %v1879 = vadd.f32 %v1746, %v1844
  %v1880 = vadd.f32 %v1749, %v1847
  %v1881 = vadd.f32 %v1752, %v1850
  %v1882 = vadd.f32 %v1755, %v1853
  %v1883 = vadd.f32 %v1758, %v1856
  %v1884 = vadd.f32 %v1761, %v1859
  %v1885 = vadd.f32 %v1764, %v1862
  %v1886 = vadd.f32 %v1767, %v1865
  %v1887 = vadd.f32 %v1770, %v1868
  %v1888 = vadd.f32 %v1773, %v1871
  %v1889 = vld [vmem:[%s1563] sm:$0xff]
  %v1890 = vld [vmem:[%s1563 + $0x10] sm:$0xff]
  %v1891 = vld [vmem:[%s1563 + $0x20] sm:$0xff]
  %v1892 = vld [vmem:[%s1563 + $0x30] sm:$0xff]
  %v1893 = vld [vmem:[%s1563 + $0x40] sm:$0xff]
  %v1894 = vld [vmem:[%s1563 + $0x50] sm:$0xff]
  %v1895 = vld [vmem:[%s1563 + $0x60] sm:$0xff]
  %v1896 = vld [vmem:[%s1563 + $0x70] sm:$0xff]
  %v1897 = vld [vmem:[%s1563 + $0xa0] sm:$0xff]
  %v1898 = vld [vmem:[%s1563 + $0xb0] sm:$0xff]
  %v1899 = vld [vmem:[%s1563 + $0xc0] sm:$0xff]
  %v1900 = vld [vmem:[%s1563 + $0xd0] sm:$0xff]
  %v1901 = vld [vmem:[%s1563 + $0xe0] sm:$0xff]
  %v1902 = vld [vmem:[%s1563 + $0xf0] sm:$0xff]
  %v1903 = vld [vmem:[%s1563 + $0x100] sm:$0xff]
  %v1904 = vld [vmem:[%s1563 + $0x110] sm:$0xff]
  %s1905 = scalar_lea.vmem %s7, 384
  %v1906 = vld [vmem:[%s1905] sm:$0xff]
  %v1907 = vld [vmem:[%s1905 + $0x8] sm:$0xff]
  %v1908 = vld [vmem:[%s1905 + $0x10] sm:$0xff]
  %v1909 = vld [vmem:[%s1905 + $0x18] sm:$0xff]
  %v1910 = vld [vmem:[%s1905 + $0x20] sm:$0xff]
  %v1911 = vld [vmem:[%s1905 + $0x28] sm:$0xff]
  %v1912 = vld [vmem:[%s1905 + $0x30] sm:$0xff]
  %v1913 = vld [vmem:[%s1905 + $0x38] sm:$0xff]
  %v1914 = vld [vmem:[%s1905 + $0x40] sm:$0xff]
  %v1915 = vld [vmem:[%s1905 + $0x48] sm:$0xff]
  %v1916 = vld [vmem:[%s1905 + $0x50] sm:$0xff]
  %v1917 = vld [vmem:[%s1905 + $0x58] sm:$0xff]
  %v1918 = vld [vmem:[%s1905 + $0x60] sm:$0xff]
  %v1919 = vld [vmem:[%s1905 + $0x68] sm:$0xff]
  %v1920 = vld [vmem:[%s1905 + $0x70] sm:$0xff]
  %v1921 = vld [vmem:[%s1905 + $0x78] sm:$0xff]
  %1922 = vmatpush.msra.mxu0 %v1921
  %1923 = vmatpush.msra.mxu0 %v1920
  %1924 = vmatpush.msra.mxu0 %v1919
  %1925 = vmatpush.msra.mxu0 %v1918
  %1926 = vmatpush.msra.mxu0 %v1917
  %1927 = vmatpush.msra.mxu0 %v1916
  %1928 = vmatpush.msra.mxu0 %v1915
  %1929 = vmatpush.msra.mxu0 %v1914
  %1930 = vmatpush.msra.mxu0 %v1913
  %1931 = vmatpush.msra.mxu0 %v1912
  %1932 = vmatpush.msra.mxu0 %v1911
  %1933 = vmatpush.msra.mxu0 %v1910
  %1934 = vmatpush.msra.mxu0 %v1909
  %1935 = vmatpush.msra.mxu0 %v1908
  %1936 = vmatpush.msra.mxu0 %v1907
  %1937 = vmatpush.msra.mxu0 %v1906
  %1938 = vmatmul.f32.gmra.mxu0 %v1889
  %v1939 = vpop.f32.mrf.mxu0
  %v1940 = vadd.f32 0.0, %v1939
  %1941 = vmatmul.f32.gmra.mxu0 %v1890
  %v1942 = vpop.f32.mrf.mxu0
  %v1943 = vadd.f32 0.0, %v1942
  %1944 = vmatmul.f32.gmra.mxu0 %v1891
  %v1945 = vpop.f32.mrf.mxu0
  %v1946 = vadd.f32 0.0, %v1945
  %1947 = vmatmul.f32.gmra.mxu0 %v1892
  %v1948 = vpop.f32.mrf.mxu0
  %v1949 = vadd.f32 0.0, %v1948
  %1950 = vmatmul.f32.gmra.mxu0 %v1893
  %v1951 = vpop.f32.mrf.mxu0
  %v1952 = vadd.f32 0.0, %v1951
  %1953 = vmatmul.f32.gmra.mxu0 %v1894
  %v1954 = vpop.f32.mrf.mxu0
  %v1955 = vadd.f32 0.0, %v1954
  %1956 = vmatmul.f32.gmra.mxu0 %v1895
  %v1957 = vpop.f32.mrf.mxu0
  %v1958 = vadd.f32 0.0, %v1957
  %1959 = vmatmul.f32.gmra.mxu0 %v1896
  %v1960 = vpop.f32.mrf.mxu0
  %v1961 = vadd.f32 0.0, %v1960
  %1962 = vmatmul.f32.gmra.mxu0 %v1897
  %v1963 = vpop.f32.mrf.mxu0
  %v1964 = vadd.f32 0.0, %v1963
  %1965 = vmatmul.f32.gmra.mxu0 %v1898
  %v1966 = vpop.f32.mrf.mxu0
  %v1967 = vadd.f32 0.0, %v1966
  %1968 = vmatmul.f32.gmra.mxu0 %v1899
  %v1969 = vpop.f32.mrf.mxu0
  %v1970 = vadd.f32 0.0, %v1969
  %1971 = vmatmul.f32.gmra.mxu0 %v1900
  %v1972 = vpop.f32.mrf.mxu0
  %v1973 = vadd.f32 0.0, %v1972
  %1974 = vmatmul.f32.gmra.mxu0 %v1901
  %v1975 = vpop.f32.mrf.mxu0
  %v1976 = vadd.f32 0.0, %v1975
  %1977 = vmatmul.f32.gmra.mxu0 %v1902
  %v1978 = vpop.f32.mrf.mxu0
  %v1979 = vadd.f32 0.0, %v1978
  %1980 = vmatmul.f32.gmra.mxu0 %v1903
  %v1981 = vpop.f32.mrf.mxu0
  %v1982 = vadd.f32 0.0, %v1981
  %1983 = vmatmul.f32.gmra.mxu0 %v1904
  %v1984 = vpop.f32.mrf.mxu0
  %v1985 = vadd.f32 0.0, %v1984
  %1986 = vdwg.mxu0
  %v1987 = vadd.f32 %v1873, %v1940
  %v1988 = vadd.f32 %v1874, %v1943
  %v1989 = vadd.f32 %v1875, %v1946
  %v1990 = vadd.f32 %v1876, %v1949
  %v1991 = vadd.f32 %v1877, %v1952
  %v1992 = vadd.f32 %v1878, %v1955
  %v1993 = vadd.f32 %v1879, %v1958
  %v1994 = vadd.f32 %v1880, %v1961
  %v1995 = vadd.f32 %v1881, %v1964
  %v1996 = vadd.f32 %v1882, %v1967
  %v1997 = vadd.f32 %v1883, %v1970
  %v1998 = vadd.f32 %v1884, %v1973
  %v1999 = vadd.f32 %v1885, %v1976
  %v2000 = vadd.f32 %v1886, %v1979
  %v2001 = vadd.f32 %v1887, %v1982
  %v2002 = vadd.f32 %v1888, %v1985
  %v2003 = vld [vmem:[%s1563 + $0x1] sm:$0xff]
  %v2004 = vld [vmem:[%s1563 + $0x11] sm:$0xff]
  %v2005 = vld [vmem:[%s1563 + $0x21] sm:$0xff]
  %v2006 = vld [vmem:[%s1563 + $0x31] sm:$0xff]
  %v2007 = vld [vmem:[%s1563 + $0x41] sm:$0xff]
  %v2008 = vld [vmem:[%s1563 + $0x51] sm:$0xff]
  %v2009 = vld [vmem:[%s1563 + $0x61] sm:$0xff]
  %v2010 = vld [vmem:[%s1563 + $0x71] sm:$0xff]
  %v2011 = vld [vmem:[%s1563 + $0xa1] sm:$0xff]
  %v2012 = vld [vmem:[%s1563 + $0xb1] sm:$0xff]
  %v2013 = vld [vmem:[%s1563 + $0xc1] sm:$0xff]
  %v2014 = vld [vmem:[%s1563 + $0xd1] sm:$0xff]
  %v2015 = vld [vmem:[%s1563 + $0xe1] sm:$0xff]
  %v2016 = vld [vmem:[%s1563 + $0xf1] sm:$0xff]
  %v2017 = vld [vmem:[%s1563 + $0x101] sm:$0xff]
  %v2018 = vld [vmem:[%s1563 + $0x111] sm:$0xff]
  %s2019 = scalar_lea.vmem %s7, 512
  %v2020 = vld [vmem:[%s2019] sm:$0xff]
  %v2021 = vld [vmem:[%s2019 + $0x8] sm:$0xff]
  %v2022 = vld [vmem:[%s2019 + $0x10] sm:$0xff]
  %v2023 = vld [vmem:[%s2019 + $0x18] sm:$0xff]
  %v2024 = vld [vmem:[%s2019 + $0x20] sm:$0xff]
  %v2025 = vld [vmem:[%s2019 + $0x28] sm:$0xff]
  %v2026 = vld [vmem:[%s2019 + $0x30] sm:$0xff]
  %v2027 = vld [vmem:[%s2019 + $0x38] sm:$0xff]
  %v2028 = vld [vmem:[%s2019 + $0x40] sm:$0xff]
  %v2029 = vld [vmem:[%s2019 + $0x48] sm:$0xff]
  %v2030 = vld [vmem:[%s2019 + $0x50] sm:$0xff]
  %v2031 = vld [vmem:[%s2019 + $0x58] sm:$0xff]
  %v2032 = vld [vmem:[%s2019 + $0x60] sm:$0xff]
  %v2033 = vld [vmem:[%s2019 + $0x68] sm:$0xff]
  %v2034 = vld [vmem:[%s2019 + $0x70] sm:$0xff]
  %v2035 = vld [vmem:[%s2019 + $0x78] sm:$0xff]
  %2036 = vmatpush.msra.mxu0 %v2035
  %2037 = vmatpush.msra.mxu0 %v2034
  %2038 = vmatpush.msra.mxu0 %v2033
  %2039 = vmatpush.msra.mxu0 %v2032
  %2040 = vmatpush.msra.mxu0 %v2031
  %2041 = vmatpush.msra.mxu0 %v2030
  %2042 = vmatpush.msra.mxu0 %v2029
  %2043 = vmatpush.msra.mxu0 %v2028
  %2044 = vmatpush.msra.mxu0 %v2027
  %2045 = vmatpush.msra.mxu0 %v2026
  %2046 = vmatpush.msra.mxu0 %v2025
  %2047 = vmatpush.msra.mxu0 %v2024
  %2048 = vmatpush.msra.mxu0 %v2023
  %2049 = vmatpush.msra.mxu0 %v2022
  %2050 = vmatpush.msra.mxu0 %v2021
  %2051 = vmatpush.msra.mxu0 %v2020
  %2052 = vmatmul.f32.gmra.mxu0 %v2003
  %v2053 = vpop.f32.mrf.mxu0
  %v2054 = vadd.f32 0.0, %v2053
  %2055 = vmatmul.f32.gmra.mxu0 %v2004
  %v2056 = vpop.f32.mrf.mxu0
  %v2057 = vadd.f32 0.0, %v2056
  %2058 = vmatmul.f32.gmra.mxu0 %v2005
  %v2059 = vpop.f32.mrf.mxu0
  %v2060 = vadd.f32 0.0, %v2059
  %2061 = vmatmul.f32.gmra.mxu0 %v2006
  %v2062 = vpop.f32.mrf.mxu0
  %v2063 = vadd.f32 0.0, %v2062
  %2064 = vmatmul.f32.gmra.mxu0 %v2007
  %v2065 = vpop.f32.mrf.mxu0
  %v2066 = vadd.f32 0.0, %v2065
  %2067 = vmatmul.f32.gmra.mxu0 %v2008
  %v2068 = vpop.f32.mrf.mxu0
  %v2069 = vadd.f32 0.0, %v2068
  %2070 = vmatmul.f32.gmra.mxu0 %v2009
  %v2071 = vpop.f32.mrf.mxu0
  %v2072 = vadd.f32 0.0, %v2071
  %2073 = vmatmul.f32.gmra.mxu0 %v2010
  %v2074 = vpop.f32.mrf.mxu0
  %v2075 = vadd.f32 0.0, %v2074
  %2076 = vmatmul.f32.gmra.mxu0 %v2011
  %v2077 = vpop.f32.mrf.mxu0
  %v2078 = vadd.f32 0.0, %v2077
  %2079 = vmatmul.f32.gmra.mxu0 %v2012
  %v2080 = vpop.f32.mrf.mxu0
  %v2081 = vadd.f32 0.0, %v2080
  %2082 = vmatmul.f32.gmra.mxu0 %v2013
  %v2083 = vpop.f32.mrf.mxu0
  %v2084 = vadd.f32 0.0, %v2083
  %2085 = vmatmul.f32.gmra.mxu0 %v2014
  %v2086 = vpop.f32.mrf.mxu0
  %v2087 = vadd.f32 0.0, %v2086
  %2088 = vmatmul.f32.gmra.mxu0 %v2015
  %v2089 = vpop.f32.mrf.mxu0
  %v2090 = vadd.f32 0.0, %v2089
  %2091 = vmatmul.f32.gmra.mxu0 %v2016
  %v2092 = vpop.f32.mrf.mxu0
  %v2093 = vadd.f32 0.0, %v2092
  %2094 = vmatmul.f32.gmra.mxu0 %v2017
  %v2095 = vpop.f32.mrf.mxu0
  %v2096 = vadd.f32 0.0, %v2095
  %2097 = vmatmul.f32.gmra.mxu0 %v2018
  %v2098 = vpop.f32.mrf.mxu0
  %v2099 = vadd.f32 0.0, %v2098
  %2100 = vdwg.mxu0
  %v2101 = vadd.f32 %v1987, %v2054
  %v2102 = vadd.f32 %v1988, %v2057
  %v2103 = vadd.f32 %v1989, %v2060
  %v2104 = vadd.f32 %v1990, %v2063
  %v2105 = vadd.f32 %v1991, %v2066
  %v2106 = vadd.f32 %v1992, %v2069
  %v2107 = vadd.f32 %v1993, %v2072
  %v2108 = vadd.f32 %v1994, %v2075
  %v2109 = vadd.f32 %v1995, %v2078
  %v2110 = vadd.f32 %v1996, %v2081
  %v2111 = vadd.f32 %v1997, %v2084
  %v2112 = vadd.f32 %v1998, %v2087
  %v2113 = vadd.f32 %v1999, %v2090
  %v2114 = vadd.f32 %v2000, %v2093
  %v2115 = vadd.f32 %v2001, %v2096
  %v2116 = vadd.f32 %v2002, %v2099
  %v2117 = vld [vmem:[%s1563 + $0x2] sm:$0xff]
  %v2118 = vld [vmem:[%s1563 + $0x12] sm:$0xff]
  %v2119 = vld [vmem:[%s1563 + $0x22] sm:$0xff]
  %v2120 = vld [vmem:[%s1563 + $0x32] sm:$0xff]
  %v2121 = vld [vmem:[%s1563 + $0x42] sm:$0xff]
  %v2122 = vld [vmem:[%s1563 + $0x52] sm:$0xff]
  %v2123 = vld [vmem:[%s1563 + $0x62] sm:$0xff]
  %v2124 = vld [vmem:[%s1563 + $0x72] sm:$0xff]
  %v2125 = vld [vmem:[%s1563 + $0xa2] sm:$0xff]
  %v2126 = vld [vmem:[%s1563 + $0xb2] sm:$0xff]
  %v2127 = vld [vmem:[%s1563 + $0xc2] sm:$0xff]
  %v2128 = vld [vmem:[%s1563 + $0xd2] sm:$0xff]
  %v2129 = vld [vmem:[%s1563 + $0xe2] sm:$0xff]
  %v2130 = vld [vmem:[%s1563 + $0xf2] sm:$0xff]
  %v2131 = vld [vmem:[%s1563 + $0x102] sm:$0xff]
  %v2132 = vld [vmem:[%s1563 + $0x112] sm:$0xff]
  %s2133 = scalar_lea.vmem %s7, 640
  %v2134 = vld [vmem:[%s2133] sm:$0xff]
  %v2135 = vld [vmem:[%s2133 + $0x8] sm:$0xff]
  %v2136 = vld [vmem:[%s2133 + $0x10] sm:$0xff]
  %v2137 = vld [vmem:[%s2133 + $0x18] sm:$0xff]
  %v2138 = vld [vmem:[%s2133 + $0x20] sm:$0xff]
  %v2139 = vld [vmem:[%s2133 + $0x28] sm:$0xff]
  %v2140 = vld [vmem:[%s2133 + $0x30] sm:$0xff]
  %v2141 = vld [vmem:[%s2133 + $0x38] sm:$0xff]
  %v2142 = vld [vmem:[%s2133 + $0x40] sm:$0xff]
  %v2143 = vld [vmem:[%s2133 + $0x48] sm:$0xff]
  %v2144 = vld [vmem:[%s2133 + $0x50] sm:$0xff]
  %v2145 = vld [vmem:[%s2133 + $0x58] sm:$0xff]
  %v2146 = vld [vmem:[%s2133 + $0x60] sm:$0xff]
  %v2147 = vld [vmem:[%s2133 + $0x68] sm:$0xff]
  %v2148 = vld [vmem:[%s2133 + $0x70] sm:$0xff]
  %v2149 = vld [vmem:[%s2133 + $0x78] sm:$0xff]
  %2150 = vmatpush.msra.mxu0 %v2149
  %2151 = vmatpush.msra.mxu0 %v2148
  %2152 = vmatpush.msra.mxu0 %v2147
  %2153 = vmatpush.msra.mxu0 %v2146
  %2154 = vmatpush.msra.mxu0 %v2145
  %2155 = vmatpush.msra.mxu0 %v2144
  %2156 = vmatpush.msra.mxu0 %v2143
  %2157 = vmatpush.msra.mxu0 %v2142
  %2158 = vmatpush.msra.mxu0 %v2141
  %2159 = vmatpush.msra.mxu0 %v2140
  %2160 = vmatpush.msra.mxu0 %v2139
  %2161 = vmatpush.msra.mxu0 %v2138
  %2162 = vmatpush.msra.mxu0 %v2137
  %2163 = vmatpush.msra.mxu0 %v2136
  %2164 = vmatpush.msra.mxu0 %v2135
  %2165 = vmatpush.msra.mxu0 %v2134
  %2166 = vmatmul.f32.gmra.mxu0 %v2117
  %v2167 = vpop.f32.mrf.mxu0
  %v2168 = vadd.f32 0.0, %v2167
  %2169 = vmatmul.f32.gmra.mxu0 %v2118
  %v2170 = vpop.f32.mrf.mxu0
  %v2171 = vadd.f32 0.0, %v2170
  %2172 = vmatmul.f32.gmra.mxu0 %v2119
  %v2173 = vpop.f32.mrf.mxu0
  %v2174 = vadd.f32 0.0, %v2173
  %2175 = vmatmul.f32.gmra.mxu0 %v2120
  %v2176 = vpop.f32.mrf.mxu0
  %v2177 = vadd.f32 0.0, %v2176
  %2178 = vmatmul.f32.gmra.mxu0 %v2121
  %v2179 = vpop.f32.mrf.mxu0
  %v2180 = vadd.f32 0.0, %v2179
  %2181 = vmatmul.f32.gmra.mxu0 %v2122
  %v2182 = vpop.f32.mrf.mxu0
  %v2183 = vadd.f32 0.0, %v2182
  %2184 = vmatmul.f32.gmra.mxu0 %v2123
  %v2185 = vpop.f32.mrf.mxu0
  %v2186 = vadd.f32 0.0, %v2185
  %2187 = vmatmul.f32.gmra.mxu0 %v2124
  %v2188 = vpop.f32.mrf.mxu0
  %v2189 = vadd.f32 0.0, %v2188
  %2190 = vmatmul.f32.gmra.mxu0 %v2125
  %v2191 = vpop.f32.mrf.mxu0
  %v2192 = vadd.f32 0.0, %v2191
  %2193 = vmatmul.f32.gmra.mxu0 %v2126
  %v2194 = vpop.f32.mrf.mxu0
  %v2195 = vadd.f32 0.0, %v2194
  %2196 = vmatmul.f32.gmra.mxu0 %v2127
  %v2197 = vpop.f32.mrf.mxu0
  %v2198 = vadd.f32 0.0, %v2197
  %2199 = vmatmul.f32.gmra.mxu0 %v2128
  %v2200 = vpop.f32.mrf.mxu0
  %v2201 = vadd.f32 0.0, %v2200
  %2202 = vmatmul.f32.gmra.mxu0 %v2129
  %v2203 = vpop.f32.mrf.mxu0
  %v2204 = vadd.f32 0.0, %v2203
  %2205 = vmatmul.f32.gmra.mxu0 %v2130
  %v2206 = vpop.f32.mrf.mxu0
  %v2207 = vadd.f32 0.0, %v2206
  %2208 = vmatmul.f32.gmra.mxu0 %v2131
  %v2209 = vpop.f32.mrf.mxu0
  %v2210 = vadd.f32 0.0, %v2209
  %2211 = vmatmul.f32.gmra.mxu0 %v2132
  %v2212 = vpop.f32.mrf.mxu0
  %v2213 = vadd.f32 0.0, %v2212
  %2214 = vdwg.mxu0
  %v2215 = vadd.f32 %v2101, %v2168
  %v2216 = vadd.f32 %v2102, %v2171
  %v2217 = vadd.f32 %v2103, %v2174
  %v2218 = vadd.f32 %v2104, %v2177
  %v2219 = vadd.f32 %v2105, %v2180
  %v2220 = vadd.f32 %v2106, %v2183
  %v2221 = vadd.f32 %v2107, %v2186
  %v2222 = vadd.f32 %v2108, %v2189
  %v2223 = vadd.f32 %v2109, %v2192
  %v2224 = vadd.f32 %v2110, %v2195
  %v2225 = vadd.f32 %v2111, %v2198
  %v2226 = vadd.f32 %v2112, %v2201
  %v2227 = vadd.f32 %v2113, %v2204
  %v2228 = vadd.f32 %v2114, %v2207
  %v2229 = vadd.f32 %v2115, %v2210
  %v2230 = vadd.f32 %v2116, %v2213
  %s2231 = scalar_lea.vmem [#allocation2], 32
  %v2232 = vld [vmem:[%s2231] sm:$0xff]
  %v2233 = vld [vmem:[%s2231 + $0x10] sm:$0xff]
  %v2234 = vld [vmem:[%s2231 + $0x20] sm:$0xff]
  %v2235 = vld [vmem:[%s2231 + $0x30] sm:$0xff]
  %v2236 = vld [vmem:[%s2231 + $0x40] sm:$0xff]
  %v2237 = vld [vmem:[%s2231 + $0x50] sm:$0xff]
  %v2238 = vld [vmem:[%s2231 + $0x60] sm:$0xff]
  %v2239 = vld [vmem:[%s2231 + $0x70] sm:$0xff]
  %v2240 = vld [vmem:[%s2231 + $0xa0] sm:$0xff]
  %v2241 = vld [vmem:[%s2231 + $0xb0] sm:$0xff]
  %v2242 = vld [vmem:[%s2231 + $0xc0] sm:$0xff]
  %v2243 = vld [vmem:[%s2231 + $0xd0] sm:$0xff]
  %v2244 = vld [vmem:[%s2231 + $0xe0] sm:$0xff]
  %v2245 = vld [vmem:[%s2231 + $0xf0] sm:$0xff]
  %v2246 = vld [vmem:[%s2231 + $0x100] sm:$0xff]
  %v2247 = vld [vmem:[%s2231 + $0x110] sm:$0xff]
  %s2248 = scalar_lea.vmem %s7, 768
  %v2249 = vld [vmem:[%s2248] sm:$0xff]
  %v2250 = vld [vmem:[%s2248 + $0x8] sm:$0xff]
  %v2251 = vld [vmem:[%s2248 + $0x10] sm:$0xff]
  %v2252 = vld [vmem:[%s2248 + $0x18] sm:$0xff]
  %v2253 = vld [vmem:[%s2248 + $0x20] sm:$0xff]
  %v2254 = vld [vmem:[%s2248 + $0x28] sm:$0xff]
  %v2255 = vld [vmem:[%s2248 + $0x30] sm:$0xff]
  %v2256 = vld [vmem:[%s2248 + $0x38] sm:$0xff]
  %v2257 = vld [vmem:[%s2248 + $0x40] sm:$0xff]
  %v2258 = vld [vmem:[%s2248 + $0x48] sm:$0xff]
  %v2259 = vld [vmem:[%s2248 + $0x50] sm:$0xff]
  %v2260 = vld [vmem:[%s2248 + $0x58] sm:$0xff]
  %v2261 = vld [vmem:[%s2248 + $0x60] sm:$0xff]
  %v2262 = vld [vmem:[%s2248 + $0x68] sm:$0xff]
  %v2263 = vld [vmem:[%s2248 + $0x70] sm:$0xff]
  %v2264 = vld [vmem:[%s2248 + $0x78] sm:$0xff]
  %2265 = vmatpush.msra.mxu0 %v2264
  %2266 = vmatpush.msra.mxu0 %v2263
  %2267 = vmatpush.msra.mxu0 %v2262
  %2268 = vmatpush.msra.mxu0 %v2261
  %2269 = vmatpush.msra.mxu0 %v2260
  %2270 = vmatpush.msra.mxu0 %v2259
  %2271 = vmatpush.msra.mxu0 %v2258
  %2272 = vmatpush.msra.mxu0 %v2257
  %2273 = vmatpush.msra.mxu0 %v2256
  %2274 = vmatpush.msra.mxu0 %v2255
  %2275 = vmatpush.msra.mxu0 %v2254
  %2276 = vmatpush.msra.mxu0 %v2253
  %2277 = vmatpush.msra.mxu0 %v2252
  %2278 = vmatpush.msra.mxu0 %v2251
  %2279 = vmatpush.msra.mxu0 %v2250
  %2280 = vmatpush.msra.mxu0 %v2249
  %2281 = vmatmul.f32.gmra.mxu0 %v2232
  %v2282 = vpop.f32.mrf.mxu0
  %v2283 = vadd.f32 0.0, %v2282
  %2284 = vmatmul.f32.gmra.mxu0 %v2233
  %v2285 = vpop.f32.mrf.mxu0
  %v2286 = vadd.f32 0.0, %v2285
  %2287 = vmatmul.f32.gmra.mxu0 %v2234
  %v2288 = vpop.f32.mrf.mxu0
  %v2289 = vadd.f32 0.0, %v2288
  %2290 = vmatmul.f32.gmra.mxu0 %v2235
  %v2291 = vpop.f32.mrf.mxu0
  %v2292 = vadd.f32 0.0, %v2291
  %2293 = vmatmul.f32.gmra.mxu0 %v2236
  %v2294 = vpop.f32.mrf.mxu0
  %v2295 = vadd.f32 0.0, %v2294
  %2296 = vmatmul.f32.gmra.mxu0 %v2237
  %v2297 = vpop.f32.mrf.mxu0
  %v2298 = vadd.f32 0.0, %v2297
  %2299 = vmatmul.f32.gmra.mxu0 %v2238
  %v2300 = vpop.f32.mrf.mxu0
  %v2301 = vadd.f32 0.0, %v2300
  %2302 = vmatmul.f32.gmra.mxu0 %v2239
  %v2303 = vpop.f32.mrf.mxu0
  %v2304 = vadd.f32 0.0, %v2303
  %2305 = vmatmul.f32.gmra.mxu0 %v2240
  %v2306 = vpop.f32.mrf.mxu0
  %v2307 = vadd.f32 0.0, %v2306
  %2308 = vmatmul.f32.gmra.mxu0 %v2241
  %v2309 = vpop.f32.mrf.mxu0
  %v2310 = vadd.f32 0.0, %v2309
  %2311 = vmatmul.f32.gmra.mxu0 %v2242
  %v2312 = vpop.f32.mrf.mxu0
  %v2313 = vadd.f32 0.0, %v2312
  %2314 = vmatmul.f32.gmra.mxu0 %v2243
  %v2315 = vpop.f32.mrf.mxu0
  %v2316 = vadd.f32 0.0, %v2315
  %2317 = vmatmul.f32.gmra.mxu0 %v2244
  %v2318 = vpop.f32.mrf.mxu0
  %v2319 = vadd.f32 0.0, %v2318
  %2320 = vmatmul.f32.gmra.mxu0 %v2245
  %v2321 = vpop.f32.mrf.mxu0
  %v2322 = vadd.f32 0.0, %v2321
  %2323 = vmatmul.f32.gmra.mxu0 %v2246
  %v2324 = vpop.f32.mrf.mxu0
  %v2325 = vadd.f32 0.0, %v2324
  %2326 = vmatmul.f32.gmra.mxu0 %v2247
  %v2327 = vpop.f32.mrf.mxu0
  %v2328 = vadd.f32 0.0, %v2327
  %2329 = vdwg.mxu0
  %v2330 = vadd.f32 %v2215, %v2283
  %v2331 = vadd.f32 %v2216, %v2286
  %v2332 = vadd.f32 %v2217, %v2289
  %v2333 = vadd.f32 %v2218, %v2292
  %v2334 = vadd.f32 %v2219, %v2295
  %v2335 = vadd.f32 %v2220, %v2298
  %v2336 = vadd.f32 %v2221, %v2301
  %v2337 = vadd.f32 %v2222, %v2304
  %v2338 = vadd.f32 %v2223, %v2307
  %v2339 = vadd.f32 %v2224, %v2310
  %v2340 = vadd.f32 %v2225, %v2313
  %v2341 = vadd.f32 %v2226, %v2316
  %v2342 = vadd.f32 %v2227, %v2319
  %v2343 = vadd.f32 %v2228, %v2322
  %v2344 = vadd.f32 %v2229, %v2325
  %v2345 = vadd.f32 %v2230, %v2328
  %v2346 = vld [vmem:[%s2231 + $0x1] sm:$0xff]
  %v2347 = vld [vmem:[%s2231 + $0x11] sm:$0xff]
  %v2348 = vld [vmem:[%s2231 + $0x21] sm:$0xff]
  %v2349 = vld [vmem:[%s2231 + $0x31] sm:$0xff]
  %v2350 = vld [vmem:[%s2231 + $0x41] sm:$0xff]
  %v2351 = vld [vmem:[%s2231 + $0x51] sm:$0xff]
  %v2352 = vld [vmem:[%s2231 + $0x61] sm:$0xff]
  %v2353 = vld [vmem:[%s2231 + $0x71] sm:$0xff]
  %v2354 = vld [vmem:[%s2231 + $0xa1] sm:$0xff]
  %v2355 = vld [vmem:[%s2231 + $0xb1] sm:$0xff]
  %v2356 = vld [vmem:[%s2231 + $0xc1] sm:$0xff]
  %v2357 = vld [vmem:[%s2231 + $0xd1] sm:$0xff]
  %v2358 = vld [vmem:[%s2231 + $0xe1] sm:$0xff]
  %v2359 = vld [vmem:[%s2231 + $0xf1] sm:$0xff]
  %v2360 = vld [vmem:[%s2231 + $0x101] sm:$0xff]
  %v2361 = vld [vmem:[%s2231 + $0x111] sm:$0xff]
  %s2362 = scalar_lea.vmem %s7, 896
  %v2363 = vld [vmem:[%s2362] sm:$0xff]
  %v2364 = vld [vmem:[%s2362 + $0x8] sm:$0xff]
  %v2365 = vld [vmem:[%s2362 + $0x10] sm:$0xff]
  %v2366 = vld [vmem:[%s2362 + $0x18] sm:$0xff]
  %v2367 = vld [vmem:[%s2362 + $0x20] sm:$0xff]
  %v2368 = vld [vmem:[%s2362 + $0x28] sm:$0xff]
  %v2369 = vld [vmem:[%s2362 + $0x30] sm:$0xff]
  %v2370 = vld [vmem:[%s2362 + $0x38] sm:$0xff]
  %v2371 = vld [vmem:[%s2362 + $0x40] sm:$0xff]
  %v2372 = vld [vmem:[%s2362 + $0x48] sm:$0xff]
  %v2373 = vld [vmem:[%s2362 + $0x50] sm:$0xff]
  %v2374 = vld [vmem:[%s2362 + $0x58] sm:$0xff]
  %v2375 = vld [vmem:[%s2362 + $0x60] sm:$0xff]
  %v2376 = vld [vmem:[%s2362 + $0x68] sm:$0xff]
  %v2377 = vld [vmem:[%s2362 + $0x70] sm:$0xff]
  %v2378 = vld [vmem:[%s2362 + $0x78] sm:$0xff]
  %2379 = vmatpush.msra.mxu0 %v2378
  %2380 = vmatpush.msra.mxu0 %v2377
  %2381 = vmatpush.msra.mxu0 %v2376
  %2382 = vmatpush.msra.mxu0 %v2375
  %2383 = vmatpush.msra.mxu0 %v2374
  %2384 = vmatpush.msra.mxu0 %v2373
  %2385 = vmatpush.msra.mxu0 %v2372
  %2386 = vmatpush.msra.mxu0 %v2371
  %2387 = vmatpush.msra.mxu0 %v2370
  %2388 = vmatpush.msra.mxu0 %v2369
  %2389 = vmatpush.msra.mxu0 %v2368
  %2390 = vmatpush.msra.mxu0 %v2367
  %2391 = vmatpush.msra.mxu0 %v2366
  %2392 = vmatpush.msra.mxu0 %v2365
  %2393 = vmatpush.msra.mxu0 %v2364
  %2394 = vmatpush.msra.mxu0 %v2363
  %2395 = vmatmul.f32.gmra.mxu0 %v2346
  %v2396 = vpop.f32.mrf.mxu0
  %v2397 = vadd.f32 0.0, %v2396
  %2398 = vmatmul.f32.gmra.mxu0 %v2347
  %v2399 = vpop.f32.mrf.mxu0
  %v2400 = vadd.f32 0.0, %v2399
  %2401 = vmatmul.f32.gmra.mxu0 %v2348
  %v2402 = vpop.f32.mrf.mxu0
  %v2403 = vadd.f32 0.0, %v2402
  %2404 = vmatmul.f32.gmra.mxu0 %v2349
  %v2405 = vpop.f32.mrf.mxu0
  %v2406 = vadd.f32 0.0, %v2405
  %2407 = vmatmul.f32.gmra.mxu0 %v2350
  %v2408 = vpop.f32.mrf.mxu0
  %v2409 = vadd.f32 0.0, %v2408
  %2410 = vmatmul.f32.gmra.mxu0 %v2351
  %v2411 = vpop.f32.mrf.mxu0
  %v2412 = vadd.f32 0.0, %v2411
  %2413 = vmatmul.f32.gmra.mxu0 %v2352
  %v2414 = vpop.f32.mrf.mxu0
  %v2415 = vadd.f32 0.0, %v2414
  %2416 = vmatmul.f32.gmra.mxu0 %v2353
  %v2417 = vpop.f32.mrf.mxu0
  %v2418 = vadd.f32 0.0, %v2417
  %2419 = vmatmul.f32.gmra.mxu0 %v2354
  %v2420 = vpop.f32.mrf.mxu0
  %v2421 = vadd.f32 0.0, %v2420
  %2422 = vmatmul.f32.gmra.mxu0 %v2355
  %v2423 = vpop.f32.mrf.mxu0
  %v2424 = vadd.f32 0.0, %v2423
  %2425 = vmatmul.f32.gmra.mxu0 %v2356
  %v2426 = vpop.f32.mrf.mxu0
  %v2427 = vadd.f32 0.0, %v2426
  %2428 = vmatmul.f32.gmra.mxu0 %v2357
  %v2429 = vpop.f32.mrf.mxu0
  %v2430 = vadd.f32 0.0, %v2429
  %2431 = vmatmul.f32.gmra.mxu0 %v2358
  %v2432 = vpop.f32.mrf.mxu0
  %v2433 = vadd.f32 0.0, %v2432
  %2434 = vmatmul.f32.gmra.mxu0 %v2359
  %v2435 = vpop.f32.mrf.mxu0
  %v2436 = vadd.f32 0.0, %v2435
  %2437 = vmatmul.f32.gmra.mxu0 %v2360
  %v2438 = vpop.f32.mrf.mxu0
  %v2439 = vadd.f32 0.0, %v2438
  %2440 = vmatmul.f32.gmra.mxu0 %v2361
  %v2441 = vpop.f32.mrf.mxu0
  %v2442 = vadd.f32 0.0, %v2441
  %2443 = vdwg.mxu0
  %v2444 = vadd.f32 %v2330, %v2397
  %v2445 = vadd.f32 %v2331, %v2400
  %v2446 = vadd.f32 %v2332, %v2403
  %v2447 = vadd.f32 %v2333, %v2406
  %v2448 = vadd.f32 %v2334, %v2409
  %v2449 = vadd.f32 %v2335, %v2412
  %v2450 = vadd.f32 %v2336, %v2415
  %v2451 = vadd.f32 %v2337, %v2418
  %v2452 = vadd.f32 %v2338, %v2421
  %v2453 = vadd.f32 %v2339, %v2424
  %v2454 = vadd.f32 %v2340, %v2427
  %v2455 = vadd.f32 %v2341, %v2430
  %v2456 = vadd.f32 %v2342, %v2433
  %v2457 = vadd.f32 %v2343, %v2436
  %v2458 = vadd.f32 %v2344, %v2439
  %v2459 = vadd.f32 %v2345, %v2442
  %v2460 = vld [vmem:[%s2231 + $0x2] sm:$0xff]
  %v2461 = vld [vmem:[%s2231 + $0x12] sm:$0xff]
  %v2462 = vld [vmem:[%s2231 + $0x22] sm:$0xff]
  %v2463 = vld [vmem:[%s2231 + $0x32] sm:$0xff]
  %v2464 = vld [vmem:[%s2231 + $0x42] sm:$0xff]
  %v2465 = vld [vmem:[%s2231 + $0x52] sm:$0xff]
  %v2466 = vld [vmem:[%s2231 + $0x62] sm:$0xff]
  %v2467 = vld [vmem:[%s2231 + $0x72] sm:$0xff]
  %v2468 = vld [vmem:[%s2231 + $0xa2] sm:$0xff]
  %v2469 = vld [vmem:[%s2231 + $0xb2] sm:$0xff]
  %v2470 = vld [vmem:[%s2231 + $0xc2] sm:$0xff]
  %v2471 = vld [vmem:[%s2231 + $0xd2] sm:$0xff]
  %v2472 = vld [vmem:[%s2231 + $0xe2] sm:$0xff]
  %v2473 = vld [vmem:[%s2231 + $0xf2] sm:$0xff]
  %v2474 = vld [vmem:[%s2231 + $0x102] sm:$0xff]
  %v2475 = vld [vmem:[%s2231 + $0x112] sm:$0xff]
  %s2476 = scalar_lea.vmem %s7, 1024
  %v2477 = vld [vmem:[%s2476] sm:$0xff]
  %v2478 = vld [vmem:[%s2476 + $0x8] sm:$0xff]
  %v2479 = vld [vmem:[%s2476 + $0x10] sm:$0xff]
  %v2480 = vld [vmem:[%s2476 + $0x18] sm:$0xff]
  %v2481 = vld [vmem:[%s2476 + $0x20] sm:$0xff]
  %v2482 = vld [vmem:[%s2476 + $0x28] sm:$0xff]
  %v2483 = vld [vmem:[%s2476 + $0x30] sm:$0xff]
  %v2484 = vld [vmem:[%s2476 + $0x38] sm:$0xff]
  %v2485 = vld [vmem:[%s2476 + $0x40] sm:$0xff]
  %v2486 = vld [vmem:[%s2476 + $0x48] sm:$0xff]
  %v2487 = vld [vmem:[%s2476 + $0x50] sm:$0xff]
  %v2488 = vld [vmem:[%s2476 + $0x58] sm:$0xff]
  %v2489 = vld [vmem:[%s2476 + $0x60] sm:$0xff]
  %v2490 = vld [vmem:[%s2476 + $0x68] sm:$0xff]
  %v2491 = vld [vmem:[%s2476 + $0x70] sm:$0xff]
  %v2492 = vld [vmem:[%s2476 + $0x78] sm:$0xff]
  %2493 = vmatpush.msra.mxu0 %v2492
  %2494 = vmatpush.msra.mxu0 %v2491
  %2495 = vmatpush.msra.mxu0 %v2490
  %2496 = vmatpush.msra.mxu0 %v2489
  %2497 = vmatpush.msra.mxu0 %v2488
  %2498 = vmatpush.msra.mxu0 %v2487
  %2499 = vmatpush.msra.mxu0 %v2486
  %2500 = vmatpush.msra.mxu0 %v2485
  %2501 = vmatpush.msra.mxu0 %v2484
  %2502 = vmatpush.msra.mxu0 %v2483
  %2503 = vmatpush.msra.mxu0 %v2482
  %2504 = vmatpush.msra.mxu0 %v2481
  %2505 = vmatpush.msra.mxu0 %v2480
  %2506 = vmatpush.msra.mxu0 %v2479
  %2507 = vmatpush.msra.mxu0 %v2478
  %2508 = vmatpush.msra.mxu0 %v2477
  %2509 = vmatmul.f32.gmra.mxu0 %v2460
  %v2510 = vpop.f32.mrf.mxu0
  %v2511 = vadd.f32 0.0, %v2510
  %2512 = vmatmul.f32.gmra.mxu0 %v2461
  %v2513 = vpop.f32.mrf.mxu0
  %v2514 = vadd.f32 0.0, %v2513
  %2515 = vmatmul.f32.gmra.mxu0 %v2462
  %v2516 = vpop.f32.mrf.mxu0
  %v2517 = vadd.f32 0.0, %v2516
  %2518 = vmatmul.f32.gmra.mxu0 %v2463
  %v2519 = vpop.f32.mrf.mxu0
  %v2520 = vadd.f32 0.0, %v2519
  %2521 = vmatmul.f32.gmra.mxu0 %v2464
  %v2522 = vpop.f32.mrf.mxu0
  %v2523 = vadd.f32 0.0, %v2522
  %2524 = vmatmul.f32.gmra.mxu0 %v2465
  %v2525 = vpop.f32.mrf.mxu0
  %v2526 = vadd.f32 0.0, %v2525
  %2527 = vmatmul.f32.gmra.mxu0 %v2466
  %v2528 = vpop.f32.mrf.mxu0
  %v2529 = vadd.f32 0.0, %v2528
  %2530 = vmatmul.f32.gmra.mxu0 %v2467
  %v2531 = vpop.f32.mrf.mxu0
  %v2532 = vadd.f32 0.0, %v2531
  %2533 = vmatmul.f32.gmra.mxu0 %v2468
  %v2534 = vpop.f32.mrf.mxu0
  %v2535 = vadd.f32 0.0, %v2534
  %2536 = vmatmul.f32.gmra.mxu0 %v2469
  %v2537 = vpop.f32.mrf.mxu0
  %v2538 = vadd.f32 0.0, %v2537
  %2539 = vmatmul.f32.gmra.mxu0 %v2470
  %v2540 = vpop.f32.mrf.mxu0
  %v2541 = vadd.f32 0.0, %v2540
  %2542 = vmatmul.f32.gmra.mxu0 %v2471
  %v2543 = vpop.f32.mrf.mxu0
  %v2544 = vadd.f32 0.0, %v2543
  %2545 = vmatmul.f32.gmra.mxu0 %v2472
  %v2546 = vpop.f32.mrf.mxu0
  %v2547 = vadd.f32 0.0, %v2546
  %2548 = vmatmul.f32.gmra.mxu0 %v2473
  %v2549 = vpop.f32.mrf.mxu0
  %v2550 = vadd.f32 0.0, %v2549
  %2551 = vmatmul.f32.gmra.mxu0 %v2474
  %v2552 = vpop.f32.mrf.mxu0
  %v2553 = vadd.f32 0.0, %v2552
  %2554 = vmatmul.f32.gmra.mxu0 %v2475
  %v2555 = vpop.f32.mrf.mxu0
  %v2556 = vadd.f32 0.0, %v2555
  %2557 = vdwg.mxu0
  %v2558 = vadd.f32 %v2444, %v2511
  %v2559 = vadd.f32 %v2445, %v2514
  %v2560 = vadd.f32 %v2446, %v2517
  %v2561 = vadd.f32 %v2447, %v2520
  %v2562 = vadd.f32 %v2448, %v2523
  %v2563 = vadd.f32 %v2449, %v2526
  %v2564 = vadd.f32 %v2450, %v2529
  %v2565 = vadd.f32 %v2451, %v2532
  %v2566 = vadd.f32 %v2452, %v2535
  %v2567 = vadd.f32 %v2453, %v2538
  %v2568 = vadd.f32 %v2454, %v2541
  %v2569 = vadd.f32 %v2455, %v2544
  %v2570 = vadd.f32 %v2456, %v2547
  %v2571 = vadd.f32 %v2457, %v2550
  %v2572 = vadd.f32 %v2458, %v2553
  %v2573 = vadd.f32 %v2459, %v2556
  %v2574 = vadd.f32 %v2558, %v2559
  %v2575 = vadd.f32 %v2574, %v2560
  %v2576 = vadd.f32 %v2575, %v2561
  %v2577 = vadd.f32 %v2576, %v2562
  %v2578 = vadd.f32 %v2577, %v2563
  %v2579 = vadd.f32 %v2578, %v2564
  %v2580 = vadd.f32 %v2579, %v2565
  %v2581 = vadd.f32 %v2580, %v2566
  %v2582 = vadd.f32 %v2581, %v2567
  %v2583 = vadd.f32 %v2582, %v2568
  %v2584 = vadd.f32 %v2583, %v2569
  %v2585 = vadd.f32 %v2584, %v2570
  %v2586 = vadd.f32 %v2585, %v2571
  %v2587 = vadd.f32 %v2586, %v2572
  %v2588 = vadd.f32 %v2587, %v2573
  %v2589 = vrot.slane %v2588, 4
  %v2590 = vadd.f32 %v2588, %v2589
  %v2591 = vrot.slane %v2590, 2
  %v2592 = vadd.f32 %v2590, %v2591
  %v2593 = vrot.slane %v2592, 1
  %v2594 = vadd.f32 %v2592, %v2593
  %v2595 = vmul.f32 %v2594, 0.0078125
  %v2596 = vmul.f32 %v2558, %v2558
  %v2597 = vmul.f32 %v2559, %v2559
  %v2598 = vmul.f32 %v2560, %v2560
  %v2599 = vmul.f32 %v2561, %v2561
  %v2600 = vmul.f32 %v2562, %v2562
  %v2601 = vmul.f32 %v2563, %v2563
  %v2602 = vmul.f32 %v2564, %v2564
  %v2603 = vmul.f32 %v2565, %v2565
  %v2604 = vmul.f32 %v2566, %v2566
  %v2605 = vmul.f32 %v2567, %v2567
  %v2606 = vmul.f32 %v2568, %v2568
  %v2607 = vmul.f32 %v2569, %v2569
  %v2608 = vmul.f32 %v2570, %v2570
  %v2609 = vmul.f32 %v2571, %v2571
  %v2610 = vmul.f32 %v2572, %v2572
  %v2611 = vmul.f32 %v2573, %v2573
  %v2612 = vadd.f32 %v2596, %v2597
  %v2613 = vadd.f32 %v2612, %v2598
  %v2614 = vadd.f32 %v2613, %v2599
  %v2615 = vadd.f32 %v2614, %v2600
  %v2616 = vadd.f32 %v2615, %v2601
  %v2617 = vadd.f32 %v2616, %v2602
  %v2618 = vadd.f32 %v2617, %v2603
  %v2619 = vadd.f32 %v2618, %v2604
  %v2620 = vadd.f32 %v2619, %v2605
  %v2621 = vadd.f32 %v2620, %v2606
  %v2622 = vadd.f32 %v2621, %v2607
  %v2623 = vadd.f32 %v2622, %v2608
  %v2624 = vadd.f32 %v2623, %v2609
  %v2625 = vadd.f32 %v2624, %v2610
  %v2626 = vadd.f32 %v2625, %v2611
  %v2627 = vrot.slane %v2626, 4
  %v2628 = vadd.f32 %v2626, %v2627
  %v2629 = vrot.slane %v2628, 2
  %v2630 = vadd.f32 %v2628, %v2629
  %v2631 = vrot.slane %v2630, 1
  %v2632 = vadd.f32 %v2630, %v2631
  %v2633 = vmul.f32 %v2632, 0.0078125
  %v2634 = vmul.f32 %v2595, %v2595
  %v2635 = vsub.f32 %v2633, %v2634
  %v2636 = vsub.f32 %v2558, %v2595
  %v2637 = vsub.f32 %v2559, %v2595
  %v2638 = vsub.f32 %v2560, %v2595
  %v2639 = vsub.f32 %v2561, %v2595
  %v2640 = vsub.f32 %v2562, %v2595
  %v2641 = vsub.f32 %v2563, %v2595
  %v2642 = vsub.f32 %v2564, %v2595
  %v2643 = vsub.f32 %v2565, %v2595
  %v2644 = vsub.f32 %v2566, %v2595
  %v2645 = vsub.f32 %v2567, %v2595
  %v2646 = vsub.f32 %v2568, %v2595
  %v2647 = vsub.f32 %v2569, %v2595
  %v2648 = vsub.f32 %v2570, %v2595
  %v2649 = vsub.f32 %v2571, %v2595
  %v2650 = vsub.f32 %v2572, %v2595
  %v2651 = vsub.f32 %v2573, %v2595
  %v2652 = vadd.f32 %v2635, 1e-05
  %v2653 = vrsqrt.pop %v2652
  %v2654 = vmul.f32 %v2653, %v2652
  %v2655 = vmul.f32 %v2654, %v2653
  %v2656 = vmul.f32 0.5, %v2655
  %v2657 = vsub.f32 1.5, %v2656
  %v2658 = vmul.f32 %v2653, %v2657
  %vm2659 = vweird.f32 %v2652
  %vm2660 = vweird.f32 %v2653
  %vm2661 = vmor %vm2659, %vm2660
  %v2662 = vsel %vm2661, %v2653, %v2658
  %v2663 = vmul.f32 %v2636, %v2662
  %v2664 = vmul.f32 %v2637, %v2662
  %v2665 = vmul.f32 %v2638, %v2662
  %v2666 = vmul.f32 %v2639, %v2662
  %v2667 = vmul.f32 %v2640, %v2662
  %v2668 = vmul.f32 %v2641, %v2662
  %v2669 = vmul.f32 %v2642, %v2662
  %v2670 = vmul.f32 %v2643, %v2662
  %v2671 = vmul.f32 %v2644, %v2662
  %v2672 = vmul.f32 %v2645, %v2662
  %v2673 = vmul.f32 %v2646, %v2662
  %v2674 = vmul.f32 %v2647, %v2662
  %v2675 = vmul.f32 %v2648, %v2662
  %v2676 = vmul.f32 %v2649, %v2662
  %v2677 = vmul.f32 %v2650, %v2662
  %v2678 = vmul.f32 %v2651, %v2662
  %v2679 = vld [vmem:[%s8] sm:$0x1]
  %v2681 = vperm.slane %v2679, 0
  %v2683 = vmul.f32 %v2663, %v2681
  %v2684 = vmul.f32 %v2664, %v2681
  %v2685 = vmul.f32 %v2665, %v2681
  %v2686 = vmul.f32 %v2666, %v2681
  %v2687 = vmul.f32 %v2667, %v2681
  %v2688 = vmul.f32 %v2668, %v2681
  %v2689 = vmul.f32 %v2669, %v2681
  %v2690 = vmul.f32 %v2670, %v2681
  %v2691 = vmul.f32 %v2671, %v2681
  %v2692 = vmul.f32 %v2672, %v2681
  %v2693 = vmul.f32 %v2673, %v2681
  %v2694 = vmul.f32 %v2674, %v2681
  %v2695 = vmul.f32 %v2675, %v2681
  %v2696 = vmul.f32 %v2676, %v2681
  %v2697 = vmul.f32 %v2677, %v2681
  %v2698 = vmul.f32 %v2678, %v2681
  %v2699 = vld [vmem:[%s9] sm:$0x1]
  %v2701 = vperm.slane %v2699, 0
  %v2703 = vadd.f32 %v2683, %v2701
  %v2704 = vadd.f32 %v2684, %v2701
  %v2705 = vadd.f32 %v2685, %v2701
  %v2706 = vadd.f32 %v2686, %v2701
  %v2707 = vadd.f32 %v2687, %v2701
  %v2708 = vadd.f32 %v2688, %v2701
  %v2709 = vadd.f32 %v2689, %v2701
  %v2710 = vadd.f32 %v2690, %v2701
  %v2711 = vadd.f32 %v2691, %v2701
  %v2712 = vadd.f32 %v2692, %v2701
  %v2713 = vadd.f32 %v2693, %v2701
  %v2714 = vadd.f32 %v2694, %v2701
  %v2715 = vadd.f32 %v2695, %v2701
  %v2716 = vadd.f32 %v2696, %v2701
  %v2717 = vadd.f32 %v2697, %v2701
  %v2718 = vadd.f32 %v2698, %v2701
  %v2719 = vld [vmem:[%s10] sm:$0xf]
  %v2720 = vld [vmem:[%s11] sm:$0x1]
  %v2722 = vperm.slane %v2720, 0
  %v2725 = vsel %vm141, %v2719, 0
  %2727 = vmatpush.msra.mxu0 0.0
  %2728 = vmatpush.msra.mxu0 0.0
  %2729 = vmatpush.msra.mxu0 0.0
  %2730 = vmatpush.msra.mxu0 0.0
  %2731 = vmatpush.msra.mxu0 0.0
  %2732 = vmatpush.msra.mxu0 0.0
  %2733 = vmatpush.msra.mxu0 0.0
  %2734 = vmatpush.msra.mxu0 0.0
  %2735 = vmatpush.msra.mxu0 0.0
  %2736 = vmatpush.msra.mxu0 0.0
  %2737 = vmatpush.msra.mxu0 0.0
  %2738 = vmatpush.msra.mxu0 0.0
  %2739 = vmatpush.msra.mxu0 0.0
  %2740 = vmatpush.msra.mxu0 0.0
  %2741 = vmatpush.msra.mxu0 0.0
  %2742 = vmatpush.msra.mxu0 %v2725
  %2743 = vmatmul.f32.gmra.mxu0 %v629
  %v2744 = vpop.f32.mrf.mxu0
  %v2745 = vadd.f32 %v2722, %v2744
  %2746 = vmatmul.f32.gmra.mxu0 %v632
  %v2747 = vpop.f32.mrf.mxu0
  %v2748 = vadd.f32 %v2722, %v2747
  %2749 = vmatmul.f32.gmra.mxu0 %v635
  %v2750 = vpop.f32.mrf.mxu0
  %v2751 = vadd.f32 %v2722, %v2750
  %2752 = vmatmul.f32.gmra.mxu0 %v638
  %v2753 = vpop.f32.mrf.mxu0
  %v2754 = vadd.f32 %v2722, %v2753
  %2755 = vmatmul.f32.gmra.mxu0 %v641
  %v2756 = vpop.f32.mrf.mxu0
  %v2757 = vadd.f32 %v2722, %v2756
  %2758 = vmatmul.f32.gmra.mxu0 %v644
  %v2759 = vpop.f32.mrf.mxu0
  %v2760 = vadd.f32 %v2722, %v2759
  %2761 = vmatmul.f32.gmra.mxu0 %v647
  %v2762 = vpop.f32.mrf.mxu0
  %v2763 = vadd.f32 %v2722, %v2762
  %2764 = vmatmul.f32.gmra.mxu0 %v650
  %v2765 = vpop.f32.mrf.mxu0
  %v2766 = vadd.f32 %v2722, %v2765
  %2767 = vmatmul.f32.gmra.mxu0 %v653
  %v2768 = vpop.f32.mrf.mxu0
  %v2769 = vadd.f32 %v2722, %v2768
  %2770 = vmatmul.f32.gmra.mxu0 %v656
  %v2771 = vpop.f32.mrf.mxu0
  %v2772 = vadd.f32 %v2722, %v2771
  %2773 = vmatmul.f32.gmra.mxu0 %v659
  %v2774 = vpop.f32.mrf.mxu0
  %v2775 = vadd.f32 %v2722, %v2774
  %2776 = vmatmul.f32.gmra.mxu0 %v662
  %v2777 = vpop.f32.mrf.mxu0
  %v2778 = vadd.f32 %v2722, %v2777
  %2779 = vmatmul.f32.gmra.mxu0 %v665
  %v2780 = vpop.f32.mrf.mxu0
  %v2781 = vadd.f32 %v2722, %v2780
  %2782 = vmatmul.f32.gmra.mxu0 %v668
  %v2783 = vpop.f32.mrf.mxu0
  %v2784 = vadd.f32 %v2722, %v2783
  %2785 = vmatmul.f32.gmra.mxu0 %v671
  %v2786 = vpop.f32.mrf.mxu0
  %v2787 = vadd.f32 %v2722, %v2786
  %2788 = vmatmul.f32.gmra.mxu0 %v674
  %v2789 = vpop.f32.mrf.mxu0
  %v2790 = vadd.f32 %v2722, %v2789
  %2791 = vdwg.mxu0
  %v2792 = vadd.f32 %v2703, %v2745
  %v2793 = vadd.f32 %v2704, %v2748
  %v2794 = vadd.f32 %v2705, %v2751
  %v2795 = vadd.f32 %v2706, %v2754
  %v2796 = vadd.f32 %v2707, %v2757
  %v2797 = vadd.f32 %v2708, %v2760
  %v2798 = vadd.f32 %v2709, %v2763
  %v2799 = vadd.f32 %v2710, %v2766
  %v2800 = vadd.f32 %v2711, %v2769
  %v2801 = vadd.f32 %v2712, %v2772
  %v2802 = vadd.f32 %v2713, %v2775
  %v2803 = vadd.f32 %v2714, %v2778
  %v2804 = vadd.f32 %v2715, %v2781
  %v2805 = vadd.f32 %v2716, %v2784
  %v2806 = vadd.f32 %v2717, %v2787
  %v2807 = vadd.f32 %v2718, %v2790
  %v2808 = vmax.f32 %v2792, 0.0
  %v2809 = vmax.f32 %v2793, 0.0
  %v2810 = vmax.f32 %v2794, 0.0
  %v2811 = vmax.f32 %v2795, 0.0
  %v2812 = vmax.f32 %v2796, 0.0
  %v2813 = vmax.f32 %v2797, 0.0
  %v2814 = vmax.f32 %v2798, 0.0
  %v2815 = vmax.f32 %v2799, 0.0
  %v2816 = vmax.f32 %v2800, 0.0
  %v2817 = vmax.f32 %v2801, 0.0
  %v2818 = vmax.f32 %v2802, 0.0
  %v2819 = vmax.f32 %v2803, 0.0
  %v2820 = vmax.f32 %v2804, 0.0
  %v2821 = vmax.f32 %v2805, 0.0
  %v2822 = vmax.f32 %v2806, 0.0
  %v2823 = vmax.f32 %v2807, 0.0
  %2824 = vst [vmem:[%s12] sm:$0xff] %v2808
  %2825 = vst [vmem:[%s12 + $0x8] sm:$0xff] %v2809
  %2826 = vst [vmem:[%s12 + $0x10] sm:$0xff] %v2810
  %2827 = vst [vmem:[%s12 + $0x18] sm:$0xff] %v2811
  %2828 = vst [vmem:[%s12 + $0x20] sm:$0xff] %v2812
  %2829 = vst [vmem:[%s12 + $0x28] sm:$0xff] %v2813
  %2830 = vst [vmem:[%s12 + $0x30] sm:$0xff] %v2814
  %2831 = vst [vmem:[%s12 + $0x38] sm:$0xff] %v2815
  %2832 = vst [vmem:[%s12 + $0x40] sm:$0xff] %v2816
  %2833 = vst [vmem:[%s12 + $0x48] sm:$0xff] %v2817
  %2834 = vst [vmem:[%s12 + $0x50] sm:$0xff] %v2818
  %2835 = vst [vmem:[%s12 + $0x58] sm:$0xff] %v2819
  %2836 = vst [vmem:[%s12 + $0x60] sm:$0xff] %v2820
  %2837 = vst [vmem:[%s12 + $0x68] sm:$0xff] %v2821
  %2838 = vst [vmem:[%s12 + $0x70] sm:$0xff] %v2822
  %2839 = vst [vmem:[%s12 + $0x78] sm:$0xff] %v2823
  // Predicated region
  $region50: #{base_block_forward.1} parent=0 // pred_check
    _
  $region51: #{base_block_forward.1} parent=0 // pred_check_branch
    %2841 = sbr.rel (0) target = $region53
  $region52: #{base_block_forward.1} parent=0 // pred_region
    _
  $region53: #{base_block_forward.1} parent=0 // pred_fallthru
    _
  // Predicated region
  $region54: #{base_block_forward.1} parent=0 // pred_check
    _
  $region55: #{base_block_forward.1} parent=0 // pred_check_branch
    %2843 = sbr.rel (0) target = $region57
  $region56: #{base_block_forward.1} parent=0 // pred_region
    _
  $region57: #{base_block_forward.1} parent=0 // pred_fallthru
    _

</llo_original>
